<compile_context>
chip_gen: v5e
topology: v5e:2x2
jax: 0.10.0
libtpu: 0.0.40
codegen_flags: <defaults>
</compile_context>

<pallas_src>
import numpy as np
import jax
import jax.numpy as jnp
from jax import lax
from jax.experimental import pallas as pl
from jax.experimental.pallas import tpu as pltpu

# ---------------- model config (small, synthetic) ----------------
PAD = 0
VOCAB = 32
MAX_SEQ = 16
N_POS = MAX_SEQ + 1
D_MODEL = 32            # encoder_dim
N_LAYERS = 2            # encoder_n_layer
N_HEAD = 2              # encoder_head
D_K = D_MODEL // N_HEAD
D_V = D_MODEL // N_HEAD
D_INNER = 64            # encoder_conv1d_filter_size
K1, K2 = 9, 1           # fft_conv1d_kernel
PAD1, PAD2 = 4, 0       # fft_conv1d_padding
T_SEQ = 16
B = 2
EPS = 1e-5              # nn.LayerNorm default eps

BT = B * T_SEQ          # flattened (batch*time) rows

# packed small-parameter table: one row per 1-D param, per layer
SMALL_W = max(D_MODEL, D_INNER, D_K)                 # 64
ROW_LN1G, ROW_LN1B, ROW_LN2G, ROW_LN2B, ROW_BFC, ROW_B2, ROW_B1 = range(7)
ROW_BQ = 7
ROW_BK = ROW_BQ + N_HEAD
ROW_BV = ROW_BK + N_HEAD
N_SMALL = ROW_BV + N_HEAD                            # 13


# ---------------- Pallas kernel: the full encoder stack, one invocation ----------------
def encoder_kernel(x_ref, mask_ref, npm_ref,
                   wqkv_ref, wfc_ref, w1_ref, w2_ref, small_ref,
                   o_ref):
    x = x_ref[...]                   # (BT, D) token+position embeddings, flattened
    add_mask = mask_ref[...]         # (BT, BT) additive attention mask (0 / -1e30)
    npm = npm_ref[...]               # (BT, 1)  non-pad mask per flattened row

    # within-sequence time index of every flattened row (for the conv boundary masks)
    t_col = lax.broadcasted_iota(jnp.int32, (BT, 1), 0) % T_SEQ

    scale = 1.0 / (D_K ** 0.5)

    def layer_norm(v, g, b):
        mu = jnp.mean(v, axis=-1, keepdims=True)
        var = jnp.mean(jnp.square(v - mu), axis=-1, keepdims=True)
        return (v - mu) * lax.rsqrt(var + EPS) * g + b

    for l in range(N_LAYERS):        # static unroll: all weights stay resident in VMEM
        # ---- unpack the per-layer 1-D params from the packed table ----
        ln1g = small_ref[l, ROW_LN1G, :D_MODEL]
        ln1b = small_ref[l, ROW_LN1B, :D_MODEL]
        ln2g = small_ref[l, ROW_LN2G, :D_MODEL]
        ln2b = small_ref[l, ROW_LN2B, :D_MODEL]
        bfc = small_ref[l, ROW_BFC, :D_MODEL]
        b2 = small_ref[l, ROW_B2, :D_MODEL]
        b1 = small_ref[l, ROW_B1, :D_INNER]

        # ---- ln1 ----
        xn = layer_norm(x, ln1g, ln1b)

        # ---- multi-head self-attention (per-head matmuls; residual = normed input) ----
        mha = xn + bfc
        for h in range(N_HEAD):
            bq = small_ref[l, ROW_BQ + h, :D_K]
            bk = small_ref[l, ROW_BK + h, :D_K]
            bv = small_ref[l, ROW_BV + h, :D_V]
            qh = jnp.dot(xn, wqkv_ref[l, h],
                         preferred_element_type=jnp.float32) + bq
            kh = jnp.dot(xn, wqkv_ref[l, N_HEAD + h],
                         preferred_element_type=jnp.float32) + bk
            vh = jnp.dot(xn, wqkv_ref[l, 2 * N_HEAD + h],
                         preferred_element_type=jnp.float32) + bv
            logits = lax.dot_general(qh, kh, (((1,), (1,)), ((), ())),
                                     preferred_element_type=jnp.float32)
            logits = logits * scale + add_mask
            m = jnp.max(logits, axis=-1, keepdims=True)
            e = jnp.exp(logits - m)
            attn = e * pl.reciprocal(jnp.sum(e, axis=-1, keepdims=True), approx=True)
            head = jnp.dot(attn, vh, preferred_element_type=jnp.float32)   # (BT, d_v)
            mha = mha + jnp.dot(head, wfc_ref[l, h],
                                preferred_element_type=jnp.float32)

        # ---- ln2 + non-pad mask ----
        y = layer_norm(mha, ln2g, ln2b) * npm

        # ---- position-wise FF: Conv1d(k=9,pad=4) as 9 rolled taps, ReLU, Conv1d(k=1) ----
        # centre tap needs no roll / mask
        hid = jnp.dot(y, w1_ref[l, PAD1], preferred_element_type=jnp.float32) + b1
        for j in range(K1):
            if j == PAD1:
                continue
            off = j - PAD1                               # conv offset, in [-4, 4]
            # tap_j[row r] = y[r + off] if same sequence & in range else 0
            rolled = pltpu.roll(x=y, shift=(-off) % BT, axis=0)
            if off > 0:
                validf = jnp.where(t_col < T_SEQ - off, 1.0, 0.0)   # (BT, 1)
            else:
                validf = jnp.where(t_col >= -off, 1.0, 0.0)
            hid = hid + jnp.dot(rolled * validf, w1_ref[l, j],
                                preferred_element_type=jnp.float32)
        hid = jnp.maximum(hid, 0.0)
        out = jnp.dot(hid, w2_ref[l], preferred_element_type=jnp.float32) + b2
        x = (out + y) * npm

    o_ref[...] = x


def encoder_forward(src_seq, src_pos, word_emb, pos_emb, packed):
    # get_non_pad_mask equivalent
    npm = (src_seq != PAD).astype(jnp.float32)                     # (B, T)
    # embedding lookups (padding_idx rows are zero)
    x = word_emb[src_seq] + pos_emb[src_pos]                       # (B, T, D)

    # get_attn_key_pad_mask equivalent over flattened rows: attend only within the
    # same batch element AND to non-PAD key positions (additive, 0 / -1e30).
    batch_id = jnp.repeat(jnp.arange(B), T_SEQ)                    # (BT,)
    same_b = batch_id[:, None] == batch_id[None, :]
    key_ok = (src_seq.reshape(BT) != PAD)[None, :]
    add_mask = jnp.where(same_b & key_ok, 0.0, -1e30).astype(jnp.float32)   # (BT, BT)

    vmem = pl.BlockSpec(memory_space=pltpu.MemorySpace.VMEM)
    out_flat = pl.pallas_call(
        encoder_kernel,
        out_shape=jax.ShapeDtypeStruct((BT, D_MODEL), jnp.float32),
        in_specs=[vmem] * 8,
        out_specs=vmem,
    )(x.reshape(BT, D_MODEL).astype(jnp.float32),
      add_mask, npm.reshape(BT, 1),
      packed["wqkv"], packed["wfc"], packed["w1"], packed["w2"], packed["small"])
    return out_flat.reshape(B, T_SEQ, D_MODEL), npm[:, :, None]


# ---------------- torch-layout params -> packed kernel layouts ----------------
def pack_params(layer_params):
    def per_layer(p):
        q = [p["wq"][h * D_K:(h + 1) * D_K, :].T for h in range(N_HEAD)]
        k = [p["wk"][h * D_K:(h + 1) * D_K, :].T for h in range(N_HEAD)]
        v = [p["wv"][h * D_V:(h + 1) * D_V, :].T for h in range(N_HEAD)]
        wqkv = jnp.stack(q + k + v)                                  # (3H, D, d_k)
        wfc = jnp.stack([p["wfc"][:, h * D_V:(h + 1) * D_V].T
                         for h in range(N_HEAD)])                    # (H, d_v, D)
        w1 = jnp.transpose(p["w1"], (2, 1, 0))                       # (K1, D, D_INNER)
        w2 = p["w2"][:, :, 0].T                                      # (D_INNER, D)

        def row(vec):
            return jnp.pad(vec, (0, SMALL_W - vec.shape[0]))
        small = jnp.stack(
            [row(p["ln1g"]), row(p["ln1b"]), row(p["ln2g"]), row(p["ln2b"]),
             row(p["bfc"]), row(p["b2"]), row(p["b1"])]
            + [row(p["bq"][h * D_K:(h + 1) * D_K]) for h in range(N_HEAD)]
            + [row(p["bk"][h * D_K:(h + 1) * D_K]) for h in range(N_HEAD)]
            + [row(p["bv"][h * D_V:(h + 1) * D_V]) for h in range(N_HEAD)])
        return wqkv, wfc, w1, w2, small

    parts = [per_layer(p) for p in layer_params]
    names = ["wqkv", "wfc", "w1", "w2", "small"]
    return {n: jnp.stack([pt[i] for pt in parts]) for i, n in enumerate(names)}


# ---------------- pure-JAX reference (same math, torch layouts, for a sanity check) ----------------
def fft_block_ref(x, key_pad_mask, npm, p):
    hp = lax.Precision.HIGHEST

    def ln(v, g, b):
        mu = v.mean(-1, keepdims=True)
        var = ((v - mu) ** 2).mean(-1, keepdims=True)
        return (v - mu) / jnp.sqrt(var + EPS) * g + b

    xn = ln(x, p["ln1g"], p["ln1b"])
    q = jnp.einsum("btd,ed->bte", xn, p["wq"], precision=hp) + p["bq"]
    k = jnp.einsum("btd,ed->bte", xn, p["wk"], precision=hp) + p["bk"]
    v = jnp.einsum("btd,ed->bte", xn, p["wv"], precision=hp) + p["bv"]
    heads = []
    for h in range(N_HEAD):
        qh = q[..., h * D_K:(h + 1) * D_K]
        kh = k[..., h * D_K:(h + 1) * D_K]
        vh = v[..., h * D_V:(h + 1) * D_V]
        logits = jnp.einsum("bte,bse->bts", qh, kh, precision=hp) / (D_K ** 0.5)
        logits = jnp.where(key_pad_mask, -1e30, logits)
        attn = jax.nn.softmax(logits, axis=-1)
        heads.append(jnp.einsum("bts,bse->bte", attn, vh, precision=hp))
    ctx = jnp.concatenate(heads, axis=-1)
    mha = jnp.einsum("bte,de->btd", ctx, p["wfc"], precision=hp) + p["bfc"] + xn
    y = ln(mha, p["ln2g"], p["ln2b"]) * npm
    yp = jnp.pad(y, ((0, 0), (PAD1, PAD1), (0, 0)))
    acc = p["b1"]
    for j in range(K1):
        acc = acc + jnp.einsum("btd,ed->bte", yp[:, j:j + T_SEQ, :],
                               p["w1"][:, :, j], precision=hp)
    hid = jnp.maximum(acc, 0.0)
    out = jnp.einsum("bte,de->btd", hid, p["w2"][:, :, 0], precision=hp) + p["b2"]
    return (out + y) * npm


def encoder_ref(src_seq, src_pos, word_emb, pos_emb, layer_params):
    key_pad_mask = jnp.broadcast_to((src_seq == PAD)[:, None, :], (B, T_SEQ, T_SEQ))
    npm = (src_seq != PAD).astype(jnp.float32)[:, :, None]
    x = word_emb[src_seq] + pos_emb[src_pos]
    for p in layer_params:
        x = fft_block_ref(x, key_pad_mask, npm, p)
    return x, npm


# ---------------- deterministic parameter init (torch layouts) ----------------
def make_layer_params(key):
    ks = jax.random.split(key, 8)

    def rnd(k, shape, scale=0.1):
        return jax.random.normal(k, shape, jnp.float32) * scale

    return {
        "ln1g": jnp.ones((D_MODEL,), jnp.float32),
        "ln1b": jnp.zeros((D_MODEL,), jnp.float32),
        "ln2g": jnp.ones((D_MODEL,), jnp.float32),
        "ln2b": jnp.zeros((D_MODEL,), jnp.float32),
        "wq": rnd(ks[0], (N_HEAD * D_K, D_MODEL)),   # nn.Linear(d_model, n_head*d_k).weight
        "wk": rnd(ks[1], (N_HEAD * D_K, D_MODEL)),
        "wv": rnd(ks[2], (N_HEAD * D_V, D_MODEL)),
        "bq": jnp.zeros((N_HEAD * D_K,), jnp.float32),   # biases reset to 0 in torch init
        "bk": jnp.zeros((N_HEAD * D_K,), jnp.float32),
        "bv": jnp.zeros((N_HEAD * D_V,), jnp.float32),
        "wfc": rnd(ks[3], (D_MODEL, N_HEAD * D_V)),      # fc.weight
        "bfc": jnp.zeros((D_MODEL,), jnp.float32),
        "w1": rnd(ks[4], (D_INNER, D_MODEL, K1)),        # Conv1d(d_in, d_hid, 9).weight
        "b1": rnd(ks[5], (D_INNER,)),
        "w2": rnd(ks[6], (D_MODEL, D_INNER, K2)),        # Conv1d(d_hid, d_in, 1).weight
        "b2": rnd(ks[7], (D_MODEL,)),
    }


if __name__ == "__main__":
    master = jax.random.PRNGKey(0)
    k_emb, k_pos, k_seq, k_layers = jax.random.split(master, 4)

    # embeddings with padding_idx = PAD row zeroed
    word_emb = jax.random.normal(k_emb, (VOCAB, D_MODEL), jnp.float32) * 0.1
    word_emb = word_emb.at[PAD].set(0.0)
    pos_emb = jax.random.normal(k_pos, (N_POS, D_MODEL), jnp.float32) * 0.1
    pos_emb = pos_emb.at[PAD].set(0.0)

    layer_keys = jax.random.split(k_layers, N_LAYERS)
    layer_params = [make_layer_params(k) for k in layer_keys]
    packed = pack_params(layer_params)

    # inputs: token ids with trailing padding for the second sequence
    lengths = jnp.array([T_SEQ, 11])
    tok = jax.random.randint(k_seq, (B, T_SEQ), 1, VOCAB)
    pos = jnp.broadcast_to(jnp.arange(1, T_SEQ + 1)[None, :], (B, T_SEQ))
    valid = pos <= lengths[:, None]
    src_seq = jnp.where(valid, tok, PAD).astype(jnp.int32)
    src_pos = jnp.where(valid, pos, PAD).astype(jnp.int32)

    enc_out, npm_out = encoder_forward(src_seq, src_pos, word_emb, pos_emb, packed)
    enc_out = jax.block_until_ready(enc_out)
    npm_out = jax.block_until_ready(npm_out)

    ref_out, ref_npm = encoder_ref(src_seq, src_pos, word_emb, pos_emb, layer_params)
    # tolerance covers MXU default precision (bf16 operand rounding) + approx softmax reciprocal
    np.testing.assert_allclose(np.asarray(enc_out), np.asarray(ref_out),
                               rtol=5e-3, atol=5e-3)
    np.testing.assert_allclose(np.asarray(npm_out), np.asarray(ref_npm))

    print("KERNEL_OK")
</pallas_src>

<mosaic_0001>
module attributes {stable_mosaic.version = 11 : i64} {
  func.func @encoder_kernel(%arg0: memref<32x32xf32, #tpu.memory_space<vmem>>, %arg1: memref<32x32xf32, #tpu.memory_space<vmem>>, %arg2: memref<32x1xf32, #tpu.memory_space<vmem>>, %arg3: memref<2x6x32x16xf32, #tpu.memory_space<vmem>>, %arg4: memref<2x2x16x32xf32, #tpu.memory_space<vmem>>, %arg5: memref<2x9x32x64xf32, #tpu.memory_space<vmem>>, %arg6: memref<2x64x32xf32, #tpu.memory_space<vmem>>, %arg7: memref<2x13x64xf32, #tpu.memory_space<vmem>>, %arg8: memref<32x32xf32, #tpu.memory_space<vmem>>) attributes {dimension_semantics = [], scalar_prefetch = 0 : i64, scratch_operands = 0 : i64, tpu.core_type = #tpu.core_type<tc>} {
    %c0 = arith.constant 0 : index
    %c0_0 = arith.constant 0 : index
    %0 = vector.load %arg0[%c0, %c0_0] : memref<32x32xf32, #tpu.memory_space<vmem>>, vector<32x32xf32>
    %c0_1 = arith.constant 0 : index
    %c0_2 = arith.constant 0 : index
    %1 = vector.load %arg1[%c0_1, %c0_2] : memref<32x32xf32, #tpu.memory_space<vmem>>, vector<32x32xf32>
    %c0_3 = arith.constant 0 : index
    %c0_4 = arith.constant 0 : index
    %2 = vector.load %arg2[%c0_3, %c0_4] : memref<32x1xf32, #tpu.memory_space<vmem>>, vector<32x1xf32>
    %3 = tpu.iota {dimensions = array<i32: 0>} : vector<32x1xi32>
    %c16_i32 = arith.constant 16 : i32
    %c0_i32 = arith.constant 0 : i32
    %4 = arith.cmpi eq, %c16_i32, %c0_i32 : i32
    %c1_i32 = arith.constant 1 : i32
    %5 = arith.select %4, %c1_i32, %c16_i32 : i32
    %6 = vector.broadcast %5 : i32 to vector<32x1xi32>
    %7 = arith.remsi %3, %6 : vector<32x1xi32>
    %c0_i32_5 = arith.constant 0 : i32
    %8 = vector.broadcast %c0_i32_5 : i32 to vector<32x1xi32>
    %9 = arith.cmpi ne, %7, %8 : vector<32x1xi32>
    %c0_i32_6 = arith.constant 0 : i32
    %10 = vector.broadcast %c0_i32_6 : i32 to vector<32x1xi32>
    %11 = arith.cmpi slt, %7, %10 : vector<32x1xi32>
    %c0_i32_7 = arith.constant 0 : i32
    %12 = arith.cmpi slt, %5, %c0_i32_7 : i32
    %13 = vector.broadcast %12 : i1 to vector<32x1xi1>
    %14 = vector.broadcast %13 : vector<32x1xi1> to vector<32x1xi1>
    %15 = arith.xori %11, %14 : vector<32x1xi1>
    %16 = arith.andi %15, %9 : vector<32x1xi1>
    %17 = vector.broadcast %5 : i32 to vector<32x1xi32>
    %18 = arith.addi %7, %17 : vector<32x1xi32>
    %19 = arith.select %16, %18, %7 : vector<32x1xi1>, vector<32x1xi32>
    %c0_8 = arith.constant 0 : index
    %c0_9 = arith.constant 0 : index
    %c0_10 = arith.constant 0 : index
    %20 = vector.load %arg7[%c0_8, %c0_9, %c0_10] : memref<2x13x64xf32, #tpu.memory_space<vmem>>, vector<1x1x32xf32>
    %21 = vector.shape_cast %20 : vector<1x1x32xf32> to vector<32xf32>
    %c0_11 = arith.constant 0 : index
    %c1 = arith.constant 1 : index
    %c0_12 = arith.constant 0 : index
    %22 = vector.load %arg7[%c0_11, %c1, %c0_12] : memref<2x13x64xf32, #tpu.memory_space<vmem>>, vector<1x1x32xf32>
    %23 = vector.shape_cast %22 : vector<1x1x32xf32> to vector<32xf32>
    %c0_13 = arith.constant 0 : index
    %c2 = arith.constant 2 : index
    %c0_14 = arith.constant 0 : index
    %24 = vector.load %arg7[%c0_13, %c2, %c0_14] : memref<2x13x64xf32, #tpu.memory_space<vmem>>, vector<1x1x32xf32>
    %25 = vector.shape_cast %24 : vector<1x1x32xf32> to vector<32xf32>
    %c0_15 = arith.constant 0 : index
    %c3 = arith.constant 3 : index
    %c0_16 = arith.constant 0 : index
    %26 = vector.load %arg7[%c0_15, %c3, %c0_16] : memref<2x13x64xf32, #tpu.memory_space<vmem>>, vector<1x1x32xf32>
    %27 = vector.shape_cast %26 : vector<1x1x32xf32> to vector<32xf32>
    %c0_17 = arith.constant 0 : index
    %c4 = arith.constant 4 : index
    %c0_18 = arith.constant 0 : index
    %28 = vector.load %arg7[%c0_17, %c4, %c0_18] : memref<2x13x64xf32, #tpu.memory_space<vmem>>, vector<1x1x32xf32>
    %29 = vector.shape_cast %28 : vector<1x1x32xf32> to vector<32xf32>
    %c0_19 = arith.constant 0 : index
    %c5 = arith.constant 5 : index
    %c0_20 = arith.constant 0 : index
    %30 = vector.load %arg7[%c0_19, %c5, %c0_20] : memref<2x13x64xf32, #tpu.memory_space<vmem>>, vector<1x1x32xf32>
    %31 = vector.shape_cast %30 : vector<1x1x32xf32> to vector<32xf32>
    %c0_21 = arith.constant 0 : index
    %c6 = arith.constant 6 : index
    %c0_22 = arith.constant 0 : index
    %32 = vector.load %arg7[%c0_21, %c6, %c0_22] : memref<2x13x64xf32, #tpu.memory_space<vmem>>, vector<1x1x64xf32>
    %33 = vector.shape_cast %32 : vector<1x1x64xf32> to vector<64xf32>
    %cst = arith.constant dense<0.000000e+00> : vector<32xf32>
    %34 = vector.multi_reduction <add>, %0, %cst [1] : vector<32x32xf32> to vector<32xf32>
    %35 = vector.shape_cast %34 : vector<32xf32> to vector<32x1xf32>
    %cst_23 = arith.constant 3.200000e+01 : f32
    %36 = vector.broadcast %cst_23 : f32 to vector<32x1xf32>
    %37 = arith.divf %35, %36 : vector<32x1xf32>
    %38 = vector.broadcast %37 : vector<32x1xf32> to vector<32x32xf32>
    %39 = arith.subf %0, %38 : vector<32x32xf32>
    %40 = arith.mulf %39, %39 : vector<32x32xf32>
    %cst_24 = arith.constant dense<0.000000e+00> : vector<32xf32>
    %41 = vector.multi_reduction <add>, %40, %cst_24 [1] : vector<32x32xf32> to vector<32xf32>
    %42 = vector.shape_cast %41 : vector<32xf32> to vector<32x1xf32>
    %cst_25 = arith.constant 3.200000e+01 : f32
    %43 = vector.broadcast %cst_25 : f32 to vector<32x1xf32>
    %44 = arith.divf %42, %43 : vector<32x1xf32>
    %45 = vector.broadcast %37 : vector<32x1xf32> to vector<32x32xf32>
    %46 = arith.subf %0, %45 : vector<32x32xf32>
    %cst_26 = arith.constant 9.99999974E-6 : f32
    %47 = vector.broadcast %cst_26 : f32 to vector<32x1xf32>
    %48 = arith.addf %44, %47 : vector<32x1xf32>
    %49 = math.rsqrt %48 : vector<32x1xf32>
    %50 = vector.broadcast %49 : vector<32x1xf32> to vector<32x32xf32>
    %51 = arith.mulf %46, %50 : vector<32x32xf32>
    %52 = vector.shape_cast %21 : vector<32xf32> to vector<1x32xf32>
    %53 = vector.broadcast %52 : vector<1x32xf32> to vector<32x32xf32>
    %54 = arith.mulf %51, %53 : vector<32x32xf32>
    %55 = vector.shape_cast %23 : vector<32xf32> to vector<1x32xf32>
    %56 = vector.broadcast %55 : vector<1x32xf32> to vector<32x32xf32>
    %57 = arith.addf %54, %56 : vector<32x32xf32>
    %58 = vector.shape_cast %29 : vector<32xf32> to vector<1x32xf32>
    %59 = vector.broadcast %58 : vector<1x32xf32> to vector<32x32xf32>
    %60 = arith.addf %57, %59 : vector<32x32xf32>
    %c0_27 = arith.constant 0 : index
    %c7 = arith.constant 7 : index
    %c0_28 = arith.constant 0 : index
    %61 = vector.load %arg7[%c0_27, %c7, %c0_28] : memref<2x13x64xf32, #tpu.memory_space<vmem>>, vector<1x1x16xf32>
    %62 = vector.shape_cast %61 : vector<1x1x16xf32> to vector<16xf32>
    %c0_29 = arith.constant 0 : index
    %c9 = arith.constant 9 : index
    %c0_30 = arith.constant 0 : index
    %63 = vector.load %arg7[%c0_29, %c9, %c0_30] : memref<2x13x64xf32, #tpu.memory_space<vmem>>, vector<1x1x16xf32>
    %64 = vector.shape_cast %63 : vector<1x1x16xf32> to vector<16xf32>
    %c0_31 = arith.constant 0 : index
    %c11 = arith.constant 11 : index
    %c0_32 = arith.constant 0 : index
    %65 = vector.load %arg7[%c0_31, %c11, %c0_32] : memref<2x13x64xf32, #tpu.memory_space<vmem>>, vector<1x1x16xf32>
    %66 = vector.shape_cast %65 : vector<1x1x16xf32> to vector<16xf32>
    %c0_33 = arith.constant 0 : index
    %c0_34 = arith.constant 0 : index
    %c0_35 = arith.constant 0 : index
    %c0_36 = arith.constant 0 : index
    %67 = vector.load %arg3[%c0_33, %c0_34, %c0_35, %c0_36] : memref<2x6x32x16xf32, #tpu.memory_space<vmem>>, vector<1x1x32x16xf32>
    %68 = vector.shape_cast %67 : vector<1x1x32x16xf32> to vector<32x16xf32>
    %cst_37 = arith.constant dense<0.000000e+00> : vector<32x16xf32>
    %69 = tpu.matmul %57, %68, %cst_37 {dimension_numbers = #tpu.dot_dimension_numbers<[1], [0], [0], [1], [0, 0, 1, 1], [], []>} : vector<32x32xf32>, vector<32x16xf32>, vector<32x16xf32> -> vector<32x16xf32>
    %70 = vector.shape_cast %62 : vector<16xf32> to vector<1x16xf32>
    %71 = vector.broadcast %70 : vector<1x16xf32> to vector<32x16xf32>
    %72 = arith.addf %69, %71 : vector<32x16xf32>
    %c0_38 = arith.constant 0 : index
    %c2_39 = arith.constant 2 : index
    %c0_40 = arith.constant 0 : index
    %c0_41 = arith.constant 0 : index
    %73 = vector.load %arg3[%c0_38, %c2_39, %c0_40, %c0_41] : memref<2x6x32x16xf32, #tpu.memory_space<vmem>>, vector<1x1x32x16xf32>
    %74 = vector.shape_cast %73 : vector<1x1x32x16xf32> to vector<32x16xf32>
    %cst_42 = arith.constant dense<0.000000e+00> : vector<32x16xf32>
    %75 = tpu.matmul %57, %74, %cst_42 {dimension_numbers = #tpu.dot_dimension_numbers<[1], [0], [0], [1], [0, 0, 1, 1], [], []>} : vector<32x32xf32>, vector<32x16xf32>, vector<32x16xf32> -> vector<32x16xf32>
    %76 = vector.shape_cast %64 : vector<16xf32> to vector<1x16xf32>
    %77 = vector.broadcast %76 : vector<1x16xf32> to vector<32x16xf32>
    %78 = arith.addf %75, %77 : vector<32x16xf32>
    %c0_43 = arith.constant 0 : index
    %c4_44 = arith.constant 4 : index
    %c0_45 = arith.constant 0 : index
    %c0_46 = arith.constant 0 : index
    %79 = vector.load %arg3[%c0_43, %c4_44, %c0_45, %c0_46] : memref<2x6x32x16xf32, #tpu.memory_space<vmem>>, vector<1x1x32x16xf32>
    %80 = vector.shape_cast %79 : vector<1x1x32x16xf32> to vector<32x16xf32>
    %cst_47 = arith.constant dense<0.000000e+00> : vector<32x16xf32>
    %81 = tpu.matmul %57, %80, %cst_47 {dimension_numbers = #tpu.dot_dimension_numbers<[1], [0], [0], [1], [0, 0, 1, 1], [], []>} : vector<32x32xf32>, vector<32x16xf32>, vector<32x16xf32> -> vector<32x16xf32>
    %82 = vector.shape_cast %66 : vector<16xf32> to vector<1x16xf32>
    %83 = vector.broadcast %82 : vector<1x16xf32> to vector<32x16xf32>
    %84 = arith.addf %81, %83 : vector<32x16xf32>
    %cst_48 = arith.constant dense<0.000000e+00> : vector<32x32xf32>
    %85 = tpu.matmul %72, %78, %cst_48 {dimension_numbers = #tpu.dot_dimension_numbers<[1], [1], [0], [0], [0, 0, 1, 0], [], []>} : vector<32x16xf32>, vector<32x16xf32>, vector<32x32xf32> -> vector<32x32xf32>
    %cst_49 = arith.constant 2.500000e-01 : f32
    %86 = vector.broadcast %cst_49 : f32 to vector<32x32xf32>
    %87 = arith.mulf %85, %86 : vector<32x32xf32>
    %88 = arith.addf %87, %1 : vector<32x32xf32>
    %cst_50 = arith.constant dense<0xFF800000> : vector<32xf32>
    %89 = vector.multi_reduction <maximumf>, %88, %cst_50 [1] : vector<32x32xf32> to vector<32xf32>
    %90 = vector.shape_cast %89 : vector<32xf32> to vector<32x1xf32>
    %91 = vector.broadcast %90 : vector<32x1xf32> to vector<32x32xf32>
    %92 = arith.subf %88, %91 : vector<32x32xf32>
    %93 = math.exp %92 : vector<32x32xf32>
    %cst_51 = arith.constant dense<0.000000e+00> : vector<32xf32>
    %94 = vector.multi_reduction <add>, %93, %cst_51 [1] : vector<32x32xf32> to vector<32xf32>
    %95 = vector.shape_cast %94 : vector<32xf32> to vector<32x1xf32>
    %96 = tpu.reciprocal %95 {approx = true} : vector<32x1xf32> -> vector<32x1xf32>
    %97 = vector.broadcast %96 : vector<32x1xf32> to vector<32x32xf32>
    %98 = arith.mulf %93, %97 : vector<32x32xf32>
    %cst_52 = arith.constant dense<0.000000e+00> : vector<32x16xf32>
    %99 = tpu.matmul %98, %84, %cst_52 {dimension_numbers = #tpu.dot_dimension_numbers<[1], [0], [0], [1], [0, 0, 1, 1], [], []>} : vector<32x32xf32>, vector<32x16xf32>, vector<32x16xf32> -> vector<32x16xf32>
    %c0_53 = arith.constant 0 : index
    %c0_54 = arith.constant 0 : index
    %c0_55 = arith.constant 0 : index
    %c0_56 = arith.constant 0 : index
    %100 = vector.load %arg4[%c0_53, %c0_54, %c0_55, %c0_56] : memref<2x2x16x32xf32, #tpu.memory_space<vmem>>, vector<1x1x16x32xf32>
    %101 = vector.shape_cast %100 : vector<1x1x16x32xf32> to vector<16x32xf32>
    %cst_57 = arith.constant dense<0.000000e+00> : vector<32x32xf32>
    %102 = tpu.matmul %99, %101, %cst_57 {dimension_numbers = #tpu.dot_dimension_numbers<[1], [0], [0], [1], [0, 0, 1, 1], [], []>} : vector<32x16xf32>, vector<16x32xf32>, vector<32x32xf32> -> vector<32x32xf32>
    %103 = arith.addf %60, %102 : vector<32x32xf32>
    %c0_58 = arith.constant 0 : index
    %c8 = arith.constant 8 : index
    %c0_59 = arith.constant 0 : index
    %104 = vector.load %arg7[%c0_58, %c8, %c0_59] : memref<2x13x64xf32, #tpu.memory_space<vmem>>, vector<1x1x16xf32>
    %105 = vector.shape_cast %104 : vector<1x1x16xf32> to vector<16xf32>
    %c0_60 = arith.constant 0 : index
    %c10 = arith.constant 10 : index
    %c0_61 = arith.constant 0 : index
    %106 = vector.load %arg7[%c0_60, %c10, %c0_61] : memref<2x13x64xf32, #tpu.memory_space<vmem>>, vector<1x1x16xf32>
    %107 = vector.shape_cast %106 : vector<1x1x16xf32> to vector<16xf32>
    %c0_62 = arith.constant 0 : index
    %c12 = arith.constant 12 : index
    %c0_63 = arith.constant 0 : index
    %108 = vector.load %arg7[%c0_62, %c12, %c0_63] : memref<2x13x64xf32, #tpu.memory_space<vmem>>, vector<1x1x16xf32>
    %109 = vector.shape_cast %108 : vector<1x1x16xf32> to vector<16xf32>
    %c0_64 = arith.constant 0 : index
    %c1_65 = arith.constant 1 : index
    %c0_66 = arith.constant 0 : index
    %c0_67 = arith.constant 0 : index
    %110 = vector.load %arg3[%c0_64, %c1_65, %c0_66, %c0_67] : memref<2x6x32x16xf32, #tpu.memory_space<vmem>>, vector<1x1x32x16xf32>
    %111 = vector.shape_cast %110 : vector<1x1x32x16xf32> to vector<32x16xf32>
    %cst_68 = arith.constant dense<0.000000e+00> : vector<32x16xf32>
    %112 = tpu.matmul %57, %111, %cst_68 {dimension_numbers = #tpu.dot_dimension_numbers<[1], [0], [0], [1], [0, 0, 1, 1], [], []>} : vector<32x32xf32>, vector<32x16xf32>, vector<32x16xf32> -> vector<32x16xf32>
    %113 = vector.shape_cast %105 : vector<16xf32> to vector<1x16xf32>
    %114 = vector.broadcast %113 : vector<1x16xf32> to vector<32x16xf32>
    %115 = arith.addf %112, %114 : vector<32x16xf32>
    %c0_69 = arith.constant 0 : index
    %c3_70 = arith.constant 3 : index
    %c0_71 = arith.constant 0 : index
    %c0_72 = arith.constant 0 : index
    %116 = vector.load %arg3[%c0_69, %c3_70, %c0_71, %c0_72] : memref<2x6x32x16xf32, #tpu.memory_space<vmem>>, vector<1x1x32x16xf32>
    %117 = vector.shape_cast %116 : vector<1x1x32x16xf32> to vector<32x16xf32>
    %cst_73 = arith.constant dense<0.000000e+00> : vector<32x16xf32>
    %118 = tpu.matmul %57, %117, %cst_73 {dimension_numbers = #tpu.dot_dimension_numbers<[1], [0], [0], [1], [0, 0, 1, 1], [], []>} : vector<32x32xf32>, vector<32x16xf32>, vector<32x16xf32> -> vector<32x16xf32>
    %119 = vector.shape_cast %107 : vector<16xf32> to vector<1x16xf32>
    %120 = vector.broadcast %119 : vector<1x16xf32> to vector<32x16xf32>
    %121 = arith.addf %118, %120 : vector<32x16xf32>
    %c0_74 = arith.constant 0 : index
    %c5_75 = arith.constant 5 : index
    %c0_76 = arith.constant 0 : index
    %c0_77 = arith.constant 0 : index
    %122 = vector.load %arg3[%c0_74, %c5_75, %c0_76, %c0_77] : memref<2x6x32x16xf32, #tpu.memory_space<vmem>>, vector<1x1x32x16xf32>
    %123 = vector.shape_cast %122 : vector<1x1x32x16xf32> to vector<32x16xf32>
    %cst_78 = arith.constant dense<0.000000e+00> : vector<32x16xf32>
    %124 = tpu.matmul %57, %123, %cst_78 {dimension_numbers = #tpu.dot_dimension_numbers<[1], [0], [0], [1], [0, 0, 1, 1], [], []>} : vector<32x32xf32>, vector<32x16xf32>, vector<32x16xf32> -> vector<32x16xf32>
    %125 = vector.shape_cast %109 : vector<16xf32> to vector<1x16xf32>
    %126 = vector.broadcast %125 : vector<1x16xf32> to vector<32x16xf32>
    %127 = arith.addf %124, %126 : vector<32x16xf32>
    %cst_79 = arith.constant dense<0.000000e+00> : vector<32x32xf32>
    %128 = tpu.matmul %115, %121, %cst_79 {dimension_numbers = #tpu.dot_dimension_numbers<[1], [1], [0], [0], [0, 0, 1, 0], [], []>} : vector<32x16xf32>, vector<32x16xf32>, vector<32x32xf32> -> vector<32x32xf32>
    %cst_80 = arith.constant 2.500000e-01 : f32
    %129 = vector.broadcast %cst_80 : f32 to vector<32x32xf32>
    %130 = arith.mulf %128, %129 : vector<32x32xf32>
    %131 = arith.addf %130, %1 : vector<32x32xf32>
    %cst_81 = arith.constant dense<0xFF800000> : vector<32xf32>
    %132 = vector.multi_reduction <maximumf>, %131, %cst_81 [1] : vector<32x32xf32> to vector<32xf32>
    %133 = vector.shape_cast %132 : vector<32xf32> to vector<32x1xf32>
    %134 = vector.broadcast %133 : vector<32x1xf32> to vector<32x32xf32>
    %135 = arith.subf %131, %134 : vector<32x32xf32>
    %136 = math.exp %135 : vector<32x32xf32>
    %cst_82 = arith.constant dense<0.000000e+00> : vector<32xf32>
    %137 = vector.multi_reduction <add>, %136, %cst_82 [1] : vector<32x32xf32> to vector<32xf32>
    %138 = vector.shape_cast %137 : vector<32xf32> to vector<32x1xf32>
    %139 = tpu.reciprocal %138 {approx = true} : vector<32x1xf32> -> vector<32x1xf32>
    %140 = vector.broadcast %139 : vector<32x1xf32> to vector<32x32xf32>
    %141 = arith.mulf %136, %140 : vector<32x32xf32>
    %cst_83 = arith.constant dense<0.000000e+00> : vector<32x16xf32>
    %142 = tpu.matmul %141, %127, %cst_83 {dimension_numbers = #tpu.dot_dimension_numbers<[1], [0], [0], [1], [0, 0, 1, 1], [], []>} : vector<32x32xf32>, vector<32x16xf32>, vector<32x16xf32> -> vector<32x16xf32>
    %c0_84 = arith.constant 0 : index
    %c1_85 = arith.constant 1 : index
    %c0_86 = arith.constant 0 : index
    %c0_87 = arith.constant 0 : index
    %143 = vector.load %arg4[%c0_84, %c1_85, %c0_86, %c0_87] : memref<2x2x16x32xf32, #tpu.memory_space<vmem>>, vector<1x1x16x32xf32>
    %144 = vector.shape_cast %143 : vector<1x1x16x32xf32> to vector<16x32xf32>
    %cst_88 = arith.constant dense<0.000000e+00> : vector<32x32xf32>
    %145 = tpu.matmul %142, %144, %cst_88 {dimension_numbers = #tpu.dot_dimension_numbers<[1], [0], [0], [1], [0, 0, 1, 1], [], []>} : vector<32x16xf32>, vector<16x32xf32>, vector<32x32xf32> -> vector<32x32xf32>
    %146 = arith.addf %103, %145 : vector<32x32xf32>
    %cst_89 = arith.constant dense<0.000000e+00> : vector<32xf32>
    %147 = vector.multi_reduction <add>, %146, %cst_89 [1] : vector<32x32xf32> to vector<32xf32>
    %148 = vector.shape_cast %147 : vector<32xf32> to vector<32x1xf32>
    %cst_90 = arith.constant 3.200000e+01 : f32
    %149 = vector.broadcast %cst_90 : f32 to vector<32x1xf32>
    %150 = arith.divf %148, %149 : vector<32x1xf32>
    %151 = vector.broadcast %150 : vector<32x1xf32> to vector<32x32xf32>
    %152 = arith.subf %146, %151 : vector<32x32xf32>
    %153 = arith.mulf %152, %152 : vector<32x32xf32>
    %cst_91 = arith.constant dense<0.000000e+00> : vector<32xf32>
    %154 = vector.multi_reduction <add>, %153, %cst_91 [1] : vector<32x32xf32> to vector<32xf32>
    %155 = vector.shape_cast %154 : vector<32xf32> to vector<32x1xf32>
    %cst_92 = arith.constant 3.200000e+01 : f32
    %156 = vector.broadcast %cst_92 : f32 to vector<32x1xf32>
    %157 = arith.divf %155, %156 : vector<32x1xf32>
    %158 = vector.broadcast %150 : vector<32x1xf32> to vector<32x32xf32>
    %159 = arith.subf %146, %158 : vector<32x32xf32>
    %cst_93 = arith.constant 9.99999974E-6 : f32
    %160 = vector.broadcast %cst_93 : f32 to vector<32x1xf32>
    %161 = arith.addf %157, %160 : vector<32x1xf32>
    %162 = math.rsqrt %161 : vector<32x1xf32>
    %163 = vector.broadcast %162 : vector<32x1xf32> to vector<32x32xf32>
    %164 = arith.mulf %159, %163 : vector<32x32xf32>
    %165 = vector.shape_cast %25 : vector<32xf32> to vector<1x32xf32>
    %166 = vector.broadcast %165 : vector<1x32xf32> to vector<32x32xf32>
    %167 = arith.mulf %164, %166 : vector<32x32xf32>
    %168 = vector.shape_cast %27 : vector<32xf32> to vector<1x32xf32>
    %169 = vector.broadcast %168 : vector<1x32xf32> to vector<32x32xf32>
    %170 = arith.addf %167, %169 : vector<32x32xf32>
    %171 = vector.broadcast %2 : vector<32x1xf32> to vector<32x32xf32>
    %172 = arith.mulf %170, %171 : vector<32x32xf32>
    %c0_94 = arith.constant 0 : index
    %c4_95 = arith.constant 4 : index
    %c0_96 = arith.constant 0 : index
    %c0_97 = arith.constant 0 : index
    %173 = vector.load %arg5[%c0_94, %c4_95, %c0_96, %c0_97] : memref<2x9x32x64xf32, #tpu.memory_space<vmem>>, vector<1x1x32x64xf32>
    %174 = vector.shape_cast %173 : vector<1x1x32x64xf32> to vector<32x64xf32>
    %cst_98 = arith.constant dense<0.000000e+00> : vector<32x64xf32>
    %175 = tpu.matmul %172, %174, %cst_98 {dimension_numbers = #tpu.dot_dimension_numbers<[1], [0], [0], [1], [0, 0, 1, 1], [], []>} : vector<32x32xf32>, vector<32x64xf32>, vector<32x64xf32> -> vector<32x64xf32>
    %176 = vector.shape_cast %33 : vector<64xf32> to vector<1x64xf32>
    %177 = vector.broadcast %176 : vector<1x64xf32> to vector<32x64xf32>
    %178 = arith.addf %175, %177 : vector<32x64xf32>
    %c4_i32 = arith.constant 4 : i32
    %179 = tpu.dynamic_rotate %172 by %c4_i32 dim 0 : vector<32x32xf32>, i32 -> vector<32x32xf32>
    %c4_i32_99 = arith.constant 4 : i32
    %180 = vector.broadcast %c4_i32_99 : i32 to vector<32x1xi32>
    %181 = arith.cmpi sge, %19, %180 : vector<32x1xi32>
    %cst_100 = arith.constant 1.000000e+00 : f32
    %cst_101 = arith.constant 0.000000e+00 : f32
    %182 = vector.broadcast %cst_100 : f32 to vector<32x1xf32>
    %183 = vector.broadcast %cst_101 : f32 to vector<32x1xf32>
    %184 = arith.select %181, %182, %183 : vector<32x1xi1>, vector<32x1xf32>
    %185 = vector.broadcast %184 : vector<32x1xf32> to vector<32x32xf32>
    %186 = arith.mulf %179, %185 : vector<32x32xf32>
    %c0_102 = arith.constant 0 : index
    %c0_103 = arith.constant 0 : index
    %c0_104 = arith.constant 0 : index
    %c0_105 = arith.constant 0 : index
    %187 = vector.load %arg5[%c0_102, %c0_103, %c0_104, %c0_105] : memref<2x9x32x64xf32, #tpu.memory_space<vmem>>, vector<1x1x32x64xf32>
    %188 = vector.shape_cast %187 : vector<1x1x32x64xf32> to vector<32x64xf32>
    %cst_106 = arith.constant dense<0.000000e+00> : vector<32x64xf32>
    %189 = tpu.matmul %186, %188, %cst_106 {dimension_numbers = #tpu.dot_dimension_numbers<[1], [0], [0], [1], [0, 0, 1, 1], [], []>} : vector<32x32xf32>, vector<32x64xf32>, vector<32x64xf32> -> vector<32x64xf32>
    %190 = arith.addf %178, %189 : vector<32x64xf32>
    %c3_i32 = arith.constant 3 : i32
    %191 = tpu.dynamic_rotate %172 by %c3_i32 dim 0 : vector<32x32xf32>, i32 -> vector<32x32xf32>
    %c3_i32_107 = arith.constant 3 : i32
    %192 = vector.broadcast %c3_i32_107 : i32 to vector<32x1xi32>
    %193 = arith.cmpi sge, %19, %192 : vector<32x1xi32>
    %cst_108 = arith.constant 1.000000e+00 : f32
    %cst_109 = arith.constant 0.000000e+00 : f32
    %194 = vector.broadcast %cst_108 : f32 to vector<32x1xf32>
    %195 = vector.broadcast %cst_109 : f32 to vector<32x1xf32>
    %196 = arith.select %193, %194, %195 : vector<32x1xi1>, vector<32x1xf32>
    %197 = vector.broadcast %196 : vector<32x1xf32> to vector<32x32xf32>
    %198 = arith.mulf %191, %197 : vector<32x32xf32>
    %c0_110 = arith.constant 0 : index
    %c1_111 = arith.constant 1 : index
    %c0_112 = arith.constant 0 : index
    %c0_113 = arith.constant 0 : index
    %199 = vector.load %arg5[%c0_110, %c1_111, %c0_112, %c0_113] : memref<2x9x32x64xf32, #tpu.memory_space<vmem>>, vector<1x1x32x64xf32>
    %200 = vector.shape_cast %199 : vector<1x1x32x64xf32> to vector<32x64xf32>
    %cst_114 = arith.constant dense<0.000000e+00> : vector<32x64xf32>
    %201 = tpu.matmul %198, %200, %cst_114 {dimension_numbers = #tpu.dot_dimension_numbers<[1], [0], [0], [1], [0, 0, 1, 1], [], []>} : vector<32x32xf32>, vector<32x64xf32>, vector<32x64xf32> -> vector<32x64xf32>
    %202 = arith.addf %190, %201 : vector<32x64xf32>
    %c2_i32 = arith.constant 2 : i32
    %203 = tpu.dynamic_rotate %172 by %c2_i32 dim 0 : vector<32x32xf32>, i32 -> vector<32x32xf32>
    %c2_i32_115 = arith.constant 2 : i32
    %204 = vector.broadcast %c2_i32_115 : i32 to vector<32x1xi32>
    %205 = arith.cmpi sge, %19, %204 : vector<32x1xi32>
    %cst_116 = arith.constant 1.000000e+00 : f32
    %cst_117 = arith.constant 0.000000e+00 : f32
    %206 = vector.broadcast %cst_116 : f32 to vector<32x1xf32>
    %207 = vector.broadcast %cst_117 : f32 to vector<32x1xf32>
    %208 = arith.select %205, %206, %207 : vector<32x1xi1>, vector<32x1xf32>
    %209 = vector.broadcast %208 : vector<32x1xf32> to vector<32x32xf32>
    %210 = arith.mulf %203, %209 : vector<32x32xf32>
    %c0_118 = arith.constant 0 : index
    %c2_119 = arith.constant 2 : index
    %c0_120 = arith.constant 0 : index
    %c0_121 = arith.constant 0 : index
    %211 = vector.load %arg5[%c0_118, %c2_119, %c0_120, %c0_121] : memref<2x9x32x64xf32, #tpu.memory_space<vmem>>, vector<1x1x32x64xf32>
    %212 = vector.shape_cast %211 : vector<1x1x32x64xf32> to vector<32x64xf32>
    %cst_122 = arith.constant dense<0.000000e+00> : vector<32x64xf32>
    %213 = tpu.matmul %210, %212, %cst_122 {dimension_numbers = #tpu.dot_dimension_numbers<[1], [0], [0], [1], [0, 0, 1, 1], [], []>} : vector<32x32xf32>, vector<32x64xf32>, vector<32x64xf32> -> vector<32x64xf32>
    %214 = arith.addf %202, %213 : vector<32x64xf32>
    %c1_i32_123 = arith.constant 1 : i32
    %215 = tpu.dynamic_rotate %172 by %c1_i32_123 dim 0 : vector<32x32xf32>, i32 -> vector<32x32xf32>
    %c1_i32_124 = arith.constant 1 : i32
    %216 = vector.broadcast %c1_i32_124 : i32 to vector<32x1xi32>
    %217 = arith.cmpi sge, %19, %216 : vector<32x1xi32>
    %cst_125 = arith.constant 1.000000e+00 : f32
    %cst_126 = arith.constant 0.000000e+00 : f32
    %218 = vector.broadcast %cst_125 : f32 to vector<32x1xf32>
    %219 = vector.broadcast %cst_126 : f32 to vector<32x1xf32>
    %220 = arith.select %217, %218, %219 : vector<32x1xi1>, vector<32x1xf32>
    %221 = vector.broadcast %220 : vector<32x1xf32> to vector<32x32xf32>
    %222 = arith.mulf %215, %221 : vector<32x32xf32>
    %c0_127 = arith.constant 0 : index
    %c3_128 = arith.constant 3 : index
    %c0_129 = arith.constant 0 : index
    %c0_130 = arith.constant 0 : index
    %223 = vector.load %arg5[%c0_127, %c3_128, %c0_129, %c0_130] : memref<2x9x32x64xf32, #tpu.memory_space<vmem>>, vector<1x1x32x64xf32>
    %224 = vector.shape_cast %223 : vector<1x1x32x64xf32> to vector<32x64xf32>
    %cst_131 = arith.constant dense<0.000000e+00> : vector<32x64xf32>
    %225 = tpu.matmul %222, %224, %cst_131 {dimension_numbers = #tpu.dot_dimension_numbers<[1], [0], [0], [1], [0, 0, 1, 1], [], []>} : vector<32x32xf32>, vector<32x64xf32>, vector<32x64xf32> -> vector<32x64xf32>
    %226 = arith.addf %214, %225 : vector<32x64xf32>
    %c31_i32 = arith.constant 31 : i32
    %227 = tpu.dynamic_rotate %172 by %c31_i32 dim 0 : vector<32x32xf32>, i32 -> vector<32x32xf32>
    %c15_i32 = arith.constant 15 : i32
    %228 = vector.broadcast %c15_i32 : i32 to vector<32x1xi32>
    %229 = arith.cmpi slt, %19, %228 : vector<32x1xi32>
    %cst_132 = arith.constant 1.000000e+00 : f32
    %cst_133 = arith.constant 0.000000e+00 : f32
    %230 = vector.broadcast %cst_132 : f32 to vector<32x1xf32>
    %231 = vector.broadcast %cst_133 : f32 to vector<32x1xf32>
    %232 = arith.select %229, %230, %231 : vector<32x1xi1>, vector<32x1xf32>
    %233 = vector.broadcast %232 : vector<32x1xf32> to vector<32x32xf32>
    %234 = arith.mulf %227, %233 : vector<32x32xf32>
    %c0_134 = arith.constant 0 : index
    %c5_135 = arith.constant 5 : index
    %c0_136 = arith.constant 0 : index
    %c0_137 = arith.constant 0 : index
    %235 = vector.load %arg5[%c0_134, %c5_135, %c0_136, %c0_137] : memref<2x9x32x64xf32, #tpu.memory_space<vmem>>, vector<1x1x32x64xf32>
    %236 = vector.shape_cast %235 : vector<1x1x32x64xf32> to vector<32x64xf32>
    %cst_138 = arith.constant dense<0.000000e+00> : vector<32x64xf32>
    %237 = tpu.matmul %234, %236, %cst_138 {dimension_numbers = #tpu.dot_dimension_numbers<[1], [0], [0], [1], [0, 0, 1, 1], [], []>} : vector<32x32xf32>, vector<32x64xf32>, vector<32x64xf32> -> vector<32x64xf32>
    %238 = arith.addf %226, %237 : vector<32x64xf32>
    %c30_i32 = arith.constant 30 : i32
    %239 = tpu.dynamic_rotate %172 by %c30_i32 dim 0 : vector<32x32xf32>, i32 -> vector<32x32xf32>
    %c14_i32 = arith.constant 14 : i32
    %240 = vector.broadcast %c14_i32 : i32 to vector<32x1xi32>
    %241 = arith.cmpi slt, %19, %240 : vector<32x1xi32>
    %cst_139 = arith.constant 1.000000e+00 : f32
    %cst_140 = arith.constant 0.000000e+00 : f32
    %242 = vector.broadcast %cst_139 : f32 to vector<32x1xf32>
    %243 = vector.broadcast %cst_140 : f32 to vector<32x1xf32>
    %244 = arith.select %241, %242, %243 : vector<32x1xi1>, vector<32x1xf32>
    %245 = vector.broadcast %244 : vector<32x1xf32> to vector<32x32xf32>
    %246 = arith.mulf %239, %245 : vector<32x32xf32>
    %c0_141 = arith.constant 0 : index
    %c6_142 = arith.constant 6 : index
    %c0_143 = arith.constant 0 : index
    %c0_144 = arith.constant 0 : index
    %247 = vector.load %arg5[%c0_141, %c6_142, %c0_143, %c0_144] : memref<2x9x32x64xf32, #tpu.memory_space<vmem>>, vector<1x1x32x64xf32>
    %248 = vector.shape_cast %247 : vector<1x1x32x64xf32> to vector<32x64xf32>
    %cst_145 = arith.constant dense<0.000000e+00> : vector<32x64xf32>
    %249 = tpu.matmul %246, %248, %cst_145 {dimension_numbers = #tpu.dot_dimension_numbers<[1], [0], [0], [1], [0, 0, 1, 1], [], []>} : vector<32x32xf32>, vector<32x64xf32>, vector<32x64xf32> -> vector<32x64xf32>
    %250 = arith.addf %238, %249 : vector<32x64xf32>
    %c29_i32 = arith.constant 29 : i32
    %251 = tpu.dynamic_rotate %172 by %c29_i32 dim 0 : vector<32x32xf32>, i32 -> vector<32x32xf32>
    %c13_i32 = arith.constant 13 : i32
    %252 = vector.broadcast %c13_i32 : i32 to vector<32x1xi32>
    %253 = arith.cmpi slt, %19, %252 : vector<32x1xi32>
    %cst_146 = arith.constant 1.000000e+00 : f32
    %cst_147 = arith.constant 0.000000e+00 : f32
    %254 = vector.broadcast %cst_146 : f32 to vector<32x1xf32>
    %255 = vector.broadcast %cst_147 : f32 to vector<32x1xf32>
    %256 = arith.select %253, %254, %255 : vector<32x1xi1>, vector<32x1xf32>
    %257 = vector.broadcast %256 : vector<32x1xf32> to vector<32x32xf32>
    %258 = arith.mulf %251, %257 : vector<32x32xf32>
    %c0_148 = arith.constant 0 : index
    %c7_149 = arith.constant 7 : index
    %c0_150 = arith.constant 0 : index
    %c0_151 = arith.constant 0 : index
    %259 = vector.load %arg5[%c0_148, %c7_149, %c0_150, %c0_151] : memref<2x9x32x64xf32, #tpu.memory_space<vmem>>, vector<1x1x32x64xf32>
    %260 = vector.shape_cast %259 : vector<1x1x32x64xf32> to vector<32x64xf32>
    %cst_152 = arith.constant dense<0.000000e+00> : vector<32x64xf32>
    %261 = tpu.matmul %258, %260, %cst_152 {dimension_numbers = #tpu.dot_dimension_numbers<[1], [0], [0], [1], [0, 0, 1, 1], [], []>} : vector<32x32xf32>, vector<32x64xf32>, vector<32x64xf32> -> vector<32x64xf32>
    %262 = arith.addf %250, %261 : vector<32x64xf32>
    %c28_i32 = arith.constant 28 : i32
    %263 = tpu.dynamic_rotate %172 by %c28_i32 dim 0 : vector<32x32xf32>, i32 -> vector<32x32xf32>
    %c12_i32 = arith.constant 12 : i32
    %264 = vector.broadcast %c12_i32 : i32 to vector<32x1xi32>
    %265 = arith.cmpi slt, %19, %264 : vector<32x1xi32>
    %cst_153 = arith.constant 1.000000e+00 : f32
    %cst_154 = arith.constant 0.000000e+00 : f32
    %266 = vector.broadcast %cst_153 : f32 to vector<32x1xf32>
    %267 = vector.broadcast %cst_154 : f32 to vector<32x1xf32>
    %268 = arith.select %265, %266, %267 : vector<32x1xi1>, vector<32x1xf32>
    %269 = vector.broadcast %268 : vector<32x1xf32> to vector<32x32xf32>
    %270 = arith.mulf %263, %269 : vector<32x32xf32>
    %c0_155 = arith.constant 0 : index
    %c8_156 = arith.constant 8 : index
    %c0_157 = arith.constant 0 : index
    %c0_158 = arith.constant 0 : index
    %271 = vector.load %arg5[%c0_155, %c8_156, %c0_157, %c0_158] : memref<2x9x32x64xf32, #tpu.memory_space<vmem>>, vector<1x1x32x64xf32>
    %272 = vector.shape_cast %271 : vector<1x1x32x64xf32> to vector<32x64xf32>
    %cst_159 = arith.constant dense<0.000000e+00> : vector<32x64xf32>
    %273 = tpu.matmul %270, %272, %cst_159 {dimension_numbers = #tpu.dot_dimension_numbers<[1], [0], [0], [1], [0, 0, 1, 1], [], []>} : vector<32x32xf32>, vector<32x64xf32>, vector<32x64xf32> -> vector<32x64xf32>
    %274 = arith.addf %262, %273 : vector<32x64xf32>
    %cst_160 = arith.constant 0.000000e+00 : f32
    %275 = vector.broadcast %cst_160 : f32 to vector<32x64xf32>
    %276 = arith.maximumf %274, %275 : vector<32x64xf32>
    %c0_161 = arith.constant 0 : index
    %c0_162 = arith.constant 0 : index
    %c0_163 = arith.constant 0 : index
    %277 = vector.load %arg6[%c0_161, %c0_162, %c0_163] : memref<2x64x32xf32, #tpu.memory_space<vmem>>, vector<1x64x32xf32>
    %278 = vector.shape_cast %277 : vector<1x64x32xf32> to vector<64x32xf32>
    %cst_164 = arith.constant dense<0.000000e+00> : vector<32x32xf32>
    %279 = tpu.matmul %276, %278, %cst_164 {dimension_numbers = #tpu.dot_dimension_numbers<[1], [0], [0], [1], [0, 0, 1, 1], [], []>} : vector<32x64xf32>, vector<64x32xf32>, vector<32x32xf32> -> vector<32x32xf32>
    %280 = vector.shape_cast %31 : vector<32xf32> to vector<1x32xf32>
    %281 = vector.broadcast %280 : vector<1x32xf32> to vector<32x32xf32>
    %282 = arith.addf %279, %281 : vector<32x32xf32>
    %283 = arith.addf %282, %172 : vector<32x32xf32>
    %284 = vector.broadcast %2 : vector<32x1xf32> to vector<32x32xf32>
    %285 = arith.mulf %283, %284 : vector<32x32xf32>
    %c1_165 = arith.constant 1 : index
    %c0_166 = arith.constant 0 : index
    %c0_167 = arith.constant 0 : index
    %286 = vector.load %arg7[%c1_165, %c0_166, %c0_167] : memref<2x13x64xf32, #tpu.memory_space<vmem>>, vector<1x1x32xf32>
    %287 = vector.shape_cast %286 : vector<1x1x32xf32> to vector<32xf32>
    %c1_168 = arith.constant 1 : index
    %c1_169 = arith.constant 1 : index
    %c0_170 = arith.constant 0 : index
    %288 = vector.load %arg7[%c1_168, %c1_169, %c0_170] : memref<2x13x64xf32, #tpu.memory_space<vmem>>, vector<1x1x32xf32>
    %289 = vector.shape_cast %288 : vector<1x1x32xf32> to vector<32xf32>
    %c1_171 = arith.constant 1 : index
    %c2_172 = arith.constant 2 : index
    %c0_173 = arith.constant 0 : index
    %290 = vector.load %arg7[%c1_171, %c2_172, %c0_173] : memref<2x13x64xf32, #tpu.memory_space<vmem>>, vector<1x1x32xf32>
    %291 = vector.shape_cast %290 : vector<1x1x32xf32> to vector<32xf32>
    %c1_174 = arith.constant 1 : index
    %c3_175 = arith.constant 3 : index
    %c0_176 = arith.constant 0 : index
    %292 = vector.load %arg7[%c1_174, %c3_175, %c0_176] : memref<2x13x64xf32, #tpu.memory_space<vmem>>, vector<1x1x32xf32>
    %293 = vector.shape_cast %292 : vector<1x1x32xf32> to vector<32xf32>
    %c1_177 = arith.constant 1 : index
    %c4_178 = arith.constant 4 : index
    %c0_179 = arith.constant 0 : index
    %294 = vector.load %arg7[%c1_177, %c4_178, %c0_179] : memref<2x13x64xf32, #tpu.memory_space<vmem>>, vector<1x1x32xf32>
    %295 = vector.shape_cast %294 : vector<1x1x32xf32> to vector<32xf32>
    %c1_180 = arith.constant 1 : index
    %c5_181 = arith.constant 5 : index
    %c0_182 = arith.constant 0 : index
    %296 = vector.load %arg7[%c1_180, %c5_181, %c0_182] : memref<2x13x64xf32, #tpu.memory_space<vmem>>, vector<1x1x32xf32>
    %297 = vector.shape_cast %296 : vector<1x1x32xf32> to vector<32xf32>
    %c1_183 = arith.constant 1 : index
    %c6_184 = arith.constant 6 : index
    %c0_185 = arith.constant 0 : index
    %298 = vector.load %arg7[%c1_183, %c6_184, %c0_185] : memref<2x13x64xf32, #tpu.memory_space<vmem>>, vector<1x1x64xf32>
    %299 = vector.shape_cast %298 : vector<1x1x64xf32> to vector<64xf32>
    %cst_186 = arith.constant dense<0.000000e+00> : vector<32xf32>
    %300 = vector.multi_reduction <add>, %285, %cst_186 [1] : vector<32x32xf32> to vector<32xf32>
    %301 = vector.shape_cast %300 : vector<32xf32> to vector<32x1xf32>
    %cst_187 = arith.constant 3.200000e+01 : f32
    %302 = vector.broadcast %cst_187 : f32 to vector<32x1xf32>
    %303 = arith.divf %301, %302 : vector<32x1xf32>
    %304 = vector.broadcast %303 : vector<32x1xf32> to vector<32x32xf32>
    %305 = arith.subf %285, %304 : vector<32x32xf32>
    %306 = arith.mulf %305, %305 : vector<32x32xf32>
    %cst_188 = arith.constant dense<0.000000e+00> : vector<32xf32>
    %307 = vector.multi_reduction <add>, %306, %cst_188 [1] : vector<32x32xf32> to vector<32xf32>
    %308 = vector.shape_cast %307 : vector<32xf32> to vector<32x1xf32>
    %cst_189 = arith.constant 3.200000e+01 : f32
    %309 = vector.broadcast %cst_189 : f32 to vector<32x1xf32>
    %310 = arith.divf %308, %309 : vector<32x1xf32>
    %311 = vector.broadcast %303 : vector<32x1xf32> to vector<32x32xf32>
    %312 = arith.subf %285, %311 : vector<32x32xf32>
    %cst_190 = arith.constant 9.99999974E-6 : f32
    %313 = vector.broadcast %cst_190 : f32 to vector<32x1xf32>
    %314 = arith.addf %310, %313 : vector<32x1xf32>
    %315 = math.rsqrt %314 : vector<32x1xf32>
    %316 = vector.broadcast %315 : vector<32x1xf32> to vector<32x32xf32>
    %317 = arith.mulf %312, %316 : vector<32x32xf32>
    %318 = vector.shape_cast %287 : vector<32xf32> to vector<1x32xf32>
    %319 = vector.broadcast %318 : vector<1x32xf32> to vector<32x32xf32>
    %320 = arith.mulf %317, %319 : vector<32x32xf32>
    %321 = vector.shape_cast %289 : vector<32xf32> to vector<1x32xf32>
    %322 = vector.broadcast %321 : vector<1x32xf32> to vector<32x32xf32>
    %323 = arith.addf %320, %322 : vector<32x32xf32>
    %324 = vector.shape_cast %295 : vector<32xf32> to vector<1x32xf32>
    %325 = vector.broadcast %324 : vector<1x32xf32> to vector<32x32xf32>
    %326 = arith.addf %323, %325 : vector<32x32xf32>
    %c1_191 = arith.constant 1 : index
    %c7_192 = arith.constant 7 : index
    %c0_193 = arith.constant 0 : index
    %327 = vector.load %arg7[%c1_191, %c7_192, %c0_193] : memref<2x13x64xf32, #tpu.memory_space<vmem>>, vector<1x1x16xf32>
    %328 = vector.shape_cast %327 : vector<1x1x16xf32> to vector<16xf32>
    %c1_194 = arith.constant 1 : index
    %c9_195 = arith.constant 9 : index
    %c0_196 = arith.constant 0 : index
    %329 = vector.load %arg7[%c1_194, %c9_195, %c0_196] : memref<2x13x64xf32, #tpu.memory_space<vmem>>, vector<1x1x16xf32>
    %330 = vector.shape_cast %329 : vector<1x1x16xf32> to vector<16xf32>
    %c1_197 = arith.constant 1 : index
    %c11_198 = arith.constant 11 : index
    %c0_199 = arith.constant 0 : index
    %331 = vector.load %arg7[%c1_197, %c11_198, %c0_199] : memref<2x13x64xf32, #tpu.memory_space<vmem>>, vector<1x1x16xf32>
    %332 = vector.shape_cast %331 : vector<1x1x16xf32> to vector<16xf32>
    %c1_200 = arith.constant 1 : index
    %c0_201 = arith.constant 0 : index
    %c0_202 = arith.constant 0 : index
    %c0_203 = arith.constant 0 : index
    %333 = vector.load %arg3[%c1_200, %c0_201, %c0_202, %c0_203] : memref<2x6x32x16xf32, #tpu.memory_space<vmem>>, vector<1x1x32x16xf32>
    %334 = vector.shape_cast %333 : vector<1x1x32x16xf32> to vector<32x16xf32>
    %cst_204 = arith.constant dense<0.000000e+00> : vector<32x16xf32>
    %335 = tpu.matmul %323, %334, %cst_204 {dimension_numbers = #tpu.dot_dimension_numbers<[1], [0], [0], [1], [0, 0, 1, 1], [], []>} : vector<32x32xf32>, vector<32x16xf32>, vector<32x16xf32> -> vector<32x16xf32>
    %336 = vector.shape_cast %328 : vector<16xf32> to vector<1x16xf32>
    %337 = vector.broadcast %336 : vector<1x16xf32> to vector<32x16xf32>
    %338 = arith.addf %335, %337 : vector<32x16xf32>
    %c1_205 = arith.constant 1 : index
    %c2_206 = arith.constant 2 : index
    %c0_207 = arith.constant 0 : index
    %c0_208 = arith.constant 0 : index
    %339 = vector.load %arg3[%c1_205, %c2_206, %c0_207, %c0_208] : memref<2x6x32x16xf32, #tpu.memory_space<vmem>>, vector<1x1x32x16xf32>
    %340 = vector.shape_cast %339 : vector<1x1x32x16xf32> to vector<32x16xf32>
    %cst_209 = arith.constant dense<0.000000e+00> : vector<32x16xf32>
    %341 = tpu.matmul %323, %340, %cst_209 {dimension_numbers = #tpu.dot_dimension_numbers<[1], [0], [0], [1], [0, 0, 1, 1], [], []>} : vector<32x32xf32>, vector<32x16xf32>, vector<32x16xf32> -> vector<32x16xf32>
    %342 = vector.shape_cast %330 : vector<16xf32> to vector<1x16xf32>
    %343 = vector.broadcast %342 : vector<1x16xf32> to vector<32x16xf32>
    %344 = arith.addf %341, %343 : vector<32x16xf32>
    %c1_210 = arith.constant 1 : index
    %c4_211 = arith.constant 4 : index
    %c0_212 = arith.constant 0 : index
    %c0_213 = arith.constant 0 : index
    %345 = vector.load %arg3[%c1_210, %c4_211, %c0_212, %c0_213] : memref<2x6x32x16xf32, #tpu.memory_space<vmem>>, vector<1x1x32x16xf32>
    %346 = vector.shape_cast %345 : vector<1x1x32x16xf32> to vector<32x16xf32>
    %cst_214 = arith.constant dense<0.000000e+00> : vector<32x16xf32>
    %347 = tpu.matmul %323, %346, %cst_214 {dimension_numbers = #tpu.dot_dimension_numbers<[1], [0], [0], [1], [0, 0, 1, 1], [], []>} : vector<32x32xf32>, vector<32x16xf32>, vector<32x16xf32> -> vector<32x16xf32>
    %348 = vector.shape_cast %332 : vector<16xf32> to vector<1x16xf32>
    %349 = vector.broadcast %348 : vector<1x16xf32> to vector<32x16xf32>
    %350 = arith.addf %347, %349 : vector<32x16xf32>
    %cst_215 = arith.constant dense<0.000000e+00> : vector<32x32xf32>
    %351 = tpu.matmul %338, %344, %cst_215 {dimension_numbers = #tpu.dot_dimension_numbers<[1], [1], [0], [0], [0, 0, 1, 0], [], []>} : vector<32x16xf32>, vector<32x16xf32>, vector<32x32xf32> -> vector<32x32xf32>
    %cst_216 = arith.constant 2.500000e-01 : f32
    %352 = vector.broadcast %cst_216 : f32 to vector<32x32xf32>
    %353 = arith.mulf %351, %352 : vector<32x32xf32>
    %354 = arith.addf %353, %1 : vector<32x32xf32>
    %cst_217 = arith.constant dense<0xFF800000> : vector<32xf32>
    %355 = vector.multi_reduction <maximumf>, %354, %cst_217 [1] : vector<32x32xf32> to vector<32xf32>
    %356 = vector.shape_cast %355 : vector<32xf32> to vector<32x1xf32>
    %357 = vector.broadcast %356 : vector<32x1xf32> to vector<32x32xf32>
    %358 = arith.subf %354, %357 : vector<32x32xf32>
    %359 = math.exp %358 : vector<32x32xf32>
    %cst_218 = arith.constant dense<0.000000e+00> : vector<32xf32>
    %360 = vector.multi_reduction <add>, %359, %cst_218 [1] : vector<32x32xf32> to vector<32xf32>
    %361 = vector.shape_cast %360 : vector<32xf32> to vector<32x1xf32>
    %362 = tpu.reciprocal %361 {approx = true} : vector<32x1xf32> -> vector<32x1xf32>
    %363 = vector.broadcast %362 : vector<32x1xf32> to vector<32x32xf32>
    %364 = arith.mulf %359, %363 : vector<32x32xf32>
    %cst_219 = arith.constant dense<0.000000e+00> : vector<32x16xf32>
    %365 = tpu.matmul %364, %350, %cst_219 {dimension_numbers = #tpu.dot_dimension_numbers<[1], [0], [0], [1], [0, 0, 1, 1], [], []>} : vector<32x32xf32>, vector<32x16xf32>, vector<32x16xf32> -> vector<32x16xf32>
    %c1_220 = arith.constant 1 : index
    %c0_221 = arith.constant 0 : index
    %c0_222 = arith.constant 0 : index
    %c0_223 = arith.constant 0 : index
    %366 = vector.load %arg4[%c1_220, %c0_221, %c0_222, %c0_223] : memref<2x2x16x32xf32, #tpu.memory_space<vmem>>, vector<1x1x16x32xf32>
    %367 = vector.shape_cast %366 : vector<1x1x16x32xf32> to vector<16x32xf32>
    %cst_224 = arith.constant dense<0.000000e+00> : vector<32x32xf32>
    %368 = tpu.matmul %365, %367, %cst_224 {dimension_numbers = #tpu.dot_dimension_numbers<[1], [0], [0], [1], [0, 0, 1, 1], [], []>} : vector<32x16xf32>, vector<16x32xf32>, vector<32x32xf32> -> vector<32x32xf32>
    %369 = arith.addf %326, %368 : vector<32x32xf32>
    %c1_225 = arith.constant 1 : index
    %c8_226 = arith.constant 8 : index
    %c0_227 = arith.constant 0 : index
    %370 = vector.load %arg7[%c1_225, %c8_226, %c0_227] : memref<2x13x64xf32, #tpu.memory_space<vmem>>, vector<1x1x16xf32>
    %371 = vector.shape_cast %370 : vector<1x1x16xf32> to vector<16xf32>
    %c1_228 = arith.constant 1 : index
    %c10_229 = arith.constant 10 : index
    %c0_230 = arith.constant 0 : index
    %372 = vector.load %arg7[%c1_228, %c10_229, %c0_230] : memref<2x13x64xf32, #tpu.memory_space<vmem>>, vector<1x1x16xf32>
    %373 = vector.shape_cast %372 : vector<1x1x16xf32> to vector<16xf32>
    %c1_231 = arith.constant 1 : index
    %c12_232 = arith.constant 12 : index
    %c0_233 = arith.constant 0 : index
    %374 = vector.load %arg7[%c1_231, %c12_232, %c0_233] : memref<2x13x64xf32, #tpu.memory_space<vmem>>, vector<1x1x16xf32>
    %375 = vector.shape_cast %374 : vector<1x1x16xf32> to vector<16xf32>
    %c1_234 = arith.constant 1 : index
    %c1_235 = arith.constant 1 : index
    %c0_236 = arith.constant 0 : index
    %c0_237 = arith.constant 0 : index
    %376 = vector.load %arg3[%c1_234, %c1_235, %c0_236, %c0_237] : memref<2x6x32x16xf32, #tpu.memory_space<vmem>>, vector<1x1x32x16xf32>
    %377 = vector.shape_cast %376 : vector<1x1x32x16xf32> to vector<32x16xf32>
    %cst_238 = arith.constant dense<0.000000e+00> : vector<32x16xf32>
    %378 = tpu.matmul %323, %377, %cst_238 {dimension_numbers = #tpu.dot_dimension_numbers<[1], [0], [0], [1], [0, 0, 1, 1], [], []>} : vector<32x32xf32>, vector<32x16xf32>, vector<32x16xf32> -> vector<32x16xf32>
    %379 = vector.shape_cast %371 : vector<16xf32> to vector<1x16xf32>
    %380 = vector.broadcast %379 : vector<1x16xf32> to vector<32x16xf32>
    %381 = arith.addf %378, %380 : vector<32x16xf32>
    %c1_239 = arith.constant 1 : index
    %c3_240 = arith.constant 3 : index
    %c0_241 = arith.constant 0 : index
    %c0_242 = arith.constant 0 : index
    %382 = vector.load %arg3[%c1_239, %c3_240, %c0_241, %c0_242] : memref<2x6x32x16xf32, #tpu.memory_space<vmem>>, vector<1x1x32x16xf32>
    %383 = vector.shape_cast %382 : vector<1x1x32x16xf32> to vector<32x16xf32>
    %cst_243 = arith.constant dense<0.000000e+00> : vector<32x16xf32>
    %384 = tpu.matmul %323, %383, %cst_243 {dimension_numbers = #tpu.dot_dimension_numbers<[1], [0], [0], [1], [0, 0, 1, 1], [], []>} : vector<32x32xf32>, vector<32x16xf32>, vector<32x16xf32> -> vector<32x16xf32>
    %385 = vector.shape_cast %373 : vector<16xf32> to vector<1x16xf32>
    %386 = vector.broadcast %385 : vector<1x16xf32> to vector<32x16xf32>
    %387 = arith.addf %384, %386 : vector<32x16xf32>
    %c1_244 = arith.constant 1 : index
    %c5_245 = arith.constant 5 : index
    %c0_246 = arith.constant 0 : index
    %c0_247 = arith.constant 0 : index
    %388 = vector.load %arg3[%c1_244, %c5_245, %c0_246, %c0_247] : memref<2x6x32x16xf32, #tpu.memory_space<vmem>>, vector<1x1x32x16xf32>
    %389 = vector.shape_cast %388 : vector<1x1x32x16xf32> to vector<32x16xf32>
    %cst_248 = arith.constant dense<0.000000e+00> : vector<32x16xf32>
    %390 = tpu.matmul %323, %389, %cst_248 {dimension_numbers = #tpu.dot_dimension_numbers<[1], [0], [0], [1], [0, 0, 1, 1], [], []>} : vector<32x32xf32>, vector<32x16xf32>, vector<32x16xf32> -> vector<32x16xf32>
    %391 = vector.shape_cast %375 : vector<16xf32> to vector<1x16xf32>
    %392 = vector.broadcast %391 : vector<1x16xf32> to vector<32x16xf32>
    %393 = arith.addf %390, %392 : vector<32x16xf32>
    %cst_249 = arith.constant dense<0.000000e+00> : vector<32x32xf32>
    %394 = tpu.matmul %381, %387, %cst_249 {dimension_numbers = #tpu.dot_dimension_numbers<[1], [1], [0], [0], [0, 0, 1, 0], [], []>} : vector<32x16xf32>, vector<32x16xf32>, vector<32x32xf32> -> vector<32x32xf32>
    %cst_250 = arith.constant 2.500000e-01 : f32
    %395 = vector.broadcast %cst_250 : f32 to vector<32x32xf32>
    %396 = arith.mulf %394, %395 : vector<32x32xf32>
    %397 = arith.addf %396, %1 : vector<32x32xf32>
    %cst_251 = arith.constant dense<0xFF800000> : vector<32xf32>
    %398 = vector.multi_reduction <maximumf>, %397, %cst_251 [1] : vector<32x32xf32> to vector<32xf32>
    %399 = vector.shape_cast %398 : vector<32xf32> to vector<32x1xf32>
    %400 = vector.broadcast %399 : vector<32x1xf32> to vector<32x32xf32>
    %401 = arith.subf %397, %400 : vector<32x32xf32>
    %402 = math.exp %401 : vector<32x32xf32>
    %cst_252 = arith.constant dense<0.000000e+00> : vector<32xf32>
    %403 = vector.multi_reduction <add>, %402, %cst_252 [1] : vector<32x32xf32> to vector<32xf32>
    %404 = vector.shape_cast %403 : vector<32xf32> to vector<32x1xf32>
    %405 = tpu.reciprocal %404 {approx = true} : vector<32x1xf32> -> vector<32x1xf32>
    %406 = vector.broadcast %405 : vector<32x1xf32> to vector<32x32xf32>
    %407 = arith.mulf %402, %406 : vector<32x32xf32>
    %cst_253 = arith.constant dense<0.000000e+00> : vector<32x16xf32>
    %408 = tpu.matmul %407, %393, %cst_253 {dimension_numbers = #tpu.dot_dimension_numbers<[1], [0], [0], [1], [0, 0, 1, 1], [], []>} : vector<32x32xf32>, vector<32x16xf32>, vector<32x16xf32> -> vector<32x16xf32>
    %c1_254 = arith.constant 1 : index
    %c1_255 = arith.constant 1 : index
    %c0_256 = arith.constant 0 : index
    %c0_257 = arith.constant 0 : index
    %409 = vector.load %arg4[%c1_254, %c1_255, %c0_256, %c0_257] : memref<2x2x16x32xf32, #tpu.memory_space<vmem>>, vector<1x1x16x32xf32>
    %410 = vector.shape_cast %409 : vector<1x1x16x32xf32> to vector<16x32xf32>
    %cst_258 = arith.constant dense<0.000000e+00> : vector<32x32xf32>
    %411 = tpu.matmul %408, %410, %cst_258 {dimension_numbers = #tpu.dot_dimension_numbers<[1], [0], [0], [1], [0, 0, 1, 1], [], []>} : vector<32x16xf32>, vector<16x32xf32>, vector<32x32xf32> -> vector<32x32xf32>
    %412 = arith.addf %369, %411 : vector<32x32xf32>
    %cst_259 = arith.constant dense<0.000000e+00> : vector<32xf32>
    %413 = vector.multi_reduction <add>, %412, %cst_259 [1] : vector<32x32xf32> to vector<32xf32>
    %414 = vector.shape_cast %413 : vector<32xf32> to vector<32x1xf32>
    %cst_260 = arith.constant 3.200000e+01 : f32
    %415 = vector.broadcast %cst_260 : f32 to vector<32x1xf32>
    %416 = arith.divf %414, %415 : vector<32x1xf32>
    %417 = vector.broadcast %416 : vector<32x1xf32> to vector<32x32xf32>
    %418 = arith.subf %412, %417 : vector<32x32xf32>
    %419 = arith.mulf %418, %418 : vector<32x32xf32>
    %cst_261 = arith.constant dense<0.000000e+00> : vector<32xf32>
    %420 = vector.multi_reduction <add>, %419, %cst_261 [1] : vector<32x32xf32> to vector<32xf32>
    %421 = vector.shape_cast %420 : vector<32xf32> to vector<32x1xf32>
    %cst_262 = arith.constant 3.200000e+01 : f32
    %422 = vector.broadcast %cst_262 : f32 to vector<32x1xf32>
    %423 = arith.divf %421, %422 : vector<32x1xf32>
    %424 = vector.broadcast %416 : vector<32x1xf32> to vector<32x32xf32>
    %425 = arith.subf %412, %424 : vector<32x32xf32>
    %cst_263 = arith.constant 9.99999974E-6 : f32
    %426 = vector.broadcast %cst_263 : f32 to vector<32x1xf32>
    %427 = arith.addf %423, %426 : vector<32x1xf32>
    %428 = math.rsqrt %427 : vector<32x1xf32>
    %429 = vector.broadcast %428 : vector<32x1xf32> to vector<32x32xf32>
    %430 = arith.mulf %425, %429 : vector<32x32xf32>
    %431 = vector.shape_cast %291 : vector<32xf32> to vector<1x32xf32>
    %432 = vector.broadcast %431 : vector<1x32xf32> to vector<32x32xf32>
    %433 = arith.mulf %430, %432 : vector<32x32xf32>
    %434 = vector.shape_cast %293 : vector<32xf32> to vector<1x32xf32>
    %435 = vector.broadcast %434 : vector<1x32xf32> to vector<32x32xf32>
    %436 = arith.addf %433, %435 : vector<32x32xf32>
    %437 = vector.broadcast %2 : vector<32x1xf32> to vector<32x32xf32>
    %438 = arith.mulf %436, %437 : vector<32x32xf32>
    %c1_264 = arith.constant 1 : index
    %c4_265 = arith.constant 4 : index
    %c0_266 = arith.constant 0 : index
    %c0_267 = arith.constant 0 : index
    %439 = vector.load %arg5[%c1_264, %c4_265, %c0_266, %c0_267] : memref<2x9x32x64xf32, #tpu.memory_space<vmem>>, vector<1x1x32x64xf32>
    %440 = vector.shape_cast %439 : vector<1x1x32x64xf32> to vector<32x64xf32>
    %cst_268 = arith.constant dense<0.000000e+00> : vector<32x64xf32>
    %441 = tpu.matmul %438, %440, %cst_268 {dimension_numbers = #tpu.dot_dimension_numbers<[1], [0], [0], [1], [0, 0, 1, 1], [], []>} : vector<32x32xf32>, vector<32x64xf32>, vector<32x64xf32> -> vector<32x64xf32>
    %442 = vector.shape_cast %299 : vector<64xf32> to vector<1x64xf32>
    %443 = vector.broadcast %442 : vector<1x64xf32> to vector<32x64xf32>
    %444 = arith.addf %441, %443 : vector<32x64xf32>
    %c4_i32_269 = arith.constant 4 : i32
    %445 = tpu.dynamic_rotate %438 by %c4_i32_269 dim 0 : vector<32x32xf32>, i32 -> vector<32x32xf32>
    %c4_i32_270 = arith.constant 4 : i32
    %446 = vector.broadcast %c4_i32_270 : i32 to vector<32x1xi32>
    %447 = arith.cmpi sge, %19, %446 : vector<32x1xi32>
    %cst_271 = arith.constant 1.000000e+00 : f32
    %cst_272 = arith.constant 0.000000e+00 : f32
    %448 = vector.broadcast %cst_271 : f32 to vector<32x1xf32>
    %449 = vector.broadcast %cst_272 : f32 to vector<32x1xf32>
    %450 = arith.select %447, %448, %449 : vector<32x1xi1>, vector<32x1xf32>
    %451 = vector.broadcast %450 : vector<32x1xf32> to vector<32x32xf32>
    %452 = arith.mulf %445, %451 : vector<32x32xf32>
    %c1_273 = arith.constant 1 : index
    %c0_274 = arith.constant 0 : index
    %c0_275 = arith.constant 0 : index
    %c0_276 = arith.constant 0 : index
    %453 = vector.load %arg5[%c1_273, %c0_274, %c0_275, %c0_276] : memref<2x9x32x64xf32, #tpu.memory_space<vmem>>, vector<1x1x32x64xf32>
    %454 = vector.shape_cast %453 : vector<1x1x32x64xf32> to vector<32x64xf32>
    %cst_277 = arith.constant dense<0.000000e+00> : vector<32x64xf32>
    %455 = tpu.matmul %452, %454, %cst_277 {dimension_numbers = #tpu.dot_dimension_numbers<[1], [0], [0], [1], [0, 0, 1, 1], [], []>} : vector<32x32xf32>, vector<32x64xf32>, vector<32x64xf32> -> vector<32x64xf32>
    %456 = arith.addf %444, %455 : vector<32x64xf32>
    %c3_i32_278 = arith.constant 3 : i32
    %457 = tpu.dynamic_rotate %438 by %c3_i32_278 dim 0 : vector<32x32xf32>, i32 -> vector<32x32xf32>
    %c3_i32_279 = arith.constant 3 : i32
    %458 = vector.broadcast %c3_i32_279 : i32 to vector<32x1xi32>
    %459 = arith.cmpi sge, %19, %458 : vector<32x1xi32>
    %cst_280 = arith.constant 1.000000e+00 : f32
    %cst_281 = arith.constant 0.000000e+00 : f32
    %460 = vector.broadcast %cst_280 : f32 to vector<32x1xf32>
    %461 = vector.broadcast %cst_281 : f32 to vector<32x1xf32>
    %462 = arith.select %459, %460, %461 : vector<32x1xi1>, vector<32x1xf32>
    %463 = vector.broadcast %462 : vector<32x1xf32> to vector<32x32xf32>
    %464 = arith.mulf %457, %463 : vector<32x32xf32>
    %c1_282 = arith.constant 1 : index
    %c1_283 = arith.constant 1 : index
    %c0_284 = arith.constant 0 : index
    %c0_285 = arith.constant 0 : index
    %465 = vector.load %arg5[%c1_282, %c1_283, %c0_284, %c0_285] : memref<2x9x32x64xf32, #tpu.memory_space<vmem>>, vector<1x1x32x64xf32>
    %466 = vector.shape_cast %465 : vector<1x1x32x64xf32> to vector<32x64xf32>
    %cst_286 = arith.constant dense<0.000000e+00> : vector<32x64xf32>
    %467 = tpu.matmul %464, %466, %cst_286 {dimension_numbers = #tpu.dot_dimension_numbers<[1], [0], [0], [1], [0, 0, 1, 1], [], []>} : vector<32x32xf32>, vector<32x64xf32>, vector<32x64xf32> -> vector<32x64xf32>
    %468 = arith.addf %456, %467 : vector<32x64xf32>
    %c2_i32_287 = arith.constant 2 : i32
    %469 = tpu.dynamic_rotate %438 by %c2_i32_287 dim 0 : vector<32x32xf32>, i32 -> vector<32x32xf32>
    %c2_i32_288 = arith.constant 2 : i32
    %470 = vector.broadcast %c2_i32_288 : i32 to vector<32x1xi32>
    %471 = arith.cmpi sge, %19, %470 : vector<32x1xi32>
    %cst_289 = arith.constant 1.000000e+00 : f32
    %cst_290 = arith.constant 0.000000e+00 : f32
    %472 = vector.broadcast %cst_289 : f32 to vector<32x1xf32>
    %473 = vector.broadcast %cst_290 : f32 to vector<32x1xf32>
    %474 = arith.select %471, %472, %473 : vector<32x1xi1>, vector<32x1xf32>
    %475 = vector.broadcast %474 : vector<32x1xf32> to vector<32x32xf32>
    %476 = arith.mulf %469, %475 : vector<32x32xf32>
    %c1_291 = arith.constant 1 : index
    %c2_292 = arith.constant 2 : index
    %c0_293 = arith.constant 0 : index
    %c0_294 = arith.constant 0 : index
    %477 = vector.load %arg5[%c1_291, %c2_292, %c0_293, %c0_294] : memref<2x9x32x64xf32, #tpu.memory_space<vmem>>, vector<1x1x32x64xf32>
    %478 = vector.shape_cast %477 : vector<1x1x32x64xf32> to vector<32x64xf32>
    %cst_295 = arith.constant dense<0.000000e+00> : vector<32x64xf32>
    %479 = tpu.matmul %476, %478, %cst_295 {dimension_numbers = #tpu.dot_dimension_numbers<[1], [0], [0], [1], [0, 0, 1, 1], [], []>} : vector<32x32xf32>, vector<32x64xf32>, vector<32x64xf32> -> vector<32x64xf32>
    %480 = arith.addf %468, %479 : vector<32x64xf32>
    %c1_i32_296 = arith.constant 1 : i32
    %481 = tpu.dynamic_rotate %438 by %c1_i32_296 dim 0 : vector<32x32xf32>, i32 -> vector<32x32xf32>
    %c1_i32_297 = arith.constant 1 : i32
    %482 = vector.broadcast %c1_i32_297 : i32 to vector<32x1xi32>
    %483 = arith.cmpi sge, %19, %482 : vector<32x1xi32>
    %cst_298 = arith.constant 1.000000e+00 : f32
    %cst_299 = arith.constant 0.000000e+00 : f32
    %484 = vector.broadcast %cst_298 : f32 to vector<32x1xf32>
    %485 = vector.broadcast %cst_299 : f32 to vector<32x1xf32>
    %486 = arith.select %483, %484, %485 : vector<32x1xi1>, vector<32x1xf32>
    %487 = vector.broadcast %486 : vector<32x1xf32> to vector<32x32xf32>
    %488 = arith.mulf %481, %487 : vector<32x32xf32>
    %c1_300 = arith.constant 1 : index
    %c3_301 = arith.constant 3 : index
    %c0_302 = arith.constant 0 : index
    %c0_303 = arith.constant 0 : index
    %489 = vector.load %arg5[%c1_300, %c3_301, %c0_302, %c0_303] : memref<2x9x32x64xf32, #tpu.memory_space<vmem>>, vector<1x1x32x64xf32>
    %490 = vector.shape_cast %489 : vector<1x1x32x64xf32> to vector<32x64xf32>
    %cst_304 = arith.constant dense<0.000000e+00> : vector<32x64xf32>
    %491 = tpu.matmul %488, %490, %cst_304 {dimension_numbers = #tpu.dot_dimension_numbers<[1], [0], [0], [1], [0, 0, 1, 1], [], []>} : vector<32x32xf32>, vector<32x64xf32>, vector<32x64xf32> -> vector<32x64xf32>
    %492 = arith.addf %480, %491 : vector<32x64xf32>
    %c31_i32_305 = arith.constant 31 : i32
    %493 = tpu.dynamic_rotate %438 by %c31_i32_305 dim 0 : vector<32x32xf32>, i32 -> vector<32x32xf32>
    %c15_i32_306 = arith.constant 15 : i32
    %494 = vector.broadcast %c15_i32_306 : i32 to vector<32x1xi32>
    %495 = arith.cmpi slt, %19, %494 : vector<32x1xi32>
    %cst_307 = arith.constant 1.000000e+00 : f32
    %cst_308 = arith.constant 0.000000e+00 : f32
    %496 = vector.broadcast %cst_307 : f32 to vector<32x1xf32>
    %497 = vector.broadcast %cst_308 : f32 to vector<32x1xf32>
    %498 = arith.select %495, %496, %497 : vector<32x1xi1>, vector<32x1xf32>
    %499 = vector.broadcast %498 : vector<32x1xf32> to vector<32x32xf32>
    %500 = arith.mulf %493, %499 : vector<32x32xf32>
    %c1_309 = arith.constant 1 : index
    %c5_310 = arith.constant 5 : index
    %c0_311 = arith.constant 0 : index
    %c0_312 = arith.constant 0 : index
    %501 = vector.load %arg5[%c1_309, %c5_310, %c0_311, %c0_312] : memref<2x9x32x64xf32, #tpu.memory_space<vmem>>, vector<1x1x32x64xf32>
    %502 = vector.shape_cast %501 : vector<1x1x32x64xf32> to vector<32x64xf32>
    %cst_313 = arith.constant dense<0.000000e+00> : vector<32x64xf32>
    %503 = tpu.matmul %500, %502, %cst_313 {dimension_numbers = #tpu.dot_dimension_numbers<[1], [0], [0], [1], [0, 0, 1, 1], [], []>} : vector<32x32xf32>, vector<32x64xf32>, vector<32x64xf32> -> vector<32x64xf32>
    %504 = arith.addf %492, %503 : vector<32x64xf32>
    %c30_i32_314 = arith.constant 30 : i32
    %505 = tpu.dynamic_rotate %438 by %c30_i32_314 dim 0 : vector<32x32xf32>, i32 -> vector<32x32xf32>
    %c14_i32_315 = arith.constant 14 : i32
    %506 = vector.broadcast %c14_i32_315 : i32 to vector<32x1xi32>
    %507 = arith.cmpi slt, %19, %506 : vector<32x1xi32>
    %cst_316 = arith.constant 1.000000e+00 : f32
    %cst_317 = arith.constant 0.000000e+00 : f32
    %508 = vector.broadcast %cst_316 : f32 to vector<32x1xf32>
    %509 = vector.broadcast %cst_317 : f32 to vector<32x1xf32>
    %510 = arith.select %507, %508, %509 : vector<32x1xi1>, vector<32x1xf32>
    %511 = vector.broadcast %510 : vector<32x1xf32> to vector<32x32xf32>
    %512 = arith.mulf %505, %511 : vector<32x32xf32>
    %c1_318 = arith.constant 1 : index
    %c6_319 = arith.constant 6 : index
    %c0_320 = arith.constant 0 : index
    %c0_321 = arith.constant 0 : index
    %513 = vector.load %arg5[%c1_318, %c6_319, %c0_320, %c0_321] : memref<2x9x32x64xf32, #tpu.memory_space<vmem>>, vector<1x1x32x64xf32>
    %514 = vector.shape_cast %513 : vector<1x1x32x64xf32> to vector<32x64xf32>
    %cst_322 = arith.constant dense<0.000000e+00> : vector<32x64xf32>
    %515 = tpu.matmul %512, %514, %cst_322 {dimension_numbers = #tpu.dot_dimension_numbers<[1], [0], [0], [1], [0, 0, 1, 1], [], []>} : vector<32x32xf32>, vector<32x64xf32>, vector<32x64xf32> -> vector<32x64xf32>
    %516 = arith.addf %504, %515 : vector<32x64xf32>
    %c29_i32_323 = arith.constant 29 : i32
    %517 = tpu.dynamic_rotate %438 by %c29_i32_323 dim 0 : vector<32x32xf32>, i32 -> vector<32x32xf32>
    %c13_i32_324 = arith.constant 13 : i32
    %518 = vector.broadcast %c13_i32_324 : i32 to vector<32x1xi32>
    %519 = arith.cmpi slt, %19, %518 : vector<32x1xi32>
    %cst_325 = arith.constant 1.000000e+00 : f32
    %cst_326 = arith.constant 0.000000e+00 : f32
    %520 = vector.broadcast %cst_325 : f32 to vector<32x1xf32>
    %521 = vector.broadcast %cst_326 : f32 to vector<32x1xf32>
    %522 = arith.select %519, %520, %521 : vector<32x1xi1>, vector<32x1xf32>
    %523 = vector.broadcast %522 : vector<32x1xf32> to vector<32x32xf32>
    %524 = arith.mulf %517, %523 : vector<32x32xf32>
    %c1_327 = arith.constant 1 : index
    %c7_328 = arith.constant 7 : index
    %c0_329 = arith.constant 0 : index
    %c0_330 = arith.constant 0 : index
    %525 = vector.load %arg5[%c1_327, %c7_328, %c0_329, %c0_330] : memref<2x9x32x64xf32, #tpu.memory_space<vmem>>, vector<1x1x32x64xf32>
    %526 = vector.shape_cast %525 : vector<1x1x32x64xf32> to vector<32x64xf32>
    %cst_331 = arith.constant dense<0.000000e+00> : vector<32x64xf32>
    %527 = tpu.matmul %524, %526, %cst_331 {dimension_numbers = #tpu.dot_dimension_numbers<[1], [0], [0], [1], [0, 0, 1, 1], [], []>} : vector<32x32xf32>, vector<32x64xf32>, vector<32x64xf32> -> vector<32x64xf32>
    %528 = arith.addf %516, %527 : vector<32x64xf32>
    %c28_i32_332 = arith.constant 28 : i32
    %529 = tpu.dynamic_rotate %438 by %c28_i32_332 dim 0 : vector<32x32xf32>, i32 -> vector<32x32xf32>
    %c12_i32_333 = arith.constant 12 : i32
    %530 = vector.broadcast %c12_i32_333 : i32 to vector<32x1xi32>
    %531 = arith.cmpi slt, %19, %530 : vector<32x1xi32>
    %cst_334 = arith.constant 1.000000e+00 : f32
    %cst_335 = arith.constant 0.000000e+00 : f32
    %532 = vector.broadcast %cst_334 : f32 to vector<32x1xf32>
    %533 = vector.broadcast %cst_335 : f32 to vector<32x1xf32>
    %534 = arith.select %531, %532, %533 : vector<32x1xi1>, vector<32x1xf32>
    %535 = vector.broadcast %534 : vector<32x1xf32> to vector<32x32xf32>
    %536 = arith.mulf %529, %535 : vector<32x32xf32>
    %c1_336 = arith.constant 1 : index
    %c8_337 = arith.constant 8 : index
    %c0_338 = arith.constant 0 : index
    %c0_339 = arith.constant 0 : index
    %537 = vector.load %arg5[%c1_336, %c8_337, %c0_338, %c0_339] : memref<2x9x32x64xf32, #tpu.memory_space<vmem>>, vector<1x1x32x64xf32>
    %538 = vector.shape_cast %537 : vector<1x1x32x64xf32> to vector<32x64xf32>
    %cst_340 = arith.constant dense<0.000000e+00> : vector<32x64xf32>
    %539 = tpu.matmul %536, %538, %cst_340 {dimension_numbers = #tpu.dot_dimension_numbers<[1], [0], [0], [1], [0, 0, 1, 1], [], []>} : vector<32x32xf32>, vector<32x64xf32>, vector<32x64xf32> -> vector<32x64xf32>
    %540 = arith.addf %528, %539 : vector<32x64xf32>
    %cst_341 = arith.constant 0.000000e+00 : f32
    %541 = vector.broadcast %cst_341 : f32 to vector<32x64xf32>
    %542 = arith.maximumf %540, %541 : vector<32x64xf32>
    %c1_342 = arith.constant 1 : index
    %c0_343 = arith.constant 0 : index
    %c0_344 = arith.constant 0 : index
    %543 = vector.load %arg6[%c1_342, %c0_343, %c0_344] : memref<2x64x32xf32, #tpu.memory_space<vmem>>, vector<1x64x32xf32>
    %544 = vector.shape_cast %543 : vector<1x64x32xf32> to vector<64x32xf32>
    %cst_345 = arith.constant dense<0.000000e+00> : vector<32x32xf32>
    %545 = tpu.matmul %542, %544, %cst_345 {dimension_numbers = #tpu.dot_dimension_numbers<[1], [0], [0], [1], [0, 0, 1, 1], [], []>} : vector<32x64xf32>, vector<64x32xf32>, vector<32x32xf32> -> vector<32x32xf32>
    %546 = vector.shape_cast %297 : vector<32xf32> to vector<1x32xf32>
    %547 = vector.broadcast %546 : vector<1x32xf32> to vector<32x32xf32>
    %548 = arith.addf %545, %547 : vector<32x32xf32>
    %549 = arith.addf %548, %438 : vector<32x32xf32>
    %550 = vector.broadcast %2 : vector<32x1xf32> to vector<32x32xf32>
    %551 = arith.mulf %549, %550 : vector<32x32xf32>
    %c0_346 = arith.constant 0 : index
    %c0_347 = arith.constant 0 : index
    %552 = vector.load %arg8[%c0_346, %c0_347] : memref<32x32xf32, #tpu.memory_space<vmem>>, vector<32x32xf32>
    tpu.vector_store %arg8[%c0_346, %c0_347], %551 {strides = array<i32>} : memref<32x32xf32, #tpu.memory_space<vmem>>, vector<32x32xf32>,
    return
  }
}

</mosaic_0001>

<llo_original>
// kernel: tpu_custom_call.1
$region0: #{tpu_custom_call.1}
  #allocation0 [shape = 'u32[]', space=smem, size = 0x4, offset = 0x4, fixed_abs, tag = 'smem constant byte address 0x4 - core index']
  #allocation1 [shape = 'u32[72,128]{1,0:T(1,128)}', space=vmem, size = 0x9000, scoped, tag = 'internal scratch']
  %s0 = inlined_call_operand.hbm [shape: f32[32,32], index: 0, kind: input, shape index: {}]
  %s1 = inlined_call_operand.hbm [shape: f32[32,32], index: 1, kind: input, shape index: {}]
  %s2 = inlined_call_operand.vmem [shape: f32[32,1], index: 2, kind: input, shape index: {}]
  %s3 = inlined_call_operand.vmem [shape: f32[2,6,32,16], index: 3, kind: input, shape index: {}]
  %s4 = inlined_call_operand.hbm [shape: f32[2,2,16,32], index: 4, kind: input, shape index: {}]
  %s5 = inlined_call_operand.vmem [shape: f32[2,9,32,64], index: 5, kind: input, shape index: {}]
  %s6 = inlined_call_operand.vmem [shape: f32[2,64,32], index: 6, kind: input, shape index: {}]
  %s7 = inlined_call_operand.vmem [shape: f32[2,13,64], index: 7, kind: input, shape index: {}]
  %s8 = inlined_call_operand.hbm [shape: f32[32,32], index: 8, kind: output, shape index: {}]
  %s9 = sld [smem:[#allocation0]]
  $region54: #{tpu_custom_call.1} parent=0
    _
  %s11 = ssub.s32 1, %s9
  %s12 = scalar_select 0, %s11, %s9
  $region1: #{tpu_custom_call.1} parent=0
    #allocation2 [shape = 'u8[16384]{0}', space=vmem, size = 0x4000, scoped, tag = 'input window, operand 0, single buffered']
    #allocation3 [shape = 's32[1]{0}', space=sflag, size = 0x4, scoped, tag = 'scoped memory for tpu_custom_call.1']
    #allocation4 [shape = 's32[1]{0}', space=sflag, size = 0x4, scoped, tag = 'scoped memory for tpu_custom_call.1']
    #allocation5 [shape = 'u8[16384]{0}', space=vmem, size = 0x4000, scoped, tag = 'input window, operand 1, single buffered']
    #allocation6 [shape = 's32[1]{0}', space=sflag, size = 0x4, scoped, tag = 'scoped memory for tpu_custom_call.1']
    #allocation7 [shape = 'u8[32768]{0}', space=vmem, size = 0x8000, scoped, tag = 'input window, operand 4, single buffered']
    #allocation8 [shape = 'u8[16384]{0}', space=vmem, size = 0x4000, scoped, tag = 'output window, operand 0, single buffered']
    %13 = vsyncpa [#allocation3], 0
    %14 = vsyncpa [#allocation6], 0
    %15 = vsyncpa [#allocation4], 0
    // Predicated region
    $region2: #{tpu_custom_call.1} parent=1 // pred_check
      _
    $region3: #{tpu_custom_call.1} parent=1 // pred_check_branch
      %17 = sbr.rel (0) target = $region5
    $region4: #{tpu_custom_call.1} parent=1 // pred_region
      %19 = vsyncadd [#allocation3], 0
      %s20 = sshll.u32 %s0, 4
      %s21 = int_to_ptr.hbm [resolvable:$true] %s20
      %s22 = sshll.u32 [#allocation2], 4
      %s23 = int_to_ptr.vmem [resolvable:$true] %s22
      %28 = dma.hbm_to_vmem [thread:$0]  %s21, 512, %s23, [#allocation3], 128, 128, 8
    $region5: #{tpu_custom_call.1} parent=1 // pred_fallthru
      _
    // Predicated region
    $region6: #{tpu_custom_call.1} parent=1 // pred_check
      _
    $region7: #{tpu_custom_call.1} parent=1 // pred_check_branch
      %30 = sbr.rel (0) target = $region9
    $region8: #{tpu_custom_call.1} parent=1 // pred_region
      %32 = vsyncadd [#allocation6], 0
      %s33 = sshll.u32 %s1, 4
      %s34 = int_to_ptr.hbm [resolvable:$true] %s33
      %s35 = sshll.u32 [#allocation5], 4
      %s36 = int_to_ptr.vmem [resolvable:$true] %s35
      %41 = dma.hbm_to_vmem [thread:$0]  %s34, 512, %s36, [#allocation6], 128, 128, 8
    $region9: #{tpu_custom_call.1} parent=1 // pred_fallthru
      _
    // Predicated region
    $region10: #{tpu_custom_call.1} parent=1 // pred_check
      _
    $region11: #{tpu_custom_call.1} parent=1 // pred_check_branch
      %43 = sbr.rel (0) target = $region13
    $region12: #{tpu_custom_call.1} parent=1 // pred_region
      _
    $region13: #{tpu_custom_call.1} parent=1 // pred_fallthru
      _
    // Predicated region
    $region14: #{tpu_custom_call.1} parent=1 // pred_check
      _
    $region15: #{tpu_custom_call.1} parent=1 // pred_check_branch
      %45 = sbr.rel (0) target = $region17
    $region16: #{tpu_custom_call.1} parent=1 // pred_region
      _
    $region17: #{tpu_custom_call.1} parent=1 // pred_fallthru
      _
    // Predicated region
    $region18: #{tpu_custom_call.1} parent=1 // pred_check
      _
    $region19: #{tpu_custom_call.1} parent=1 // pred_check_branch
      %47 = sbr.rel (0) target = $region21
    $region20: #{tpu_custom_call.1} parent=1 // pred_region
      %49 = vsyncadd [#allocation6], 0
      %s50 = sshll.u32 %s4, 4
      %s51 = int_to_ptr.hbm [resolvable:$true] %s50
      %s52 = sshll.u32 [#allocation7], 4
      %s53 = int_to_ptr.vmem [resolvable:$true] %s52
      %58 = dma.hbm_to_vmem [thread:$0]  %s51, 1024, %s53, [#allocation6], 128, 128, 8
    $region21: #{tpu_custom_call.1} parent=1 // pred_fallthru
      _
    // Predicated region
    $region22: #{tpu_custom_call.1} parent=1 // pred_check
      _
    $region23: #{tpu_custom_call.1} parent=1 // pred_check_branch
      %60 = sbr.rel (0) target = $region25
    $region24: #{tpu_custom_call.1} parent=1 // pred_region
      _
    $region25: #{tpu_custom_call.1} parent=1 // pred_fallthru
      _
    // Predicated region
    $region26: #{tpu_custom_call.1} parent=1 // pred_check
      _
    $region27: #{tpu_custom_call.1} parent=1 // pred_check_branch
      %62 = sbr.rel (0) target = $region29
    $region28: #{tpu_custom_call.1} parent=1 // pred_region
      _
    $region29: #{tpu_custom_call.1} parent=1 // pred_fallthru
      _
    // Predicated region
    $region30: #{tpu_custom_call.1} parent=1 // pred_check
      _
    $region31: #{tpu_custom_call.1} parent=1 // pred_check_branch
      %64 = sbr.rel (0) target = $region33
    $region32: #{tpu_custom_call.1} parent=1 // pred_region
      _
    $region33: #{tpu_custom_call.1} parent=1 // pred_fallthru
      _
    // Predicated region
    $region34: #{tpu_custom_call.1} parent=1 // pred_check
      _
    $region35: #{tpu_custom_call.1} parent=1 // pred_check_branch
      %66 = sbr.rel (0) target = $region37
    $region36: #{tpu_custom_call.1} parent=1 // pred_region
      %68 = dma.done [#allocation3], 512
    $region37: #{tpu_custom_call.1} parent=1 // pred_fallthru
      _
    // Predicated region
    $region38: #{tpu_custom_call.1} parent=1 // pred_check
      _
    $region39: #{tpu_custom_call.1} parent=1 // pred_check_branch
      %70 = sbr.rel (0) target = $region41
    $region40: #{tpu_custom_call.1} parent=1 // pred_region
      %72 = dma.done [#allocation6], 512
    $region41: #{tpu_custom_call.1} parent=1 // pred_fallthru
      _
    // Predicated region
    $region42: #{tpu_custom_call.1} parent=1 // pred_check
      _
    $region43: #{tpu_custom_call.1} parent=1 // pred_check_branch
      %74 = sbr.rel (0) target = $region45
    $region44: #{tpu_custom_call.1} parent=1 // pred_region
      %76 = dma.done [#allocation6], 1024
    $region45: #{tpu_custom_call.1} parent=1 // pred_fallthru
      _
    %v77 = vld [vmem:[#allocation2] sm:$0xff]
    %v78 = vld [vmem:[#allocation2 + $0x8] sm:$0xff]
    %v79 = vld [vmem:[#allocation2 + $0x10] sm:$0xff]
    %v80 = vld [vmem:[#allocation2 + $0x18] sm:$0xff]
    %v81 = vld [vmem:[#allocation5] sm:$0xff]
    %v82 = vld [vmem:[#allocation5 + $0x8] sm:$0xff]
    %v83 = vld [vmem:[#allocation5 + $0x10] sm:$0xff]
    %v84 = vld [vmem:[#allocation5 + $0x18] sm:$0xff]
    %v85 = vld [vmem:[%s2] sm:$0xff]
    %v86 = vld [vmem:[%s2 + $0x8] sm:$0xff]
    %v87 = vld [vmem:[%s2 + $0x10] sm:$0xff]
    %v88 = vld [vmem:[%s2 + $0x18] sm:$0xff]
    %v89 = vlaneseq
    %v90 = vshrl.u32 %v89, 7
    %v91 = vadd.s32 %v90, 8
    %v92 = vadd.s32 %v90, 16
    %v93 = vadd.s32 %v90, 24
    %vm94 = vcmp.lt.s32.totalorder %v90, 0
    %v95 = vsub.s32 0, %v90
    %v96 = vsel %vm94, %v95, %v90
    %v97 = vshrl.u32 %v96, 4
    %v98 = vand.u32 %v96, 15
    %v99 = vsub.s32 0, %v98
    %v100 = vsel %vm94, %v99, %v98
    %vm101 = vcmp.lt.s32.totalorder %v91, 0
    %v102 = vsub.s32 0, %v91
    %v103 = vsel %vm101, %v102, %v91
    %v104 = vshrl.u32 %v103, 4
    %v105 = vand.u32 %v103, 15
    %v106 = vsub.s32 0, %v105
    %v107 = vsel %vm101, %v106, %v105
    %vm108 = vcmp.lt.s32.totalorder %v92, 0
    %v109 = vsub.s32 0, %v92
    %v110 = vsel %vm108, %v109, %v92
    %v111 = vshrl.u32 %v110, 4
    %v112 = vand.u32 %v110, 15
    %v113 = vsub.s32 0, %v112
    %v114 = vsel %vm108, %v113, %v112
    %vm115 = vcmp.lt.s32.totalorder %v93, 0
    %v116 = vsub.s32 0, %v93
    %v117 = vsel %vm115, %v116, %v93
    %v118 = vshrl.u32 %v117, 4
    %v119 = vand.u32 %v117, 15
    %v120 = vsub.s32 0, %v119
    %v121 = vsel %vm115, %v120, %v119
    %vm122 = vcmp.ne.s32.totalorder %v100, 0
    %vm123 = vcmp.ne.s32.totalorder %v107, 0
    %vm124 = vcmp.ne.s32.totalorder %v114, 0
    %vm125 = vcmp.ne.s32.totalorder %v121, 0
    %vm126 = vcmp.lt.s32.totalorder %v100, 0
    %vm127 = vcmp.lt.s32.totalorder %v107, 0
    %vm128 = vcmp.lt.s32.totalorder %v114, 0
    %vm129 = vcmp.lt.s32.totalorder %v121, 0
    %vm130 = vmand %vm126, %vm122
    %vm131 = vmand %vm127, %vm123
    %vm132 = vmand %vm128, %vm124
    %vm133 = vmand %vm129, %vm125
    %v134 = vadd.s32 %v100, 16
    %v135 = vadd.s32 %v107, 16
    %v136 = vadd.s32 %v114, 16
    %v137 = vadd.s32 %v121, 16
    %v138 = vsel %vm130, %v134, %v100
    %v139 = vsel %vm131, %v135, %v107
    %v140 = vsel %vm132, %v136, %v114
    %v141 = vsel %vm133, %v137, %v121
    %v142 = vld [vmem:[%s7] sm:$0x1]
    %v143 = vld [vmem:[%s7 + $0x1] sm:$0x1]
    %v144 = vld [vmem:[%s7 + $0x2] sm:$0x1]
    %v145 = vld [vmem:[%s7 + $0x3] sm:$0x1]
    %v146 = vld [vmem:[%s7 + $0x4] sm:$0x1]
    %v147 = vld [vmem:[%s7 + $0x5] sm:$0x1]
    %v148 = vld [vmem:[%s7 + $0x6] sm:$0x1]
    %vm149 = vcmask 261120
    %v150 = vsel %vm149, %v77, 0.0
    %151 = vadd.xlane.f32.xlu0 %v150
    %v152 = vpop.xlane.xlu0 %151
    %v153 = vsel %vm149, %v78, 0.0
    %154 = vadd.xlane.f32.xlu0 %v153
    %v155 = vpop.xlane.xlu0 %154
    %v156 = vsel %vm149, %v79, 0.0
    %157 = vadd.xlane.f32.xlu0 %v156
    %v158 = vpop.xlane.xlu0 %157
    %v159 = vsel %vm149, %v80, 0.0
    %160 = vadd.xlane.f32.xlu0 %v159
    %v161 = vpop.xlane.xlu0 %160
    %v162 = vrcp.pop 32.0
    %v163 = vmul.f32 32.0, %v162
    %v164 = vsub.f32 1.0, %v163
    %v165 = vmul.f32 %v162, %v164
    %v166 = vadd.f32 %v162, %v165
    %vm167 = vweird.f32 %v162
    %v168 = vsel %vm167, %v162, %v166
    %v169 = vmul.f32 %v152, %v168
    %v170 = vmul.f32 %v155, %v168
    %v171 = vmul.f32 %v158, %v168
    %v172 = vmul.f32 %v161, %v168
    %v173 = vsub.f32 %v77, %v169
    %v174 = vsub.f32 %v78, %v170
    %v175 = vsub.f32 %v79, %v171
    %v176 = vsub.f32 %v80, %v172
    %v177 = vmul.f32 %v173, %v173
    %v178 = vmul.f32 %v174, %v174
    %v179 = vmul.f32 %v175, %v175
    %v180 = vmul.f32 %v176, %v176
    %v181 = vsel %vm149, %v177, 0.0
    %182 = vadd.xlane.f32.xlu0 %v181
    %v183 = vpop.xlane.xlu0 %182
    %v184 = vsel %vm149, %v178, 0.0
    %185 = vadd.xlane.f32.xlu0 %v184
    %v186 = vpop.xlane.xlu0 %185
    %v187 = vsel %vm149, %v179, 0.0
    %188 = vadd.xlane.f32.xlu0 %v187
    %v189 = vpop.xlane.xlu0 %188
    %v190 = vsel %vm149, %v180, 0.0
    %191 = vadd.xlane.f32.xlu0 %v190
    %v192 = vpop.xlane.xlu0 %191
    %v193 = vmul.f32 %v183, %v168
    %v194 = vmul.f32 %v186, %v168
    %v195 = vmul.f32 %v189, %v168
    %v196 = vmul.f32 %v192, %v168
    %v197 = vadd.f32 %v193, 1e-05
    %v198 = vadd.f32 %v194, 1e-05
    %v199 = vadd.f32 %v195, 1e-05
    %v200 = vadd.f32 %v196, 1e-05
    %v201 = vrsqrt.pop %v197
    %v202 = vmul.f32 %v201, %v197
    %v203 = vmul.f32 %v202, %v201
    %v204 = vmul.f32 0.5, %v203
    %v205 = vsub.f32 1.5, %v204
    %v206 = vmul.f32 %v201, %v205
    %vm207 = vweird.f32 %v197
    %vm208 = vweird.f32 %v201
    %vm209 = vmor %vm207, %vm208
    %v210 = vsel %vm209, %v201, %v206
    %v211 = vrsqrt.pop %v198
    %v212 = vmul.f32 %v211, %v198
    %v213 = vmul.f32 %v212, %v211
    %v214 = vmul.f32 0.5, %v213
    %v215 = vsub.f32 1.5, %v214
    %v216 = vmul.f32 %v211, %v215
    %vm217 = vweird.f32 %v198
    %vm218 = vweird.f32 %v211
    %vm219 = vmor %vm217, %vm218
    %v220 = vsel %vm219, %v211, %v216
    %v221 = vrsqrt.pop %v199
    %v222 = vmul.f32 %v221, %v199
    %v223 = vmul.f32 %v222, %v221
    %v224 = vmul.f32 0.5, %v223
    %v225 = vsub.f32 1.5, %v224
    %v226 = vmul.f32 %v221, %v225
    %vm227 = vweird.f32 %v199
    %vm228 = vweird.f32 %v221
    %vm229 = vmor %vm227, %vm228
    %v230 = vsel %vm229, %v221, %v226
    %v231 = vrsqrt.pop %v200
    %v232 = vmul.f32 %v231, %v200
    %v233 = vmul.f32 %v232, %v231
    %v234 = vmul.f32 0.5, %v233
    %v235 = vsub.f32 1.5, %v234
    %v236 = vmul.f32 %v231, %v235
    %vm237 = vweird.f32 %v200
    %vm238 = vweird.f32 %v231
    %vm239 = vmor %vm237, %vm238
    %v240 = vsel %vm239, %v231, %v236
    %v241 = vmul.f32 %v173, %v210
    %v242 = vmul.f32 %v174, %v220
    %v243 = vmul.f32 %v175, %v230
    %v244 = vmul.f32 %v176, %v240
    %v245 = vperm.slane %v142, 0
    %v246 = vmul.f32 %v241, %v245
    %v247 = vmul.f32 %v242, %v245
    %v248 = vmul.f32 %v243, %v245
    %v249 = vmul.f32 %v244, %v245
    %v250 = vperm.slane %v143, 0
    %v251 = vadd.f32 %v246, %v250
    %v252 = vadd.f32 %v247, %v250
    %v253 = vadd.f32 %v248, %v250
    %v254 = vadd.f32 %v249, %v250
    %v255 = vperm.slane %v146, 0
    %v256 = vadd.f32 %v251, %v255
    %v257 = vadd.f32 %v252, %v255
    %v258 = vadd.f32 %v253, %v255
    %v259 = vadd.f32 %v254, %v255
    %v260 = vld [vmem:[%s7 + $0x7] sm:$0x1]
    %v261 = vld [vmem:[%s7 + $0x9] sm:$0x1]
    %v262 = vld [vmem:[%s7 + $0xb] sm:$0x1]
    %v263 = vld [vmem:[%s3] sm:$0xff]
    %v264 = vld [vmem:[%s3 + $0x8] sm:$0xff]
    %v265 = vld [vmem:[%s3 + $0x10] sm:$0xff]
    %v266 = vld [vmem:[%s3 + $0x18] sm:$0xff]
    %v267 = vperm.slane %v260, 0
    %v269 = vsel %vm149, %v251, 0
    %v272 = vsel %vm149, %v252, 0
    %v275 = vsel %vm149, %v253, 0
    %v278 = vsel %vm149, %v254, 0
    %280 = vmatpush.msra.mxu0 0.0
    %281 = vmatpush.msra.mxu0 0.0
    %282 = vmatpush.msra.mxu0 0.0
    %283 = vmatpush.msra.mxu0 0.0
    %284 = vmatpush.msra.mxu0 0.0
    %285 = vmatpush.msra.mxu0 0.0
    %286 = vmatpush.msra.mxu0 0.0
    %287 = vmatpush.msra.mxu0 0.0
    %288 = vmatpush.msra.mxu0 0.0
    %289 = vmatpush.msra.mxu0 0.0
    %290 = vmatpush.msra.mxu0 0.0
    %291 = vmatpush.msra.mxu0 0.0
    %292 = vmatpush.msra.mxu0 %v266
    %293 = vmatpush.msra.mxu0 %v265
    %294 = vmatpush.msra.mxu0 %v264
    %295 = vmatpush.msra.mxu0 %v263
    %296 = vmatmul.f32.gmra.mxu0 %v269
    %v297 = vpop.f32.mrf.mxu0
    %v298 = vadd.f32 %v267, %v297
    %299 = vmatmul.f32.gmra.mxu0 %v272
    %v300 = vpop.f32.mrf.mxu0
    %v301 = vadd.f32 %v267, %v300
    %302 = vmatmul.f32.gmra.mxu0 %v275
    %v303 = vpop.f32.mrf.mxu0
    %v304 = vadd.f32 %v267, %v303
    %305 = vmatmul.f32.gmra.mxu0 %v278
    %v306 = vpop.f32.mrf.mxu0
    %v307 = vadd.f32 %v267, %v306
    %308 = vdwg.mxu0
    %s309 = scalar_lea.vmem %s3, 64
    %v310 = vld [vmem:[%s309] sm:$0xff]
    %v311 = vld [vmem:[%s309 + $0x8] sm:$0xff]
    %v312 = vld [vmem:[%s309 + $0x10] sm:$0xff]
    %v313 = vld [vmem:[%s309 + $0x18] sm:$0xff]
    %v314 = vperm.slane %v261, 0
    %315 = vmatpush.msra.mxu0 0.0
    %316 = vmatpush.msra.mxu0 0.0
    %317 = vmatpush.msra.mxu0 0.0
    %318 = vmatpush.msra.mxu0 0.0
    %319 = vmatpush.msra.mxu0 0.0
    %320 = vmatpush.msra.mxu0 0.0
    %321 = vmatpush.msra.mxu0 0.0
    %322 = vmatpush.msra.mxu0 0.0
    %323 = vmatpush.msra.mxu0 0.0
    %324 = vmatpush.msra.mxu0 0.0
    %325 = vmatpush.msra.mxu0 0.0
    %326 = vmatpush.msra.mxu0 0.0
    %327 = vmatpush.msra.mxu0 %v313
    %328 = vmatpush.msra.mxu0 %v312
    %329 = vmatpush.msra.mxu0 %v311
    %330 = vmatpush.msra.mxu0 %v310
    %331 = vmatmul.f32.gmra.mxu0 %v269
    %v332 = vpop.f32.mrf.mxu0
    %v333 = vadd.f32 %v314, %v332
    %334 = vmatmul.f32.gmra.mxu0 %v272
    %v335 = vpop.f32.mrf.mxu0
    %v336 = vadd.f32 %v314, %v335
    %337 = vmatmul.f32.gmra.mxu0 %v275
    %v338 = vpop.f32.mrf.mxu0
    %v339 = vadd.f32 %v314, %v338
    %340 = vmatmul.f32.gmra.mxu0 %v278
    %v341 = vpop.f32.mrf.mxu0
    %v342 = vadd.f32 %v314, %v341
    %343 = vdwg.mxu0
    %s344 = scalar_lea.vmem %s3, 128
    %v345 = vld [vmem:[%s344] sm:$0xff]
    %v346 = vld [vmem:[%s344 + $0x8] sm:$0xff]
    %v347 = vld [vmem:[%s344 + $0x10] sm:$0xff]
    %v348 = vld [vmem:[%s344 + $0x18] sm:$0xff]
    %v349 = vperm.slane %v262, 0
    %350 = vmatpush.msra.mxu0 0.0
    %351 = vmatpush.msra.mxu0 0.0
    %352 = vmatpush.msra.mxu0 0.0
    %353 = vmatpush.msra.mxu0 0.0
    %354 = vmatpush.msra.mxu0 0.0
    %355 = vmatpush.msra.mxu0 0.0
    %356 = vmatpush.msra.mxu0 0.0
    %357 = vmatpush.msra.mxu0 0.0
    %358 = vmatpush.msra.mxu0 0.0
    %359 = vmatpush.msra.mxu0 0.0
    %360 = vmatpush.msra.mxu0 0.0
    %361 = vmatpush.msra.mxu0 0.0
    %362 = vmatpush.msra.mxu0 %v348
    %363 = vmatpush.msra.mxu0 %v347
    %364 = vmatpush.msra.mxu0 %v346
    %365 = vmatpush.msra.mxu0 %v345
    %366 = vmatmul.f32.gmra.mxu0 %v269
    %v367 = vpop.f32.mrf.mxu0
    %v368 = vadd.f32 %v349, %v367
    %369 = vmatmul.f32.gmra.mxu0 %v272
    %v370 = vpop.f32.mrf.mxu0
    %v371 = vadd.f32 %v349, %v370
    %372 = vmatmul.f32.gmra.mxu0 %v275
    %v373 = vpop.f32.mrf.mxu0
    %v374 = vadd.f32 %v349, %v373
    %375 = vmatmul.f32.gmra.mxu0 %v278
    %v376 = vpop.f32.mrf.mxu0
    %v377 = vadd.f32 %v349, %v376
    %378 = vdwg.mxu0
    %vm379 = vcmask 130048
    %v381 = vsel %vm379, %v298, 0
    %v384 = vsel %vm379, %v301, 0
    %v387 = vsel %vm379, %v304, 0
    %v390 = vsel %vm379, %v307, 0
    %v393 = vsel %vm379, %v333, 0
    %v396 = vsel %vm379, %v336, 0
    %v399 = vsel %vm379, %v339, 0
    %v402 = vsel %vm379, %v342, 0
    %404 = vmatpush.xpose.msra.mxu0 0.0
    %405 = vmatpush.xpose.msra.mxu0 0.0
    %406 = vmatpush.xpose.msra.mxu0 0.0
    %407 = vmatpush.xpose.msra.mxu0 0.0
    %408 = vmatpush.xpose.msra.mxu0 0.0
    %409 = vmatpush.xpose.msra.mxu0 0.0
    %410 = vmatpush.xpose.msra.mxu0 0.0
    %411 = vmatpush.xpose.msra.mxu0 0.0
    %412 = vmatpush.xpose.msra.mxu0 0.0
    %413 = vmatpush.xpose.msra.mxu0 0.0
    %414 = vmatpush.xpose.msra.mxu0 0.0
    %415 = vmatpush.xpose.msra.mxu0 0.0
    %416 = vmatpush.xpose.msra.mxu0 %v402
    %417 = vmatpush.xpose.msra.mxu0 %v399
    %418 = vmatpush.xpose.msra.mxu0 %v396
    %419 = vmatpush.xpose.msra.mxu0 %v393
    %420 = vmatmul.f32.gmra.mxu0 %v381
    %v421 = vpop.f32.mrf.mxu0
    %v422 = vadd.f32 0.0, %v421
    %423 = vmatmul.f32.gmra.mxu0 %v384
    %v424 = vpop.f32.mrf.mxu0
    %v425 = vadd.f32 0.0, %v424
    %426 = vmatmul.f32.gmra.mxu0 %v387
    %v427 = vpop.f32.mrf.mxu0
    %v428 = vadd.f32 0.0, %v427
    %429 = vmatmul.f32.gmra.mxu0 %v390
    %v430 = vpop.f32.mrf.mxu0
    %v431 = vadd.f32 0.0, %v430
    %432 = vdwg.mxu0
    %v433 = vmul.f32 %v422, 0.25
    %v434 = vmul.f32 %v425, 0.25
    %v435 = vmul.f32 %v428, 0.25
    %v436 = vmul.f32 %v431, 0.25
    %v437 = vadd.f32 %v433, %v81
    %v438 = vadd.f32 %v434, %v82
    %v439 = vadd.f32 %v435, %v83
    %v440 = vadd.f32 %v436, %v84
    %v441 = vsel %vm149, %v437, -inf
    %442 = vmax.xlane.f32.xlu0 %v441
    %v443 = vpop.xlane.xlu0 %442
    %v444 = vsel %vm149, %v438, -inf
    %445 = vmax.xlane.f32.xlu0 %v444
    %v446 = vpop.xlane.xlu0 %445
    %v447 = vsel %vm149, %v439, -inf
    %448 = vmax.xlane.f32.xlu0 %v447
    %v449 = vpop.xlane.xlu0 %448
    %v450 = vsel %vm149, %v440, -inf
    %451 = vmax.xlane.f32.xlu0 %v450
    %v452 = vpop.xlane.xlu0 %451
    %v453 = vsub.f32 %v437, %v443
    %v454 = vsub.f32 %v438, %v446
    %v455 = vsub.f32 %v439, %v449
    %v456 = vsub.f32 %v440, %v452
    %v457 = vmul.f32 %v453, 1.442695
    %v458 = vpow.pop %v457
    %v459 = vmul.f32 %v454, 1.442695
    %v460 = vpow.pop %v459
    %v461 = vmul.f32 %v455, 1.442695
    %v462 = vpow.pop %v461
    %v463 = vmul.f32 %v456, 1.442695
    %v464 = vpow.pop %v463
    %v465 = vsel %vm149, %v458, 0.0
    %466 = vadd.xlane.f32.xlu0 %v465
    %v467 = vpop.xlane.xlu0 %466
    %v468 = vsel %vm149, %v460, 0.0
    %469 = vadd.xlane.f32.xlu0 %v468
    %v470 = vpop.xlane.xlu0 %469
    %v471 = vsel %vm149, %v462, 0.0
    %472 = vadd.xlane.f32.xlu0 %v471
    %v473 = vpop.xlane.xlu0 %472
    %v474 = vsel %vm149, %v464, 0.0
    %475 = vadd.xlane.f32.xlu0 %v474
    %v476 = vpop.xlane.xlu0 %475
    %v477 = vrcp.pop %v467
    %v478 = vrcp.pop %v470
    %v479 = vrcp.pop %v473
    %v480 = vrcp.pop %v476
    %v481 = vmul.f32 %v458, %v477
    %v482 = vmul.f32 %v460, %v478
    %v483 = vmul.f32 %v462, %v479
    %v484 = vmul.f32 %v464, %v480
    %v486 = vsel %vm149, %v481, 0
    %v489 = vsel %vm149, %v482, 0
    %v492 = vsel %vm149, %v483, 0
    %v495 = vsel %vm149, %v484, 0
    %497 = vmatpush.msra.mxu0 0.0
    %498 = vmatpush.msra.mxu0 0.0
    %499 = vmatpush.msra.mxu0 0.0
    %500 = vmatpush.msra.mxu0 0.0
    %501 = vmatpush.msra.mxu0 0.0
    %502 = vmatpush.msra.mxu0 0.0
    %503 = vmatpush.msra.mxu0 0.0
    %504 = vmatpush.msra.mxu0 0.0
    %505 = vmatpush.msra.mxu0 0.0
    %506 = vmatpush.msra.mxu0 0.0
    %507 = vmatpush.msra.mxu0 0.0
    %508 = vmatpush.msra.mxu0 0.0
    %509 = vmatpush.msra.mxu0 %v377
    %510 = vmatpush.msra.mxu0 %v374
    %511 = vmatpush.msra.mxu0 %v371
    %512 = vmatpush.msra.mxu0 %v368
    %513 = vmatmul.f32.gmra.mxu0 %v486
    %v514 = vpop.f32.mrf.mxu0
    %v515 = vadd.f32 0.0, %v514
    %516 = vmatmul.f32.gmra.mxu0 %v489
    %v517 = vpop.f32.mrf.mxu0
    %v518 = vadd.f32 0.0, %v517
    %519 = vmatmul.f32.gmra.mxu0 %v492
    %v520 = vpop.f32.mrf.mxu0
    %v521 = vadd.f32 0.0, %v520
    %522 = vmatmul.f32.gmra.mxu0 %v495
    %v523 = vpop.f32.mrf.mxu0
    %v524 = vadd.f32 0.0, %v523
    %525 = vdwg.mxu0
    %v526 = vld [vmem:[#allocation7] sm:$0xff]
    %v527 = vld [vmem:[#allocation7 + $0x8] sm:$0xff]
    %v529 = vsel %vm379, %v515, 0
    %v532 = vsel %vm379, %v518, 0
    %v535 = vsel %vm379, %v521, 0
    %v538 = vsel %vm379, %v524, 0
    %540 = vmatpush.msra.mxu0 0.0
    %541 = vmatpush.msra.mxu0 0.0
    %542 = vmatpush.msra.mxu0 0.0
    %543 = vmatpush.msra.mxu0 0.0
    %544 = vmatpush.msra.mxu0 0.0
    %545 = vmatpush.msra.mxu0 0.0
    %546 = vmatpush.msra.mxu0 0.0
    %547 = vmatpush.msra.mxu0 0.0
    %548 = vmatpush.msra.mxu0 0.0
    %549 = vmatpush.msra.mxu0 0.0
    %550 = vmatpush.msra.mxu0 0.0
    %551 = vmatpush.msra.mxu0 0.0
    %552 = vmatpush.msra.mxu0 0.0
    %553 = vmatpush.msra.mxu0 0.0
    %554 = vmatpush.msra.mxu0 %v527
    %555 = vmatpush.msra.mxu0 %v526
    %556 = vmatmul.f32.gmra.mxu0 %v529
    %v557 = vpop.f32.mrf.mxu0
    %v558 = vadd.f32 0.0, %v557
    %559 = vmatmul.f32.gmra.mxu0 %v532
    %v560 = vpop.f32.mrf.mxu0
    %v561 = vadd.f32 0.0, %v560
    %562 = vmatmul.f32.gmra.mxu0 %v535
    %v563 = vpop.f32.mrf.mxu0
    %v564 = vadd.f32 0.0, %v563
    %565 = vmatmul.f32.gmra.mxu0 %v538
    %v566 = vpop.f32.mrf.mxu0
    %v567 = vadd.f32 0.0, %v566
    %568 = vdwg.mxu0
    %v569 = vadd.f32 %v256, %v558
    %v570 = vadd.f32 %v257, %v561
    %v571 = vadd.f32 %v258, %v564
    %v572 = vadd.f32 %v259, %v567
    %v573 = vld [vmem:[%s7 + $0x8] sm:$0x1]
    %v574 = vld [vmem:[%s7 + $0xa] sm:$0x1]
    %v575 = vld [vmem:[%s7 + $0xc] sm:$0x1]
    %s576 = scalar_lea.vmem %s3, 32
    %v577 = vld [vmem:[%s576] sm:$0xff]
    %v578 = vld [vmem:[%s576 + $0x8] sm:$0xff]
    %v579 = vld [vmem:[%s576 + $0x10] sm:$0xff]
    %v580 = vld [vmem:[%s576 + $0x18] sm:$0xff]
    %v581 = vperm.slane %v573, 0
    %582 = vmatpush.msra.mxu0 0.0
    %583 = vmatpush.msra.mxu0 0.0
    %584 = vmatpush.msra.mxu0 0.0
    %585 = vmatpush.msra.mxu0 0.0
    %586 = vmatpush.msra.mxu0 0.0
    %587 = vmatpush.msra.mxu0 0.0
    %588 = vmatpush.msra.mxu0 0.0
    %589 = vmatpush.msra.mxu0 0.0
    %590 = vmatpush.msra.mxu0 0.0
    %591 = vmatpush.msra.mxu0 0.0
    %592 = vmatpush.msra.mxu0 0.0
    %593 = vmatpush.msra.mxu0 0.0
    %594 = vmatpush.msra.mxu0 %v580
    %595 = vmatpush.msra.mxu0 %v579
    %596 = vmatpush.msra.mxu0 %v578
    %597 = vmatpush.msra.mxu0 %v577
    %598 = vmatmul.f32.gmra.mxu0 %v269
    %v599 = vpop.f32.mrf.mxu0
    %v600 = vadd.f32 %v581, %v599
    %601 = vmatmul.f32.gmra.mxu0 %v272
    %v602 = vpop.f32.mrf.mxu0
    %v603 = vadd.f32 %v581, %v602
    %604 = vmatmul.f32.gmra.mxu0 %v275
    %v605 = vpop.f32.mrf.mxu0
    %v606 = vadd.f32 %v581, %v605
    %607 = vmatmul.f32.gmra.mxu0 %v278
    %v608 = vpop.f32.mrf.mxu0
    %v609 = vadd.f32 %v581, %v608
    %610 = vdwg.mxu0
    %s611 = scalar_lea.vmem %s3, 96
    %v612 = vld [vmem:[%s611] sm:$0xff]
    %v613 = vld [vmem:[%s611 + $0x8] sm:$0xff]
    %v614 = vld [vmem:[%s611 + $0x10] sm:$0xff]
    %v615 = vld [vmem:[%s611 + $0x18] sm:$0xff]
    %v616 = vperm.slane %v574, 0
    %617 = vmatpush.msra.mxu0 0.0
    %618 = vmatpush.msra.mxu0 0.0
    %619 = vmatpush.msra.mxu0 0.0
    %620 = vmatpush.msra.mxu0 0.0
    %621 = vmatpush.msra.mxu0 0.0
    %622 = vmatpush.msra.mxu0 0.0
    %623 = vmatpush.msra.mxu0 0.0
    %624 = vmatpush.msra.mxu0 0.0
    %625 = vmatpush.msra.mxu0 0.0
    %626 = vmatpush.msra.mxu0 0.0
    %627 = vmatpush.msra.mxu0 0.0
    %628 = vmatpush.msra.mxu0 0.0
    %629 = vmatpush.msra.mxu0 %v615
    %630 = vmatpush.msra.mxu0 %v614
    %631 = vmatpush.msra.mxu0 %v613
    %632 = vmatpush.msra.mxu0 %v612
    %633 = vmatmul.f32.gmra.mxu0 %v269
    %v634 = vpop.f32.mrf.mxu0
    %v635 = vadd.f32 %v616, %v634
    %636 = vmatmul.f32.gmra.mxu0 %v272
    %v637 = vpop.f32.mrf.mxu0
    %v638 = vadd.f32 %v616, %v637
    %639 = vmatmul.f32.gmra.mxu0 %v275
    %v640 = vpop.f32.mrf.mxu0
    %v641 = vadd.f32 %v616, %v640
    %642 = vmatmul.f32.gmra.mxu0 %v278
    %v643 = vpop.f32.mrf.mxu0
    %v644 = vadd.f32 %v616, %v643
    %645 = vdwg.mxu0
    %s646 = scalar_lea.vmem %s3, 160
    %v647 = vld [vmem:[%s646] sm:$0xff]
    %v648 = vld [vmem:[%s646 + $0x8] sm:$0xff]
    %v649 = vld [vmem:[%s646 + $0x10] sm:$0xff]
    %v650 = vld [vmem:[%s646 + $0x18] sm:$0xff]
    %v651 = vperm.slane %v575, 0
    %652 = vmatpush.msra.mxu0 0.0
    %653 = vmatpush.msra.mxu0 0.0
    %654 = vmatpush.msra.mxu0 0.0
    %655 = vmatpush.msra.mxu0 0.0
    %656 = vmatpush.msra.mxu0 0.0
    %657 = vmatpush.msra.mxu0 0.0
    %658 = vmatpush.msra.mxu0 0.0
    %659 = vmatpush.msra.mxu0 0.0
    %660 = vmatpush.msra.mxu0 0.0
    %661 = vmatpush.msra.mxu0 0.0
    %662 = vmatpush.msra.mxu0 0.0
    %663 = vmatpush.msra.mxu0 0.0
    %664 = vmatpush.msra.mxu0 %v650
    %665 = vmatpush.msra.mxu0 %v649
    %666 = vmatpush.msra.mxu0 %v648
    %667 = vmatpush.msra.mxu0 %v647
    %668 = vmatmul.f32.gmra.mxu0 %v269
    %v669 = vpop.f32.mrf.mxu0
    %v670 = vadd.f32 %v651, %v669
    %671 = vmatmul.f32.gmra.mxu0 %v272
    %v672 = vpop.f32.mrf.mxu0
    %v673 = vadd.f32 %v651, %v672
    %674 = vmatmul.f32.gmra.mxu0 %v275
    %v675 = vpop.f32.mrf.mxu0
    %v676 = vadd.f32 %v651, %v675
    %677 = vmatmul.f32.gmra.mxu0 %v278
    %v678 = vpop.f32.mrf.mxu0
    %v679 = vadd.f32 %v651, %v678
    %680 = vdwg.mxu0
    %v682 = vsel %vm379, %v600, 0
    %v685 = vsel %vm379, %v603, 0
    %v688 = vsel %vm379, %v606, 0
    %v691 = vsel %vm379, %v609, 0
    %v694 = vsel %vm379, %v635, 0
    %v697 = vsel %vm379, %v638, 0
    %v700 = vsel %vm379, %v641, 0
    %v703 = vsel %vm379, %v644, 0
    %705 = vmatpush.xpose.msra.mxu0 0.0
    %706 = vmatpush.xpose.msra.mxu0 0.0
    %707 = vmatpush.xpose.msra.mxu0 0.0
    %708 = vmatpush.xpose.msra.mxu0 0.0
    %709 = vmatpush.xpose.msra.mxu0 0.0
    %710 = vmatpush.xpose.msra.mxu0 0.0
    %711 = vmatpush.xpose.msra.mxu0 0.0
    %712 = vmatpush.xpose.msra.mxu0 0.0
    %713 = vmatpush.xpose.msra.mxu0 0.0
    %714 = vmatpush.xpose.msra.mxu0 0.0
    %715 = vmatpush.xpose.msra.mxu0 0.0
    %716 = vmatpush.xpose.msra.mxu0 0.0
    %717 = vmatpush.xpose.msra.mxu0 %v703
    %718 = vmatpush.xpose.msra.mxu0 %v700
    %719 = vmatpush.xpose.msra.mxu0 %v697
    %720 = vmatpush.xpose.msra.mxu0 %v694
    %721 = vmatmul.f32.gmra.mxu0 %v682
    %v722 = vpop.f32.mrf.mxu0
    %v723 = vadd.f32 0.0, %v722
    %724 = vmatmul.f32.gmra.mxu0 %v685
    %v725 = vpop.f32.mrf.mxu0
    %v726 = vadd.f32 0.0, %v725
    %727 = vmatmul.f32.gmra.mxu0 %v688
    %v728 = vpop.f32.mrf.mxu0
    %v729 = vadd.f32 0.0, %v728
    %730 = vmatmul.f32.gmra.mxu0 %v691
    %v731 = vpop.f32.mrf.mxu0
    %v732 = vadd.f32 0.0, %v731
    %733 = vdwg.mxu0
    %v734 = vmul.f32 %v723, 0.25
    %v735 = vmul.f32 %v726, 0.25
    %v736 = vmul.f32 %v729, 0.25
    %v737 = vmul.f32 %v732, 0.25
    %v738 = vadd.f32 %v734, %v81
    %v739 = vadd.f32 %v735, %v82
    %v740 = vadd.f32 %v736, %v83
    %v741 = vadd.f32 %v737, %v84
    %v742 = vsel %vm149, %v738, -inf
    %743 = vmax.xlane.f32.xlu0 %v742
    %v744 = vpop.xlane.xlu0 %743
    %v745 = vsel %vm149, %v739, -inf
    %746 = vmax.xlane.f32.xlu0 %v745
    %v747 = vpop.xlane.xlu0 %746
    %v748 = vsel %vm149, %v740, -inf
    %749 = vmax.xlane.f32.xlu0 %v748
    %v750 = vpop.xlane.xlu0 %749
    %v751 = vsel %vm149, %v741, -inf
    %752 = vmax.xlane.f32.xlu0 %v751
    %v753 = vpop.xlane.xlu0 %752
    %v754 = vsub.f32 %v738, %v744
    %v755 = vsub.f32 %v739, %v747
    %v756 = vsub.f32 %v740, %v750
    %v757 = vsub.f32 %v741, %v753
    %v758 = vmul.f32 %v754, 1.442695
    %v759 = vpow.pop %v758
    %v760 = vmul.f32 %v755, 1.442695
    %v761 = vpow.pop %v760
    %v762 = vmul.f32 %v756, 1.442695
    %v763 = vpow.pop %v762
    %v764 = vmul.f32 %v757, 1.442695
    %v765 = vpow.pop %v764
    %v766 = vsel %vm149, %v759, 0.0
    %767 = vadd.xlane.f32.xlu0 %v766
    %v768 = vpop.xlane.xlu0 %767
    %v769 = vsel %vm149, %v761, 0.0
    %770 = vadd.xlane.f32.xlu0 %v769
    %v771 = vpop.xlane.xlu0 %770
    %v772 = vsel %vm149, %v763, 0.0
    %773 = vadd.xlane.f32.xlu0 %v772
    %v774 = vpop.xlane.xlu0 %773
    %v775 = vsel %vm149, %v765, 0.0
    %776 = vadd.xlane.f32.xlu0 %v775
    %v777 = vpop.xlane.xlu0 %776
    %v778 = vrcp.pop %v768
    %v779 = vrcp.pop %v771
    %v780 = vrcp.pop %v774
    %v781 = vrcp.pop %v777
    %v782 = vmul.f32 %v759, %v778
    %v783 = vmul.f32 %v761, %v779
    %v784 = vmul.f32 %v763, %v780
    %v785 = vmul.f32 %v765, %v781
    %v787 = vsel %vm149, %v782, 0
    %v790 = vsel %vm149, %v783, 0
    %v793 = vsel %vm149, %v784, 0
    %v796 = vsel %vm149, %v785, 0
    %798 = vmatpush.msra.mxu0 0.0
    %799 = vmatpush.msra.mxu0 0.0
    %800 = vmatpush.msra.mxu0 0.0
    %801 = vmatpush.msra.mxu0 0.0
    %802 = vmatpush.msra.mxu0 0.0
    %803 = vmatpush.msra.mxu0 0.0
    %804 = vmatpush.msra.mxu0 0.0
    %805 = vmatpush.msra.mxu0 0.0
    %806 = vmatpush.msra.mxu0 0.0
    %807 = vmatpush.msra.mxu0 0.0
    %808 = vmatpush.msra.mxu0 0.0
    %809 = vmatpush.msra.mxu0 0.0
    %810 = vmatpush.msra.mxu0 %v679
    %811 = vmatpush.msra.mxu0 %v676
    %812 = vmatpush.msra.mxu0 %v673
    %813 = vmatpush.msra.mxu0 %v670
    %814 = vmatmul.f32.gmra.mxu0 %v787
    %v815 = vpop.f32.mrf.mxu0
    %v816 = vadd.f32 0.0, %v815
    %817 = vmatmul.f32.gmra.mxu0 %v790
    %v818 = vpop.f32.mrf.mxu0
    %v819 = vadd.f32 0.0, %v818
    %820 = vmatmul.f32.gmra.mxu0 %v793
    %v821 = vpop.f32.mrf.mxu0
    %v822 = vadd.f32 0.0, %v821
    %823 = vmatmul.f32.gmra.mxu0 %v796
    %v824 = vpop.f32.mrf.mxu0
    %v825 = vadd.f32 0.0, %v824
    %826 = vdwg.mxu0
    %s827 = scalar_lea.vmem [#allocation7], 16
    %v828 = vld [vmem:[%s827] sm:$0xff]
    %v829 = vld [vmem:[%s827 + $0x8] sm:$0xff]
    %v831 = vsel %vm379, %v816, 0
    %v834 = vsel %vm379, %v819, 0
    %v837 = vsel %vm379, %v822, 0
    %v840 = vsel %vm379, %v825, 0
    %842 = vmatpush.msra.mxu0 0.0
    %843 = vmatpush.msra.mxu0 0.0
    %844 = vmatpush.msra.mxu0 0.0
    %845 = vmatpush.msra.mxu0 0.0
    %846 = vmatpush.msra.mxu0 0.0
    %847 = vmatpush.msra.mxu0 0.0
    %848 = vmatpush.msra.mxu0 0.0
    %849 = vmatpush.msra.mxu0 0.0
    %850 = vmatpush.msra.mxu0 0.0
    %851 = vmatpush.msra.mxu0 0.0
    %852 = vmatpush.msra.mxu0 0.0
    %853 = vmatpush.msra.mxu0 0.0
    %854 = vmatpush.msra.mxu0 0.0
    %855 = vmatpush.msra.mxu0 0.0
    %856 = vmatpush.msra.mxu0 %v829
    %857 = vmatpush.msra.mxu0 %v828
    %858 = vmatmul.f32.gmra.mxu0 %v831
    %v859 = vpop.f32.mrf.mxu0
    %v860 = vadd.f32 0.0, %v859
    %861 = vmatmul.f32.gmra.mxu0 %v834
    %v862 = vpop.f32.mrf.mxu0
    %v863 = vadd.f32 0.0, %v862
    %864 = vmatmul.f32.gmra.mxu0 %v837
    %v865 = vpop.f32.mrf.mxu0
    %v866 = vadd.f32 0.0, %v865
    %867 = vmatmul.f32.gmra.mxu0 %v840
    %v868 = vpop.f32.mrf.mxu0
    %v869 = vadd.f32 0.0, %v868
    %870 = vdwg.mxu0
    %v871 = vadd.f32 %v569, %v860
    %v872 = vadd.f32 %v570, %v863
    %v873 = vadd.f32 %v571, %v866
    %v874 = vadd.f32 %v572, %v869
    %v875 = vsel %vm149, %v871, 0.0
    %876 = vadd.xlane.f32.xlu0 %v875
    %v877 = vpop.xlane.xlu0 %876
    %v878 = vsel %vm149, %v872, 0.0
    %879 = vadd.xlane.f32.xlu0 %v878
    %v880 = vpop.xlane.xlu0 %879
    %v881 = vsel %vm149, %v873, 0.0
    %882 = vadd.xlane.f32.xlu0 %v881
    %v883 = vpop.xlane.xlu0 %882
    %v884 = vsel %vm149, %v874, 0.0
    %885 = vadd.xlane.f32.xlu0 %v884
    %v886 = vpop.xlane.xlu0 %885
    %v887 = vmul.f32 %v877, %v168
    %v888 = vmul.f32 %v880, %v168
    %v889 = vmul.f32 %v883, %v168
    %v890 = vmul.f32 %v886, %v168
    %v891 = vsub.f32 %v871, %v887
    %v892 = vsub.f32 %v872, %v888
    %v893 = vsub.f32 %v873, %v889
    %v894 = vsub.f32 %v874, %v890
    %v895 = vmul.f32 %v891, %v891
    %v896 = vmul.f32 %v892, %v892
    %v897 = vmul.f32 %v893, %v893
    %v898 = vmul.f32 %v894, %v894
    %v899 = vsel %vm149, %v895, 0.0
    %900 = vadd.xlane.f32.xlu0 %v899
    %v901 = vpop.xlane.xlu0 %900
    %v902 = vsel %vm149, %v896, 0.0
    %903 = vadd.xlane.f32.xlu0 %v902
    %v904 = vpop.xlane.xlu0 %903
    %v905 = vsel %vm149, %v897, 0.0
    %906 = vadd.xlane.f32.xlu0 %v905
    %v907 = vpop.xlane.xlu0 %906
    %v908 = vsel %vm149, %v898, 0.0
    %909 = vadd.xlane.f32.xlu0 %v908
    %v910 = vpop.xlane.xlu0 %909
    %v911 = vmul.f32 %v901, %v168
    %v912 = vmul.f32 %v904, %v168
    %v913 = vmul.f32 %v907, %v168
    %v914 = vmul.f32 %v910, %v168
    %v915 = vadd.f32 %v911, 1e-05
    %v916 = vadd.f32 %v912, 1e-05
    %v917 = vadd.f32 %v913, 1e-05
    %v918 = vadd.f32 %v914, 1e-05
    %v919 = vrsqrt.pop %v915
    %v920 = vmul.f32 %v919, %v915
    %v921 = vmul.f32 %v920, %v919
    %v922 = vmul.f32 0.5, %v921
    %v923 = vsub.f32 1.5, %v922
    %v924 = vmul.f32 %v919, %v923
    %vm925 = vweird.f32 %v915
    %vm926 = vweird.f32 %v919
    %vm927 = vmor %vm925, %vm926
    %v928 = vsel %vm927, %v919, %v924
    %v929 = vrsqrt.pop %v916
    %v930 = vmul.f32 %v929, %v916
    %v931 = vmul.f32 %v930, %v929
    %v932 = vmul.f32 0.5, %v931
    %v933 = vsub.f32 1.5, %v932
    %v934 = vmul.f32 %v929, %v933
    %vm935 = vweird.f32 %v916
    %vm936 = vweird.f32 %v929
    %vm937 = vmor %vm935, %vm936
    %v938 = vsel %vm937, %v929, %v934
    %v939 = vrsqrt.pop %v917
    %v940 = vmul.f32 %v939, %v917
    %v941 = vmul.f32 %v940, %v939
    %v942 = vmul.f32 0.5, %v941
    %v943 = vsub.f32 1.5, %v942
    %v944 = vmul.f32 %v939, %v943
    %vm945 = vweird.f32 %v917
    %vm946 = vweird.f32 %v939
    %vm947 = vmor %vm945, %vm946
    %v948 = vsel %vm947, %v939, %v944
    %v949 = vrsqrt.pop %v918
    %v950 = vmul.f32 %v949, %v918
    %v951 = vmul.f32 %v950, %v949
    %v952 = vmul.f32 0.5, %v951
    %v953 = vsub.f32 1.5, %v952
    %v954 = vmul.f32 %v949, %v953
    %vm955 = vweird.f32 %v918
    %vm956 = vweird.f32 %v949
    %vm957 = vmor %vm955, %vm956
    %v958 = vsel %vm957, %v949, %v954
    %v959 = vmul.f32 %v891, %v928
    %v960 = vmul.f32 %v892, %v938
    %v961 = vmul.f32 %v893, %v948
    %v962 = vmul.f32 %v894, %v958
    %v963 = vperm.slane %v144, 0
    %v964 = vmul.f32 %v959, %v963
    %v965 = vmul.f32 %v960, %v963
    %v966 = vmul.f32 %v961, %v963
    %v967 = vmul.f32 %v962, %v963
    %v968 = vperm.slane %v145, 0
    %v969 = vadd.f32 %v964, %v968
    %v970 = vadd.f32 %v965, %v968
    %v971 = vadd.f32 %v966, %v968
    %v972 = vadd.f32 %v967, %v968
    %974 = vset.pattern.permute.xlu0 0
    %975 = vperm.xlu0 %974, %v85
    %v976 = vpop.permute.xlu0 %975
    %979 = vset.pattern.permute.xlu0 0
    %980 = vperm.xlu0 %979, %v86
    %v981 = vpop.permute.xlu0 %980
    %984 = vset.pattern.permute.xlu0 0
    %985 = vperm.xlu0 %984, %v87
    %v986 = vpop.permute.xlu0 %985
    %989 = vset.pattern.permute.xlu0 0
    %990 = vperm.xlu0 %989, %v88
    %v991 = vpop.permute.xlu0 %990
    %v993 = vmul.f32 %v969, %v976
    %v994 = vmul.f32 %v970, %v981
    %v995 = vmul.f32 %v971, %v986
    %v996 = vmul.f32 %v972, %v991
    %s997 = scalar_lea.vmem %s5, 128
    %v998 = vld [vmem:[%s997] sm:$0xff]
    %v999 = vld [vmem:[%s997 + $0x8] sm:$0xff]
    %v1000 = vld [vmem:[%s997 + $0x10] sm:$0xff]
    %v1001 = vld [vmem:[%s997 + $0x18] sm:$0xff]
    %v1002 = vperm.slane %v148, 0
    %v1004 = vsel %vm149, %v993, 0
    %v1007 = vsel %vm149, %v994, 0
    %v1010 = vsel %vm149, %v995, 0
    %v1013 = vsel %vm149, %v996, 0
    %1015 = vmatpush.msra.mxu0 0.0
    %1016 = vmatpush.msra.mxu0 0.0
    %1017 = vmatpush.msra.mxu0 0.0
    %1018 = vmatpush.msra.mxu0 0.0
    %1019 = vmatpush.msra.mxu0 0.0
    %1020 = vmatpush.msra.mxu0 0.0
    %1021 = vmatpush.msra.mxu0 0.0
    %1022 = vmatpush.msra.mxu0 0.0
    %1023 = vmatpush.msra.mxu0 0.0
    %1024 = vmatpush.msra.mxu0 0.0
    %1025 = vmatpush.msra.mxu0 0.0
    %1026 = vmatpush.msra.mxu0 0.0
    %1027 = vmatpush.msra.mxu0 %v1001
    %1028 = vmatpush.msra.mxu0 %v1000
    %1029 = vmatpush.msra.mxu0 %v999
    %1030 = vmatpush.msra.mxu0 %v998
    %1031 = vmatmul.f32.gmra.mxu0 %v1004
    %v1032 = vpop.f32.mrf.mxu0
    %v1033 = vadd.f32 %v1002, %v1032
    %1034 = vmatmul.f32.gmra.mxu0 %v1007
    %v1035 = vpop.f32.mrf.mxu0
    %v1036 = vadd.f32 %v1002, %v1035
    %1037 = vmatmul.f32.gmra.mxu0 %v1010
    %v1038 = vpop.f32.mrf.mxu0
    %v1039 = vadd.f32 %v1002, %v1038
    %1040 = vmatmul.f32.gmra.mxu0 %v1013
    %v1041 = vpop.f32.mrf.mxu0
    %v1042 = vadd.f32 %v1002, %v1041
    %1043 = vdwg.mxu0
    %v1044 = vrot.slane %v993, 4
    %v1045 = vrot.slane %v994, 4
    %v1046 = vrot.slane %v995, 4
    %v1047 = vrot.slane %v996, 4
    %vm1048 = vcmp.lt.s32.totalorder %v90, 4
    %v1049 = vsel %vm1048, %v1046, %v1047
    %v1050 = vsel %vm1048, %v1045, %v1046
    %v1051 = vsel %vm1048, %v1044, %v1045
    %v1052 = vsel %vm1048, %v1047, %v1044
    %vm1053 = vcmp.ge.s32.totalorder %v138, 4
    %vm1054 = vcmp.ge.s32.totalorder %v139, 4
    %vm1055 = vcmp.ge.s32.totalorder %v140, 4
    %vm1056 = vcmp.ge.s32.totalorder %v141, 4
    %v1057 = vsel %vm1053, 1.0, 0.0
    %v1058 = vsel %vm1054, 1.0, 0.0
    %v1059 = vsel %vm1055, 1.0, 0.0
    %v1060 = vsel %vm1056, 1.0, 0.0
    %v1061 = vmul.f32 %v1052, %v1057
    %v1062 = vmul.f32 %v1051, %v1058
    %v1063 = vmul.f32 %v1050, %v1059
    %v1064 = vmul.f32 %v1049, %v1060
    %v1065 = vld [vmem:[%s5] sm:$0xff]
    %v1066 = vld [vmem:[%s5 + $0x8] sm:$0xff]
    %v1067 = vld [vmem:[%s5 + $0x10] sm:$0xff]
    %v1068 = vld [vmem:[%s5 + $0x18] sm:$0xff]
    %v1070 = vsel %vm149, %v1061, 0
    %v1073 = vsel %vm149, %v1062, 0
    %v1076 = vsel %vm149, %v1063, 0
    %v1079 = vsel %vm149, %v1064, 0
    %1081 = vmatpush.msra.mxu0 0.0
    %1082 = vmatpush.msra.mxu0 0.0
    %1083 = vmatpush.msra.mxu0 0.0
    %1084 = vmatpush.msra.mxu0 0.0
    %1085 = vmatpush.msra.mxu0 0.0
    %1086 = vmatpush.msra.mxu0 0.0
    %1087 = vmatpush.msra.mxu0 0.0
    %1088 = vmatpush.msra.mxu0 0.0
    %1089 = vmatpush.msra.mxu0 0.0
    %1090 = vmatpush.msra.mxu0 0.0
    %1091 = vmatpush.msra.mxu0 0.0
    %1092 = vmatpush.msra.mxu0 0.0
    %1093 = vmatpush.msra.mxu0 %v1068
    %1094 = vmatpush.msra.mxu0 %v1067
    %1095 = vmatpush.msra.mxu0 %v1066
    %1096 = vmatpush.msra.mxu0 %v1065
    %1097 = vmatmul.f32.gmra.mxu0 %v1070
    %v1098 = vpop.f32.mrf.mxu0
    %v1099 = vadd.f32 0.0, %v1098
    %1100 = vmatmul.f32.gmra.mxu0 %v1073
    %v1101 = vpop.f32.mrf.mxu0
    %v1102 = vadd.f32 0.0, %v1101
    %1103 = vmatmul.f32.gmra.mxu0 %v1076
    %v1104 = vpop.f32.mrf.mxu0
    %v1105 = vadd.f32 0.0, %v1104
    %1106 = vmatmul.f32.gmra.mxu0 %v1079
    %v1107 = vpop.f32.mrf.mxu0
    %v1108 = vadd.f32 0.0, %v1107
    %1109 = vdwg.mxu0
    %v1110 = vadd.f32 %v1033, %v1099
    %v1111 = vadd.f32 %v1036, %v1102
    %v1112 = vadd.f32 %v1039, %v1105
    %v1113 = vadd.f32 %v1042, %v1108
    %v1114 = vrot.slane %v993, 5
    %v1115 = vrot.slane %v994, 5
    %v1116 = vrot.slane %v995, 5
    %v1117 = vrot.slane %v996, 5
    %vm1118 = vcmp.lt.s32.totalorder %v90, 3
    %v1119 = vsel %vm1118, %v1116, %v1117
    %v1120 = vsel %vm1118, %v1115, %v1116
    %v1121 = vsel %vm1118, %v1114, %v1115
    %v1122 = vsel %vm1118, %v1117, %v1114
    %vm1123 = vcmp.ge.s32.totalorder %v138, 3
    %vm1124 = vcmp.ge.s32.totalorder %v139, 3
    %vm1125 = vcmp.ge.s32.totalorder %v140, 3
    %vm1126 = vcmp.ge.s32.totalorder %v141, 3
    %v1127 = vsel %vm1123, 1.0, 0.0
    %v1128 = vsel %vm1124, 1.0, 0.0
    %v1129 = vsel %vm1125, 1.0, 0.0
    %v1130 = vsel %vm1126, 1.0, 0.0
    %v1131 = vmul.f32 %v1122, %v1127
    %v1132 = vmul.f32 %v1121, %v1128
    %v1133 = vmul.f32 %v1120, %v1129
    %v1134 = vmul.f32 %v1119, %v1130
    %s1135 = scalar_lea.vmem %s5, 32
    %v1136 = vld [vmem:[%s1135] sm:$0xff]
    %v1137 = vld [vmem:[%s1135 + $0x8] sm:$0xff]
    %v1138 = vld [vmem:[%s1135 + $0x10] sm:$0xff]
    %v1139 = vld [vmem:[%s1135 + $0x18] sm:$0xff]
    %v1141 = vsel %vm149, %v1131, 0
    %v1144 = vsel %vm149, %v1132, 0
    %v1147 = vsel %vm149, %v1133, 0
    %v1150 = vsel %vm149, %v1134, 0
    %1152 = vmatpush.msra.mxu0 0.0
    %1153 = vmatpush.msra.mxu0 0.0
    %1154 = vmatpush.msra.mxu0 0.0
    %1155 = vmatpush.msra.mxu0 0.0
    %1156 = vmatpush.msra.mxu0 0.0
    %1157 = vmatpush.msra.mxu0 0.0
    %1158 = vmatpush.msra.mxu0 0.0
    %1159 = vmatpush.msra.mxu0 0.0
    %1160 = vmatpush.msra.mxu0 0.0
    %1161 = vmatpush.msra.mxu0 0.0
    %1162 = vmatpush.msra.mxu0 0.0
    %1163 = vmatpush.msra.mxu0 0.0
    %1164 = vmatpush.msra.mxu0 %v1139
    %1165 = vmatpush.msra.mxu0 %v1138
    %1166 = vmatpush.msra.mxu0 %v1137
    %1167 = vmatpush.msra.mxu0 %v1136
    %1168 = vmatmul.f32.gmra.mxu0 %v1141
    %v1169 = vpop.f32.mrf.mxu0
    %v1170 = vadd.f32 0.0, %v1169
    %1171 = vmatmul.f32.gmra.mxu0 %v1144
    %v1172 = vpop.f32.mrf.mxu0
    %v1173 = vadd.f32 0.0, %v1172
    %1174 = vmatmul.f32.gmra.mxu0 %v1147
    %v1175 = vpop.f32.mrf.mxu0
    %v1176 = vadd.f32 0.0, %v1175
    %1177 = vmatmul.f32.gmra.mxu0 %v1150
    %v1178 = vpop.f32.mrf.mxu0
    %v1179 = vadd.f32 0.0, %v1178
    %1180 = vdwg.mxu0
    %v1181 = vadd.f32 %v1110, %v1170
    %v1182 = vadd.f32 %v1111, %v1173
    %v1183 = vadd.f32 %v1112, %v1176
    %v1184 = vadd.f32 %v1113, %v1179
    %v1185 = vrot.slane %v993, 6
    %v1186 = vrot.slane %v994, 6
    %v1187 = vrot.slane %v995, 6
    %v1188 = vrot.slane %v996, 6
    %vm1189 = vcmp.lt.s32.totalorder %v90, 2
    %v1190 = vsel %vm1189, %v1187, %v1188
    %v1191 = vsel %vm1189, %v1186, %v1187
    %v1192 = vsel %vm1189, %v1185, %v1186
    %v1193 = vsel %vm1189, %v1188, %v1185
    %vm1194 = vcmp.ge.s32.totalorder %v138, 2
    %vm1195 = vcmp.ge.s32.totalorder %v139, 2
    %vm1196 = vcmp.ge.s32.totalorder %v140, 2
    %vm1197 = vcmp.ge.s32.totalorder %v141, 2
    %v1198 = vsel %vm1194, 1.0, 0.0
    %v1199 = vsel %vm1195, 1.0, 0.0
    %v1200 = vsel %vm1196, 1.0, 0.0
    %v1201 = vsel %vm1197, 1.0, 0.0
    %v1202 = vmul.f32 %v1193, %v1198
    %v1203 = vmul.f32 %v1192, %v1199
    %v1204 = vmul.f32 %v1191, %v1200
    %v1205 = vmul.f32 %v1190, %v1201
    %s1206 = scalar_lea.vmem %s5, 64
    %v1207 = vld [vmem:[%s1206] sm:$0xff]
    %v1208 = vld [vmem:[%s1206 + $0x8] sm:$0xff]
    %v1209 = vld [vmem:[%s1206 + $0x10] sm:$0xff]
    %v1210 = vld [vmem:[%s1206 + $0x18] sm:$0xff]
    %v1212 = vsel %vm149, %v1202, 0
    %v1215 = vsel %vm149, %v1203, 0
    %v1218 = vsel %vm149, %v1204, 0
    %v1221 = vsel %vm149, %v1205, 0
    %1223 = vmatpush.msra.mxu0 0.0
    %1224 = vmatpush.msra.mxu0 0.0
    %1225 = vmatpush.msra.mxu0 0.0
    %1226 = vmatpush.msra.mxu0 0.0
    %1227 = vmatpush.msra.mxu0 0.0
    %1228 = vmatpush.msra.mxu0 0.0
    %1229 = vmatpush.msra.mxu0 0.0
    %1230 = vmatpush.msra.mxu0 0.0
    %1231 = vmatpush.msra.mxu0 0.0
    %1232 = vmatpush.msra.mxu0 0.0
    %1233 = vmatpush.msra.mxu0 0.0
    %1234 = vmatpush.msra.mxu0 0.0
    %1235 = vmatpush.msra.mxu0 %v1210
    %1236 = vmatpush.msra.mxu0 %v1209
    %1237 = vmatpush.msra.mxu0 %v1208
    %1238 = vmatpush.msra.mxu0 %v1207
    %1239 = vmatmul.f32.gmra.mxu0 %v1212
    %v1240 = vpop.f32.mrf.mxu0
    %v1241 = vadd.f32 0.0, %v1240
    %1242 = vmatmul.f32.gmra.mxu0 %v1215
    %v1243 = vpop.f32.mrf.mxu0
    %v1244 = vadd.f32 0.0, %v1243
    %1245 = vmatmul.f32.gmra.mxu0 %v1218
    %v1246 = vpop.f32.mrf.mxu0
    %v1247 = vadd.f32 0.0, %v1246
    %1248 = vmatmul.f32.gmra.mxu0 %v1221
    %v1249 = vpop.f32.mrf.mxu0
    %v1250 = vadd.f32 0.0, %v1249
    %1251 = vdwg.mxu0
    %v1252 = vadd.f32 %v1181, %v1241
    %v1253 = vadd.f32 %v1182, %v1244
    %v1254 = vadd.f32 %v1183, %v1247
    %v1255 = vadd.f32 %v1184, %v1250
    %v1256 = vrot.slane %v993, 7
    %v1257 = vrot.slane %v994, 7
    %v1258 = vrot.slane %v995, 7
    %v1259 = vrot.slane %v996, 7
    %vm1260 = vcmp.lt.s32.totalorder %v90, 1
    %v1261 = vsel %vm1260, %v1258, %v1259
    %v1262 = vsel %vm1260, %v1257, %v1258
    %v1263 = vsel %vm1260, %v1256, %v1257
    %v1264 = vsel %vm1260, %v1259, %v1256
    %vm1265 = vcmp.ge.s32.totalorder %v138, 1
    %vm1266 = vcmp.ge.s32.totalorder %v139, 1
    %vm1267 = vcmp.ge.s32.totalorder %v140, 1
    %vm1268 = vcmp.ge.s32.totalorder %v141, 1
    %v1269 = vsel %vm1265, 1.0, 0.0
    %v1270 = vsel %vm1266, 1.0, 0.0
    %v1271 = vsel %vm1267, 1.0, 0.0
    %v1272 = vsel %vm1268, 1.0, 0.0
    %v1273 = vmul.f32 %v1264, %v1269
    %v1274 = vmul.f32 %v1263, %v1270
    %v1275 = vmul.f32 %v1262, %v1271
    %v1276 = vmul.f32 %v1261, %v1272
    %s1277 = scalar_lea.vmem %s5, 96
    %v1278 = vld [vmem:[%s1277] sm:$0xff]
    %v1279 = vld [vmem:[%s1277 + $0x8] sm:$0xff]
    %v1280 = vld [vmem:[%s1277 + $0x10] sm:$0xff]
    %v1281 = vld [vmem:[%s1277 + $0x18] sm:$0xff]
    %v1283 = vsel %vm149, %v1273, 0
    %v1286 = vsel %vm149, %v1274, 0
    %v1289 = vsel %vm149, %v1275, 0
    %v1292 = vsel %vm149, %v1276, 0
    %1294 = vmatpush.msra.mxu0 0.0
    %1295 = vmatpush.msra.mxu0 0.0
    %1296 = vmatpush.msra.mxu0 0.0
    %1297 = vmatpush.msra.mxu0 0.0
    %1298 = vmatpush.msra.mxu0 0.0
    %1299 = vmatpush.msra.mxu0 0.0
    %1300 = vmatpush.msra.mxu0 0.0
    %1301 = vmatpush.msra.mxu0 0.0
    %1302 = vmatpush.msra.mxu0 0.0
    %1303 = vmatpush.msra.mxu0 0.0
    %1304 = vmatpush.msra.mxu0 0.0
    %1305 = vmatpush.msra.mxu0 0.0
    %1306 = vmatpush.msra.mxu0 %v1281
    %1307 = vmatpush.msra.mxu0 %v1280
    %1308 = vmatpush.msra.mxu0 %v1279
    %1309 = vmatpush.msra.mxu0 %v1278
    %1310 = vmatmul.f32.gmra.mxu0 %v1283
    %v1311 = vpop.f32.mrf.mxu0
    %v1312 = vadd.f32 0.0, %v1311
    %1313 = vmatmul.f32.gmra.mxu0 %v1286
    %v1314 = vpop.f32.mrf.mxu0
    %v1315 = vadd.f32 0.0, %v1314
    %1316 = vmatmul.f32.gmra.mxu0 %v1289
    %v1317 = vpop.f32.mrf.mxu0
    %v1318 = vadd.f32 0.0, %v1317
    %1319 = vmatmul.f32.gmra.mxu0 %v1292
    %v1320 = vpop.f32.mrf.mxu0
    %v1321 = vadd.f32 0.0, %v1320
    %1322 = vdwg.mxu0
    %v1323 = vadd.f32 %v1252, %v1312
    %v1324 = vadd.f32 %v1253, %v1315
    %v1325 = vadd.f32 %v1254, %v1318
    %v1326 = vadd.f32 %v1255, %v1321
    %v1327 = vrot.slane %v993, 1
    %v1328 = vrot.slane %v994, 1
    %v1329 = vrot.slane %v995, 1
    %v1330 = vrot.slane %v996, 1
    %vm1331 = vcmp.lt.s32.totalorder %v90, 7
    %v1332 = vsel %vm1331, %v1329, %v1330
    %v1333 = vsel %vm1331, %v1328, %v1329
    %v1334 = vsel %vm1331, %v1327, %v1328
    %v1335 = vsel %vm1331, %v1330, %v1327
    %vm1336 = vcmp.lt.s32.totalorder %v138, 15
    %vm1337 = vcmp.lt.s32.totalorder %v139, 15
    %vm1338 = vcmp.lt.s32.totalorder %v140, 15
    %vm1339 = vcmp.lt.s32.totalorder %v141, 15
    %v1340 = vsel %vm1336, 1.0, 0.0
    %v1341 = vsel %vm1337, 1.0, 0.0
    %v1342 = vsel %vm1338, 1.0, 0.0
    %v1343 = vsel %vm1339, 1.0, 0.0
    %v1344 = vmul.f32 %v1334, %v1340
    %v1345 = vmul.f32 %v1333, %v1341
    %v1346 = vmul.f32 %v1332, %v1342
    %v1347 = vmul.f32 %v1335, %v1343
    %s1348 = scalar_lea.vmem %s5, 160
    %v1349 = vld [vmem:[%s1348] sm:$0xff]
    %v1350 = vld [vmem:[%s1348 + $0x8] sm:$0xff]
    %v1351 = vld [vmem:[%s1348 + $0x10] sm:$0xff]
    %v1352 = vld [vmem:[%s1348 + $0x18] sm:$0xff]
    %v1354 = vsel %vm149, %v1344, 0
    %v1357 = vsel %vm149, %v1345, 0
    %v1360 = vsel %vm149, %v1346, 0
    %v1363 = vsel %vm149, %v1347, 0
    %1365 = vmatpush.msra.mxu0 0.0
    %1366 = vmatpush.msra.mxu0 0.0
    %1367 = vmatpush.msra.mxu0 0.0
    %1368 = vmatpush.msra.mxu0 0.0
    %1369 = vmatpush.msra.mxu0 0.0
    %1370 = vmatpush.msra.mxu0 0.0
    %1371 = vmatpush.msra.mxu0 0.0
    %1372 = vmatpush.msra.mxu0 0.0
    %1373 = vmatpush.msra.mxu0 0.0
    %1374 = vmatpush.msra.mxu0 0.0
    %1375 = vmatpush.msra.mxu0 0.0
    %1376 = vmatpush.msra.mxu0 0.0
    %1377 = vmatpush.msra.mxu0 %v1352
    %1378 = vmatpush.msra.mxu0 %v1351
    %1379 = vmatpush.msra.mxu0 %v1350
    %1380 = vmatpush.msra.mxu0 %v1349
    %1381 = vmatmul.f32.gmra.mxu0 %v1354
    %v1382 = vpop.f32.mrf.mxu0
    %v1383 = vadd.f32 0.0, %v1382
    %1384 = vmatmul.f32.gmra.mxu0 %v1357
    %v1385 = vpop.f32.mrf.mxu0
    %v1386 = vadd.f32 0.0, %v1385
    %1387 = vmatmul.f32.gmra.mxu0 %v1360
    %v1388 = vpop.f32.mrf.mxu0
    %v1389 = vadd.f32 0.0, %v1388
    %1390 = vmatmul.f32.gmra.mxu0 %v1363
    %v1391 = vpop.f32.mrf.mxu0
    %v1392 = vadd.f32 0.0, %v1391
    %1393 = vdwg.mxu0
    %v1394 = vadd.f32 %v1323, %v1383
    %v1395 = vadd.f32 %v1324, %v1386
    %v1396 = vadd.f32 %v1325, %v1389
    %v1397 = vadd.f32 %v1326, %v1392
    %v1398 = vrot.slane %v993, 2
    %v1399 = vrot.slane %v994, 2
    %v1400 = vrot.slane %v995, 2
    %v1401 = vrot.slane %v996, 2
    %vm1402 = vcmp.lt.s32.totalorder %v90, 6
    %v1403 = vsel %vm1402, %v1400, %v1401
    %v1404 = vsel %vm1402, %v1399, %v1400
    %v1405 = vsel %vm1402, %v1398, %v1399
    %v1406 = vsel %vm1402, %v1401, %v1398
    %vm1407 = vcmp.lt.s32.totalorder %v138, 14
    %vm1408 = vcmp.lt.s32.totalorder %v139, 14
    %vm1409 = vcmp.lt.s32.totalorder %v140, 14
    %vm1410 = vcmp.lt.s32.totalorder %v141, 14
    %v1411 = vsel %vm1407, 1.0, 0.0
    %v1412 = vsel %vm1408, 1.0, 0.0
    %v1413 = vsel %vm1409, 1.0, 0.0
    %v1414 = vsel %vm1410, 1.0, 0.0
    %v1415 = vmul.f32 %v1405, %v1411
    %v1416 = vmul.f32 %v1404, %v1412
    %v1417 = vmul.f32 %v1403, %v1413
    %v1418 = vmul.f32 %v1406, %v1414
    %s1419 = scalar_lea.vmem %s5, 192
    %v1420 = vld [vmem:[%s1419] sm:$0xff]
    %v1421 = vld [vmem:[%s1419 + $0x8] sm:$0xff]
    %v1422 = vld [vmem:[%s1419 + $0x10] sm:$0xff]
    %v1423 = vld [vmem:[%s1419 + $0x18] sm:$0xff]
    %v1425 = vsel %vm149, %v1415, 0
    %v1428 = vsel %vm149, %v1416, 0
    %v1431 = vsel %vm149, %v1417, 0
    %v1434 = vsel %vm149, %v1418, 0
    %1436 = vmatpush.msra.mxu0 0.0
    %1437 = vmatpush.msra.mxu0 0.0
    %1438 = vmatpush.msra.mxu0 0.0
    %1439 = vmatpush.msra.mxu0 0.0
    %1440 = vmatpush.msra.mxu0 0.0
    %1441 = vmatpush.msra.mxu0 0.0
    %1442 = vmatpush.msra.mxu0 0.0
    %1443 = vmatpush.msra.mxu0 0.0
    %1444 = vmatpush.msra.mxu0 0.0
    %1445 = vmatpush.msra.mxu0 0.0
    %1446 = vmatpush.msra.mxu0 0.0
    %1447 = vmatpush.msra.mxu0 0.0
    %1448 = vmatpush.msra.mxu0 %v1423
    %1449 = vmatpush.msra.mxu0 %v1422
    %1450 = vmatpush.msra.mxu0 %v1421
    %1451 = vmatpush.msra.mxu0 %v1420
    %1452 = vmatmul.f32.gmra.mxu0 %v1425
    %v1453 = vpop.f32.mrf.mxu0
    %v1454 = vadd.f32 0.0, %v1453
    %1455 = vmatmul.f32.gmra.mxu0 %v1428
    %v1456 = vpop.f32.mrf.mxu0
    %v1457 = vadd.f32 0.0, %v1456
    %1458 = vmatmul.f32.gmra.mxu0 %v1431
    %v1459 = vpop.f32.mrf.mxu0
    %v1460 = vadd.f32 0.0, %v1459
    %1461 = vmatmul.f32.gmra.mxu0 %v1434
    %v1462 = vpop.f32.mrf.mxu0
    %v1463 = vadd.f32 0.0, %v1462
    %1464 = vdwg.mxu0
    %v1465 = vadd.f32 %v1394, %v1454
    %v1466 = vadd.f32 %v1395, %v1457
    %v1467 = vadd.f32 %v1396, %v1460
    %v1468 = vadd.f32 %v1397, %v1463
    %v1469 = vrot.slane %v993, 3
    %v1470 = vrot.slane %v994, 3
    %v1471 = vrot.slane %v995, 3
    %v1472 = vrot.slane %v996, 3
    %vm1473 = vcmp.lt.s32.totalorder %v90, 5
    %v1474 = vsel %vm1473, %v1471, %v1472
    %v1475 = vsel %vm1473, %v1470, %v1471
    %v1476 = vsel %vm1473, %v1469, %v1470
    %v1477 = vsel %vm1473, %v1472, %v1469
    %vm1478 = vcmp.lt.s32.totalorder %v138, 13
    %vm1479 = vcmp.lt.s32.totalorder %v139, 13
    %vm1480 = vcmp.lt.s32.totalorder %v140, 13
    %vm1481 = vcmp.lt.s32.totalorder %v141, 13
    %v1482 = vsel %vm1478, 1.0, 0.0
    %v1483 = vsel %vm1479, 1.0, 0.0
    %v1484 = vsel %vm1480, 1.0, 0.0
    %v1485 = vsel %vm1481, 1.0, 0.0
    %v1486 = vmul.f32 %v1476, %v1482
    %v1487 = vmul.f32 %v1475, %v1483
    %v1488 = vmul.f32 %v1474, %v1484
    %v1489 = vmul.f32 %v1477, %v1485
    %s1490 = scalar_lea.vmem %s5, 224
    %v1491 = vld [vmem:[%s1490] sm:$0xff]
    %v1492 = vld [vmem:[%s1490 + $0x8] sm:$0xff]
    %v1493 = vld [vmem:[%s1490 + $0x10] sm:$0xff]
    %v1494 = vld [vmem:[%s1490 + $0x18] sm:$0xff]
    %v1496 = vsel %vm149, %v1486, 0
    %v1499 = vsel %vm149, %v1487, 0
    %v1502 = vsel %vm149, %v1488, 0
    %v1505 = vsel %vm149, %v1489, 0
    %1507 = vmatpush.msra.mxu0 0.0
    %1508 = vmatpush.msra.mxu0 0.0
    %1509 = vmatpush.msra.mxu0 0.0
    %1510 = vmatpush.msra.mxu0 0.0
    %1511 = vmatpush.msra.mxu0 0.0
    %1512 = vmatpush.msra.mxu0 0.0
    %1513 = vmatpush.msra.mxu0 0.0
    %1514 = vmatpush.msra.mxu0 0.0
    %1515 = vmatpush.msra.mxu0 0.0
    %1516 = vmatpush.msra.mxu0 0.0
    %1517 = vmatpush.msra.mxu0 0.0
    %1518 = vmatpush.msra.mxu0 0.0
    %1519 = vmatpush.msra.mxu0 %v1494
    %1520 = vmatpush.msra.mxu0 %v1493
    %1521 = vmatpush.msra.mxu0 %v1492
    %1522 = vmatpush.msra.mxu0 %v1491
    %1523 = vmatmul.f32.gmra.mxu0 %v1496
    %v1524 = vpop.f32.mrf.mxu0
    %v1525 = vadd.f32 0.0, %v1524
    %1526 = vmatmul.f32.gmra.mxu0 %v1499
    %v1527 = vpop.f32.mrf.mxu0
    %v1528 = vadd.f32 0.0, %v1527
    %1529 = vmatmul.f32.gmra.mxu0 %v1502
    %v1530 = vpop.f32.mrf.mxu0
    %v1531 = vadd.f32 0.0, %v1530
    %1532 = vmatmul.f32.gmra.mxu0 %v1505
    %v1533 = vpop.f32.mrf.mxu0
    %v1534 = vadd.f32 0.0, %v1533
    %1535 = vdwg.mxu0
    %v1536 = vadd.f32 %v1465, %v1525
    %v1537 = vadd.f32 %v1466, %v1528
    %v1538 = vadd.f32 %v1467, %v1531
    %v1539 = vadd.f32 %v1468, %v1534
    %vm1540 = vcmp.lt.s32.totalorder %v138, 12
    %vm1541 = vcmp.lt.s32.totalorder %v139, 12
    %vm1542 = vcmp.lt.s32.totalorder %v140, 12
    %vm1543 = vcmp.lt.s32.totalorder %v141, 12
    %v1544 = vsel %vm1540, 1.0, 0.0
    %v1545 = vsel %vm1541, 1.0, 0.0
    %v1546 = vsel %vm1542, 1.0, 0.0
    %v1547 = vsel %vm1543, 1.0, 0.0
    %v1548 = vmul.f32 %v1051, %v1544
    %v1549 = vmul.f32 %v1050, %v1545
    %v1550 = vmul.f32 %v1049, %v1546
    %v1551 = vmul.f32 %v1052, %v1547
    %s1552 = scalar_lea.vmem %s5, 256
    %v1553 = vld [vmem:[%s1552] sm:$0xff]
    %v1554 = vld [vmem:[%s1552 + $0x8] sm:$0xff]
    %v1555 = vld [vmem:[%s1552 + $0x10] sm:$0xff]
    %v1556 = vld [vmem:[%s1552 + $0x18] sm:$0xff]
    %v1558 = vsel %vm149, %v1548, 0
    %v1561 = vsel %vm149, %v1549, 0
    %v1564 = vsel %vm149, %v1550, 0
    %v1567 = vsel %vm149, %v1551, 0
    %1569 = vmatpush.msra.mxu0 0.0
    %1570 = vmatpush.msra.mxu0 0.0
    %1571 = vmatpush.msra.mxu0 0.0
    %1572 = vmatpush.msra.mxu0 0.0
    %1573 = vmatpush.msra.mxu0 0.0
    %1574 = vmatpush.msra.mxu0 0.0
    %1575 = vmatpush.msra.mxu0 0.0
    %1576 = vmatpush.msra.mxu0 0.0
    %1577 = vmatpush.msra.mxu0 0.0
    %1578 = vmatpush.msra.mxu0 0.0
    %1579 = vmatpush.msra.mxu0 0.0
    %1580 = vmatpush.msra.mxu0 0.0
    %1581 = vmatpush.msra.mxu0 %v1556
    %1582 = vmatpush.msra.mxu0 %v1555
    %1583 = vmatpush.msra.mxu0 %v1554
    %1584 = vmatpush.msra.mxu0 %v1553
    %1585 = vmatmul.f32.gmra.mxu0 %v1558
    %v1586 = vpop.f32.mrf.mxu0
    %v1587 = vadd.f32 0.0, %v1586
    %1588 = vmatmul.f32.gmra.mxu0 %v1561
    %v1589 = vpop.f32.mrf.mxu0
    %v1590 = vadd.f32 0.0, %v1589
    %1591 = vmatmul.f32.gmra.mxu0 %v1564
    %v1592 = vpop.f32.mrf.mxu0
    %v1593 = vadd.f32 0.0, %v1592
    %1594 = vmatmul.f32.gmra.mxu0 %v1567
    %v1595 = vpop.f32.mrf.mxu0
    %v1596 = vadd.f32 0.0, %v1595
    %1597 = vdwg.mxu0
    %v1598 = vadd.f32 %v1536, %v1587
    %v1599 = vadd.f32 %v1537, %v1590
    %v1600 = vadd.f32 %v1538, %v1593
    %v1601 = vadd.f32 %v1539, %v1596
    %v1602 = vmax.f32 %v1598, 0.0
    %v1603 = vmax.f32 %v1599, 0.0
    %v1604 = vmax.f32 %v1600, 0.0
    %v1605 = vmax.f32 %v1601, 0.0
    %v1606 = vld [vmem:[%s6] sm:$0xff]
    %v1607 = vld [vmem:[%s6 + $0x8] sm:$0xff]
    %v1608 = vld [vmem:[%s6 + $0x10] sm:$0xff]
    %v1609 = vld [vmem:[%s6 + $0x18] sm:$0xff]
    %v1610 = vld [vmem:[%s6 + $0x20] sm:$0xff]
    %v1611 = vld [vmem:[%s6 + $0x28] sm:$0xff]
    %v1612 = vld [vmem:[%s6 + $0x30] sm:$0xff]
    %v1613 = vld [vmem:[%s6 + $0x38] sm:$0xff]
    %v1614 = vperm.slane %v147, 0
    %vm1615 = vcmask 523264
    %v1617 = vsel %vm1615, %v1602, 0
    %v1620 = vsel %vm1615, %v1603, 0
    %v1623 = vsel %vm1615, %v1604, 0
    %v1626 = vsel %vm1615, %v1605, 0
    %1628 = vmatpush.msra.mxu0 0.0
    %1629 = vmatpush.msra.mxu0 0.0
    %1630 = vmatpush.msra.mxu0 0.0
    %1631 = vmatpush.msra.mxu0 0.0
    %1632 = vmatpush.msra.mxu0 0.0
    %1633 = vmatpush.msra.mxu0 0.0
    %1634 = vmatpush.msra.mxu0 0.0
    %1635 = vmatpush.msra.mxu0 0.0
    %1636 = vmatpush.msra.mxu0 %v1613
    %1637 = vmatpush.msra.mxu0 %v1612
    %1638 = vmatpush.msra.mxu0 %v1611
    %1639 = vmatpush.msra.mxu0 %v1610
    %1640 = vmatpush.msra.mxu0 %v1609
    %1641 = vmatpush.msra.mxu0 %v1608
    %1642 = vmatpush.msra.mxu0 %v1607
    %1643 = vmatpush.msra.mxu0 %v1606
    %1644 = vmatmul.f32.gmra.mxu0 %v1617
    %v1645 = vpop.f32.mrf.mxu0
    %v1646 = vadd.f32 %v1614, %v1645
    %1647 = vmatmul.f32.gmra.mxu0 %v1620
    %v1648 = vpop.f32.mrf.mxu0
    %v1649 = vadd.f32 %v1614, %v1648
    %1650 = vmatmul.f32.gmra.mxu0 %v1623
    %v1651 = vpop.f32.mrf.mxu0
    %v1652 = vadd.f32 %v1614, %v1651
    %1653 = vmatmul.f32.gmra.mxu0 %v1626
    %v1654 = vpop.f32.mrf.mxu0
    %v1655 = vadd.f32 %v1614, %v1654
    %1656 = vdwg.mxu0
    %v1657 = vadd.f32 %v1646, %v993
    %v1658 = vadd.f32 %v1649, %v994
    %v1659 = vadd.f32 %v1652, %v995
    %v1660 = vadd.f32 %v1655, %v996
    %v1661 = vmul.f32 %v1657, %v976
    %v1662 = vmul.f32 %v1658, %v981
    %v1663 = vmul.f32 %v1659, %v986
    %v1664 = vmul.f32 %v1660, %v991
    %s1665 = scalar_lea.vmem %s7, 16
    %v1666 = vld [vmem:[%s1665] sm:$0x1]
    %v1667 = vld [vmem:[%s1665 + $0x1] sm:$0x1]
    %v1668 = vld [vmem:[%s1665 + $0x2] sm:$0x1]
    %v1669 = vld [vmem:[%s1665 + $0x3] sm:$0x1]
    %v1670 = vld [vmem:[%s1665 + $0x4] sm:$0x1]
    %v1671 = vld [vmem:[%s1665 + $0x5] sm:$0x1]
    %v1672 = vld [vmem:[%s1665 + $0x6] sm:$0x1]
    %v1673 = vsel %vm149, %v1661, 0.0
    %1674 = vadd.xlane.f32.xlu0 %v1673
    %v1675 = vpop.xlane.xlu0 %1674
    %v1676 = vsel %vm149, %v1662, 0.0
    %1677 = vadd.xlane.f32.xlu0 %v1676
    %v1678 = vpop.xlane.xlu0 %1677
    %v1679 = vsel %vm149, %v1663, 0.0
    %1680 = vadd.xlane.f32.xlu0 %v1679
    %v1681 = vpop.xlane.xlu0 %1680
    %v1682 = vsel %vm149, %v1664, 0.0
    %1683 = vadd.xlane.f32.xlu0 %v1682
    %v1684 = vpop.xlane.xlu0 %1683
    %v1685 = vmul.f32 %v1675, %v168
    %v1686 = vmul.f32 %v1678, %v168
    %v1687 = vmul.f32 %v1681, %v168
    %v1688 = vmul.f32 %v1684, %v168
    %v1689 = vsub.f32 %v1661, %v1685
    %v1690 = vsub.f32 %v1662, %v1686
    %v1691 = vsub.f32 %v1663, %v1687
    %v1692 = vsub.f32 %v1664, %v1688
    %v1693 = vmul.f32 %v1689, %v1689
    %v1694 = vmul.f32 %v1690, %v1690
    %v1695 = vmul.f32 %v1691, %v1691
    %v1696 = vmul.f32 %v1692, %v1692
    %v1697 = vsel %vm149, %v1693, 0.0
    %1698 = vadd.xlane.f32.xlu0 %v1697
    %v1699 = vpop.xlane.xlu0 %1698
    %v1700 = vsel %vm149, %v1694, 0.0
    %1701 = vadd.xlane.f32.xlu0 %v1700
    %v1702 = vpop.xlane.xlu0 %1701
    %v1703 = vsel %vm149, %v1695, 0.0
    %1704 = vadd.xlane.f32.xlu0 %v1703
    %v1705 = vpop.xlane.xlu0 %1704
    %v1706 = vsel %vm149, %v1696, 0.0
    %1707 = vadd.xlane.f32.xlu0 %v1706
    %v1708 = vpop.xlane.xlu0 %1707
    %v1709 = vmul.f32 %v1699, %v168
    %v1710 = vmul.f32 %v1702, %v168
    %v1711 = vmul.f32 %v1705, %v168
    %v1712 = vmul.f32 %v1708, %v168
    %v1713 = vadd.f32 %v1709, 1e-05
    %v1714 = vadd.f32 %v1710, 1e-05
    %v1715 = vadd.f32 %v1711, 1e-05
    %v1716 = vadd.f32 %v1712, 1e-05
    %v1717 = vrsqrt.pop %v1713
    %v1718 = vmul.f32 %v1717, %v1713
    %v1719 = vmul.f32 %v1718, %v1717
    %v1720 = vmul.f32 0.5, %v1719
    %v1721 = vsub.f32 1.5, %v1720
    %v1722 = vmul.f32 %v1717, %v1721
    %vm1723 = vweird.f32 %v1713
    %vm1724 = vweird.f32 %v1717
    %vm1725 = vmor %vm1723, %vm1724
    %v1726 = vsel %vm1725, %v1717, %v1722
    %v1727 = vrsqrt.pop %v1714
    %v1728 = vmul.f32 %v1727, %v1714
    %v1729 = vmul.f32 %v1728, %v1727
    %v1730 = vmul.f32 0.5, %v1729
    %v1731 = vsub.f32 1.5, %v1730
    %v1732 = vmul.f32 %v1727, %v1731
    %vm1733 = vweird.f32 %v1714
    %vm1734 = vweird.f32 %v1727
    %vm1735 = vmor %vm1733, %vm1734
    %v1736 = vsel %vm1735, %v1727, %v1732
    %v1737 = vrsqrt.pop %v1715
    %v1738 = vmul.f32 %v1737, %v1715
    %v1739 = vmul.f32 %v1738, %v1737
    %v1740 = vmul.f32 0.5, %v1739
    %v1741 = vsub.f32 1.5, %v1740
    %v1742 = vmul.f32 %v1737, %v1741
    %vm1743 = vweird.f32 %v1715
    %vm1744 = vweird.f32 %v1737
    %vm1745 = vmor %vm1743, %vm1744
    %v1746 = vsel %vm1745, %v1737, %v1742
    %v1747 = vrsqrt.pop %v1716
    %v1748 = vmul.f32 %v1747, %v1716
    %v1749 = vmul.f32 %v1748, %v1747
    %v1750 = vmul.f32 0.5, %v1749
    %v1751 = vsub.f32 1.5, %v1750
    %v1752 = vmul.f32 %v1747, %v1751
    %vm1753 = vweird.f32 %v1716
    %vm1754 = vweird.f32 %v1747
    %vm1755 = vmor %vm1753, %vm1754
    %v1756 = vsel %vm1755, %v1747, %v1752
    %v1757 = vmul.f32 %v1689, %v1726
    %v1758 = vmul.f32 %v1690, %v1736
    %v1759 = vmul.f32 %v1691, %v1746
    %v1760 = vmul.f32 %v1692, %v1756
    %v1761 = vperm.slane %v1666, 0
    %v1762 = vmul.f32 %v1757, %v1761
    %v1763 = vmul.f32 %v1758, %v1761
    %v1764 = vmul.f32 %v1759, %v1761
    %v1765 = vmul.f32 %v1760, %v1761
    %v1766 = vperm.slane %v1667, 0
    %v1767 = vadd.f32 %v1762, %v1766
    %v1768 = vadd.f32 %v1763, %v1766
    %v1769 = vadd.f32 %v1764, %v1766
    %v1770 = vadd.f32 %v1765, %v1766
    %v1771 = vperm.slane %v1670, 0
    %v1772 = vadd.f32 %v1767, %v1771
    %v1773 = vadd.f32 %v1768, %v1771
    %v1774 = vadd.f32 %v1769, %v1771
    %v1775 = vadd.f32 %v1770, %v1771
    %v1776 = vld [vmem:[%s1665 + $0x7] sm:$0x1]
    %v1777 = vld [vmem:[%s1665 + $0x9] sm:$0x1]
    %v1778 = vld [vmem:[%s1665 + $0xb] sm:$0x1]
    %s1779 = scalar_lea.vmem %s3, 192
    %v1780 = vld [vmem:[%s1779] sm:$0xff]
    %v1781 = vld [vmem:[%s1779 + $0x8] sm:$0xff]
    %v1782 = vld [vmem:[%s1779 + $0x10] sm:$0xff]
    %v1783 = vld [vmem:[%s1779 + $0x18] sm:$0xff]
    %v1784 = vperm.slane %v1776, 0
    %v1786 = vsel %vm149, %v1767, 0
    %v1789 = vsel %vm149, %v1768, 0
    %v1792 = vsel %vm149, %v1769, 0
    %v1795 = vsel %vm149, %v1770, 0
    %1797 = vmatpush.msra.mxu0 0.0
    %1798 = vmatpush.msra.mxu0 0.0
    %1799 = vmatpush.msra.mxu0 0.0
    %1800 = vmatpush.msra.mxu0 0.0
    %1801 = vmatpush.msra.mxu0 0.0
    %1802 = vmatpush.msra.mxu0 0.0
    %1803 = vmatpush.msra.mxu0 0.0
    %1804 = vmatpush.msra.mxu0 0.0
    %1805 = vmatpush.msra.mxu0 0.0
    %1806 = vmatpush.msra.mxu0 0.0
    %1807 = vmatpush.msra.mxu0 0.0
    %1808 = vmatpush.msra.mxu0 0.0
    %1809 = vmatpush.msra.mxu0 %v1783
    %1810 = vmatpush.msra.mxu0 %v1782
    %1811 = vmatpush.msra.mxu0 %v1781
    %1812 = vmatpush.msra.mxu0 %v1780
    %1813 = vmatmul.f32.gmra.mxu0 %v1786
    %v1814 = vpop.f32.mrf.mxu0
    %v1815 = vadd.f32 %v1784, %v1814
    %1816 = vmatmul.f32.gmra.mxu0 %v1789
    %v1817 = vpop.f32.mrf.mxu0
    %v1818 = vadd.f32 %v1784, %v1817
    %1819 = vmatmul.f32.gmra.mxu0 %v1792
    %v1820 = vpop.f32.mrf.mxu0
    %v1821 = vadd.f32 %v1784, %v1820
    %1822 = vmatmul.f32.gmra.mxu0 %v1795
    %v1823 = vpop.f32.mrf.mxu0
    %v1824 = vadd.f32 %v1784, %v1823
    %1825 = vdwg.mxu0
    %s1826 = scalar_lea.vmem %s3, 256
    %v1827 = vld [vmem:[%s1826] sm:$0xff]
    %v1828 = vld [vmem:[%s1826 + $0x8] sm:$0xff]
    %v1829 = vld [vmem:[%s1826 + $0x10] sm:$0xff]
    %v1830 = vld [vmem:[%s1826 + $0x18] sm:$0xff]
    %v1831 = vperm.slane %v1777, 0
    %1832 = vmatpush.msra.mxu0 0.0
    %1833 = vmatpush.msra.mxu0 0.0
    %1834 = vmatpush.msra.mxu0 0.0
    %1835 = vmatpush.msra.mxu0 0.0
    %1836 = vmatpush.msra.mxu0 0.0
    %1837 = vmatpush.msra.mxu0 0.0
    %1838 = vmatpush.msra.mxu0 0.0
    %1839 = vmatpush.msra.mxu0 0.0
    %1840 = vmatpush.msra.mxu0 0.0
    %1841 = vmatpush.msra.mxu0 0.0
    %1842 = vmatpush.msra.mxu0 0.0
    %1843 = vmatpush.msra.mxu0 0.0
    %1844 = vmatpush.msra.mxu0 %v1830
    %1845 = vmatpush.msra.mxu0 %v1829
    %1846 = vmatpush.msra.mxu0 %v1828
    %1847 = vmatpush.msra.mxu0 %v1827
    %1848 = vmatmul.f32.gmra.mxu0 %v1786
    %v1849 = vpop.f32.mrf.mxu0
    %v1850 = vadd.f32 %v1831, %v1849
    %1851 = vmatmul.f32.gmra.mxu0 %v1789
    %v1852 = vpop.f32.mrf.mxu0
    %v1853 = vadd.f32 %v1831, %v1852
    %1854 = vmatmul.f32.gmra.mxu0 %v1792
    %v1855 = vpop.f32.mrf.mxu0
    %v1856 = vadd.f32 %v1831, %v1855
    %1857 = vmatmul.f32.gmra.mxu0 %v1795
    %v1858 = vpop.f32.mrf.mxu0
    %v1859 = vadd.f32 %v1831, %v1858
    %1860 = vdwg.mxu0
    %s1861 = scalar_lea.vmem %s3, 320
    %v1862 = vld [vmem:[%s1861] sm:$0xff]
    %v1863 = vld [vmem:[%s1861 + $0x8] sm:$0xff]
    %v1864 = vld [vmem:[%s1861 + $0x10] sm:$0xff]
    %v1865 = vld [vmem:[%s1861 + $0x18] sm:$0xff]
    %v1866 = vperm.slane %v1778, 0
    %1867 = vmatpush.msra.mxu0 0.0
    %1868 = vmatpush.msra.mxu0 0.0
    %1869 = vmatpush.msra.mxu0 0.0
    %1870 = vmatpush.msra.mxu0 0.0
    %1871 = vmatpush.msra.mxu0 0.0
    %1872 = vmatpush.msra.mxu0 0.0
    %1873 = vmatpush.msra.mxu0 0.0
    %1874 = vmatpush.msra.mxu0 0.0
    %1875 = vmatpush.msra.mxu0 0.0
    %1876 = vmatpush.msra.mxu0 0.0
    %1877 = vmatpush.msra.mxu0 0.0
    %1878 = vmatpush.msra.mxu0 0.0
    %1879 = vmatpush.msra.mxu0 %v1865
    %1880 = vmatpush.msra.mxu0 %v1864
    %1881 = vmatpush.msra.mxu0 %v1863
    %1882 = vmatpush.msra.mxu0 %v1862
    %1883 = vmatmul.f32.gmra.mxu0 %v1786
    %v1884 = vpop.f32.mrf.mxu0
    %v1885 = vadd.f32 %v1866, %v1884
    %1886 = vmatmul.f32.gmra.mxu0 %v1789
    %v1887 = vpop.f32.mrf.mxu0
    %v1888 = vadd.f32 %v1866, %v1887
    %1889 = vmatmul.f32.gmra.mxu0 %v1792
    %v1890 = vpop.f32.mrf.mxu0
    %v1891 = vadd.f32 %v1866, %v1890
    %1892 = vmatmul.f32.gmra.mxu0 %v1795
    %v1893 = vpop.f32.mrf.mxu0
    %v1894 = vadd.f32 %v1866, %v1893
    %1895 = vdwg.mxu0
    %v1897 = vsel %vm379, %v1815, 0
    %v1900 = vsel %vm379, %v1818, 0
    %v1903 = vsel %vm379, %v1821, 0
    %v1906 = vsel %vm379, %v1824, 0
    %v1909 = vsel %vm379, %v1850, 0
    %v1912 = vsel %vm379, %v1853, 0
    %v1915 = vsel %vm379, %v1856, 0
    %v1918 = vsel %vm379, %v1859, 0
    %1920 = vmatpush.xpose.msra.mxu0 0.0
    %1921 = vmatpush.xpose.msra.mxu0 0.0
    %1922 = vmatpush.xpose.msra.mxu0 0.0
    %1923 = vmatpush.xpose.msra.mxu0 0.0
    %1924 = vmatpush.xpose.msra.mxu0 0.0
    %1925 = vmatpush.xpose.msra.mxu0 0.0
    %1926 = vmatpush.xpose.msra.mxu0 0.0
    %1927 = vmatpush.xpose.msra.mxu0 0.0
    %1928 = vmatpush.xpose.msra.mxu0 0.0
    %1929 = vmatpush.xpose.msra.mxu0 0.0
    %1930 = vmatpush.xpose.msra.mxu0 0.0
    %1931 = vmatpush.xpose.msra.mxu0 0.0
    %1932 = vmatpush.xpose.msra.mxu0 %v1918
    %1933 = vmatpush.xpose.msra.mxu0 %v1915
    %1934 = vmatpush.xpose.msra.mxu0 %v1912
    %1935 = vmatpush.xpose.msra.mxu0 %v1909
    %1936 = vmatmul.f32.gmra.mxu0 %v1897
    %v1937 = vpop.f32.mrf.mxu0
    %v1938 = vadd.f32 0.0, %v1937
    %1939 = vmatmul.f32.gmra.mxu0 %v1900
    %v1940 = vpop.f32.mrf.mxu0
    %v1941 = vadd.f32 0.0, %v1940
    %1942 = vmatmul.f32.gmra.mxu0 %v1903
    %v1943 = vpop.f32.mrf.mxu0
    %v1944 = vadd.f32 0.0, %v1943
    %1945 = vmatmul.f32.gmra.mxu0 %v1906
    %v1946 = vpop.f32.mrf.mxu0
    %v1947 = vadd.f32 0.0, %v1946
    %1948 = vdwg.mxu0
    %v1949 = vmul.f32 %v1938, 0.25
    %v1950 = vmul.f32 %v1941, 0.25
    %v1951 = vmul.f32 %v1944, 0.25
    %v1952 = vmul.f32 %v1947, 0.25
    %v1953 = vadd.f32 %v1949, %v81
    %v1954 = vadd.f32 %v1950, %v82
    %v1955 = vadd.f32 %v1951, %v83
    %v1956 = vadd.f32 %v1952, %v84
    %v1957 = vsel %vm149, %v1953, -inf
    %1958 = vmax.xlane.f32.xlu0 %v1957
    %v1959 = vpop.xlane.xlu0 %1958
    %v1960 = vsel %vm149, %v1954, -inf
    %1961 = vmax.xlane.f32.xlu0 %v1960
    %v1962 = vpop.xlane.xlu0 %1961
    %v1963 = vsel %vm149, %v1955, -inf
    %1964 = vmax.xlane.f32.xlu0 %v1963
    %v1965 = vpop.xlane.xlu0 %1964
    %v1966 = vsel %vm149, %v1956, -inf
    %1967 = vmax.xlane.f32.xlu0 %v1966
    %v1968 = vpop.xlane.xlu0 %1967
    %v1969 = vsub.f32 %v1953, %v1959
    %v1970 = vsub.f32 %v1954, %v1962
    %v1971 = vsub.f32 %v1955, %v1965
    %v1972 = vsub.f32 %v1956, %v1968
    %v1973 = vmul.f32 %v1969, 1.442695
    %v1974 = vpow.pop %v1973
    %v1975 = vmul.f32 %v1970, 1.442695
    %v1976 = vpow.pop %v1975
    %v1977 = vmul.f32 %v1971, 1.442695
    %v1978 = vpow.pop %v1977
    %v1979 = vmul.f32 %v1972, 1.442695
    %v1980 = vpow.pop %v1979
    %v1981 = vsel %vm149, %v1974, 0.0
    %1982 = vadd.xlane.f32.xlu0 %v1981
    %v1983 = vpop.xlane.xlu0 %1982
    %v1984 = vsel %vm149, %v1976, 0.0
    %1985 = vadd.xlane.f32.xlu0 %v1984
    %v1986 = vpop.xlane.xlu0 %1985
    %v1987 = vsel %vm149, %v1978, 0.0
    %1988 = vadd.xlane.f32.xlu0 %v1987
    %v1989 = vpop.xlane.xlu0 %1988
    %v1990 = vsel %vm149, %v1980, 0.0
    %1991 = vadd.xlane.f32.xlu0 %v1990
    %v1992 = vpop.xlane.xlu0 %1991
    %v1993 = vrcp.pop %v1983
    %v1994 = vrcp.pop %v1986
    %v1995 = vrcp.pop %v1989
    %v1996 = vrcp.pop %v1992
    %v1997 = vmul.f32 %v1974, %v1993
    %v1998 = vmul.f32 %v1976, %v1994
    %v1999 = vmul.f32 %v1978, %v1995
    %v2000 = vmul.f32 %v1980, %v1996
    %v2002 = vsel %vm149, %v1997, 0
    %v2005 = vsel %vm149, %v1998, 0
    %v2008 = vsel %vm149, %v1999, 0
    %v2011 = vsel %vm149, %v2000, 0
    %2013 = vmatpush.msra.mxu0 0.0
    %2014 = vmatpush.msra.mxu0 0.0
    %2015 = vmatpush.msra.mxu0 0.0
    %2016 = vmatpush.msra.mxu0 0.0
    %2017 = vmatpush.msra.mxu0 0.0
    %2018 = vmatpush.msra.mxu0 0.0
    %2019 = vmatpush.msra.mxu0 0.0
    %2020 = vmatpush.msra.mxu0 0.0
    %2021 = vmatpush.msra.mxu0 0.0
    %2022 = vmatpush.msra.mxu0 0.0
    %2023 = vmatpush.msra.mxu0 0.0
    %2024 = vmatpush.msra.mxu0 0.0
    %2025 = vmatpush.msra.mxu0 %v1894
    %2026 = vmatpush.msra.mxu0 %v1891
    %2027 = vmatpush.msra.mxu0 %v1888
    %2028 = vmatpush.msra.mxu0 %v1885
    %2029 = vmatmul.f32.gmra.mxu0 %v2002
    %v2030 = vpop.f32.mrf.mxu0
    %v2031 = vadd.f32 0.0, %v2030
    %2032 = vmatmul.f32.gmra.mxu0 %v2005
    %v2033 = vpop.f32.mrf.mxu0
    %v2034 = vadd.f32 0.0, %v2033
    %2035 = vmatmul.f32.gmra.mxu0 %v2008
    %v2036 = vpop.f32.mrf.mxu0
    %v2037 = vadd.f32 0.0, %v2036
    %2038 = vmatmul.f32.gmra.mxu0 %v2011
    %v2039 = vpop.f32.mrf.mxu0
    %v2040 = vadd.f32 0.0, %v2039
    %2041 = vdwg.mxu0
    %s2042 = scalar_lea.vmem [#allocation7], 32
    %v2043 = vld [vmem:[%s2042] sm:$0xff]
    %v2044 = vld [vmem:[%s2042 + $0x8] sm:$0xff]
    %v2046 = vsel %vm379, %v2031, 0
    %v2049 = vsel %vm379, %v2034, 0
    %v2052 = vsel %vm379, %v2037, 0
    %v2055 = vsel %vm379, %v2040, 0
    %2057 = vmatpush.msra.mxu0 0.0
    %2058 = vmatpush.msra.mxu0 0.0
    %2059 = vmatpush.msra.mxu0 0.0
    %2060 = vmatpush.msra.mxu0 0.0
    %2061 = vmatpush.msra.mxu0 0.0
    %2062 = vmatpush.msra.mxu0 0.0
    %2063 = vmatpush.msra.mxu0 0.0
    %2064 = vmatpush.msra.mxu0 0.0
    %2065 = vmatpush.msra.mxu0 0.0
    %2066 = vmatpush.msra.mxu0 0.0
    %2067 = vmatpush.msra.mxu0 0.0
    %2068 = vmatpush.msra.mxu0 0.0
    %2069 = vmatpush.msra.mxu0 0.0
    %2070 = vmatpush.msra.mxu0 0.0
    %2071 = vmatpush.msra.mxu0 %v2044
    %2072 = vmatpush.msra.mxu0 %v2043
    %2073 = vmatmul.f32.gmra.mxu0 %v2046
    %v2074 = vpop.f32.mrf.mxu0
    %v2075 = vadd.f32 0.0, %v2074
    %2076 = vmatmul.f32.gmra.mxu0 %v2049
    %v2077 = vpop.f32.mrf.mxu0
    %v2078 = vadd.f32 0.0, %v2077
    %2079 = vmatmul.f32.gmra.mxu0 %v2052
    %v2080 = vpop.f32.mrf.mxu0
    %v2081 = vadd.f32 0.0, %v2080
    %2082 = vmatmul.f32.gmra.mxu0 %v2055
    %v2083 = vpop.f32.mrf.mxu0
    %v2084 = vadd.f32 0.0, %v2083
    %2085 = vdwg.mxu0
    %v2086 = vadd.f32 %v1772, %v2075
    %v2087 = vadd.f32 %v1773, %v2078
    %v2088 = vadd.f32 %v1774, %v2081
    %v2089 = vadd.f32 %v1775, %v2084
    %v2090 = vld [vmem:[%s1665 + $0x8] sm:$0x1]
    %v2091 = vld [vmem:[%s1665 + $0xa] sm:$0x1]
    %v2092 = vld [vmem:[%s1665 + $0xc] sm:$0x1]
    %s2093 = scalar_lea.vmem %s3, 224
    %v2094 = vld [vmem:[%s2093] sm:$0xff]
    %v2095 = vld [vmem:[%s2093 + $0x8] sm:$0xff]
    %v2096 = vld [vmem:[%s2093 + $0x10] sm:$0xff]
    %v2097 = vld [vmem:[%s2093 + $0x18] sm:$0xff]
    %v2098 = vperm.slane %v2090, 0
    %2099 = vmatpush.msra.mxu0 0.0
    %2100 = vmatpush.msra.mxu0 0.0
    %2101 = vmatpush.msra.mxu0 0.0
    %2102 = vmatpush.msra.mxu0 0.0
    %2103 = vmatpush.msra.mxu0 0.0
    %2104 = vmatpush.msra.mxu0 0.0
    %2105 = vmatpush.msra.mxu0 0.0
    %2106 = vmatpush.msra.mxu0 0.0
    %2107 = vmatpush.msra.mxu0 0.0
    %2108 = vmatpush.msra.mxu0 0.0
    %2109 = vmatpush.msra.mxu0 0.0
    %2110 = vmatpush.msra.mxu0 0.0
    %2111 = vmatpush.msra.mxu0 %v2097
    %2112 = vmatpush.msra.mxu0 %v2096
    %2113 = vmatpush.msra.mxu0 %v2095
    %2114 = vmatpush.msra.mxu0 %v2094
    %2115 = vmatmul.f32.gmra.mxu0 %v1786
    %v2116 = vpop.f32.mrf.mxu0
    %v2117 = vadd.f32 %v2098, %v2116
    %2118 = vmatmul.f32.gmra.mxu0 %v1789
    %v2119 = vpop.f32.mrf.mxu0
    %v2120 = vadd.f32 %v2098, %v2119
    %2121 = vmatmul.f32.gmra.mxu0 %v1792
    %v2122 = vpop.f32.mrf.mxu0
    %v2123 = vadd.f32 %v2098, %v2122
    %2124 = vmatmul.f32.gmra.mxu0 %v1795
    %v2125 = vpop.f32.mrf.mxu0
    %v2126 = vadd.f32 %v2098, %v2125
    %2127 = vdwg.mxu0
    %s2128 = scalar_lea.vmem %s3, 288
    %v2129 = vld [vmem:[%s2128] sm:$0xff]
    %v2130 = vld [vmem:[%s2128 + $0x8] sm:$0xff]
    %v2131 = vld [vmem:[%s2128 + $0x10] sm:$0xff]
    %v2132 = vld [vmem:[%s2128 + $0x18] sm:$0xff]
    %v2133 = vperm.slane %v2091, 0
    %2134 = vmatpush.msra.mxu0 0.0
    %2135 = vmatpush.msra.mxu0 0.0
    %2136 = vmatpush.msra.mxu0 0.0
    %2137 = vmatpush.msra.mxu0 0.0
    %2138 = vmatpush.msra.mxu0 0.0
    %2139 = vmatpush.msra.mxu0 0.0
    %2140 = vmatpush.msra.mxu0 0.0
    %2141 = vmatpush.msra.mxu0 0.0
    %2142 = vmatpush.msra.mxu0 0.0
    %2143 = vmatpush.msra.mxu0 0.0
    %2144 = vmatpush.msra.mxu0 0.0
    %2145 = vmatpush.msra.mxu0 0.0
    %2146 = vmatpush.msra.mxu0 %v2132
    %2147 = vmatpush.msra.mxu0 %v2131
    %2148 = vmatpush.msra.mxu0 %v2130
    %2149 = vmatpush.msra.mxu0 %v2129
    %2150 = vmatmul.f32.gmra.mxu0 %v1786
    %v2151 = vpop.f32.mrf.mxu0
    %v2152 = vadd.f32 %v2133, %v2151
    %2153 = vmatmul.f32.gmra.mxu0 %v1789
    %v2154 = vpop.f32.mrf.mxu0
    %v2155 = vadd.f32 %v2133, %v2154
    %2156 = vmatmul.f32.gmra.mxu0 %v1792
    %v2157 = vpop.f32.mrf.mxu0
    %v2158 = vadd.f32 %v2133, %v2157
    %2159 = vmatmul.f32.gmra.mxu0 %v1795
    %v2160 = vpop.f32.mrf.mxu0
    %v2161 = vadd.f32 %v2133, %v2160
    %2162 = vdwg.mxu0
    %s2163 = scalar_lea.vmem %s3, 352
    %v2164 = vld [vmem:[%s2163] sm:$0xff]
    %v2165 = vld [vmem:[%s2163 + $0x8] sm:$0xff]
    %v2166 = vld [vmem:[%s2163 + $0x10] sm:$0xff]
    %v2167 = vld [vmem:[%s2163 + $0x18] sm:$0xff]
    %v2168 = vperm.slane %v2092, 0
    %2169 = vmatpush.msra.mxu0 0.0
    %2170 = vmatpush.msra.mxu0 0.0
    %2171 = vmatpush.msra.mxu0 0.0
    %2172 = vmatpush.msra.mxu0 0.0
    %2173 = vmatpush.msra.mxu0 0.0
    %2174 = vmatpush.msra.mxu0 0.0
    %2175 = vmatpush.msra.mxu0 0.0
    %2176 = vmatpush.msra.mxu0 0.0
    %2177 = vmatpush.msra.mxu0 0.0
    %2178 = vmatpush.msra.mxu0 0.0
    %2179 = vmatpush.msra.mxu0 0.0
    %2180 = vmatpush.msra.mxu0 0.0
    %2181 = vmatpush.msra.mxu0 %v2167
    %2182 = vmatpush.msra.mxu0 %v2166
    %2183 = vmatpush.msra.mxu0 %v2165
    %2184 = vmatpush.msra.mxu0 %v2164
    %2185 = vmatmul.f32.gmra.mxu0 %v1786
    %v2186 = vpop.f32.mrf.mxu0
    %v2187 = vadd.f32 %v2168, %v2186
    %2188 = vmatmul.f32.gmra.mxu0 %v1789
    %v2189 = vpop.f32.mrf.mxu0
    %v2190 = vadd.f32 %v2168, %v2189
    %2191 = vmatmul.f32.gmra.mxu0 %v1792
    %v2192 = vpop.f32.mrf.mxu0
    %v2193 = vadd.f32 %v2168, %v2192
    %2194 = vmatmul.f32.gmra.mxu0 %v1795
    %v2195 = vpop.f32.mrf.mxu0
    %v2196 = vadd.f32 %v2168, %v2195
    %2197 = vdwg.mxu0
    %v2199 = vsel %vm379, %v2117, 0
    %v2202 = vsel %vm379, %v2120, 0
    %v2205 = vsel %vm379, %v2123, 0
    %v2208 = vsel %vm379, %v2126, 0
    %v2211 = vsel %vm379, %v2152, 0
    %v2214 = vsel %vm379, %v2155, 0
    %v2217 = vsel %vm379, %v2158, 0
    %v2220 = vsel %vm379, %v2161, 0
    %2222 = vmatpush.xpose.msra.mxu0 0.0
    %2223 = vmatpush.xpose.msra.mxu0 0.0
    %2224 = vmatpush.xpose.msra.mxu0 0.0
    %2225 = vmatpush.xpose.msra.mxu0 0.0
    %2226 = vmatpush.xpose.msra.mxu0 0.0
    %2227 = vmatpush.xpose.msra.mxu0 0.0
    %2228 = vmatpush.xpose.msra.mxu0 0.0
    %2229 = vmatpush.xpose.msra.mxu0 0.0
    %2230 = vmatpush.xpose.msra.mxu0 0.0
    %2231 = vmatpush.xpose.msra.mxu0 0.0
    %2232 = vmatpush.xpose.msra.mxu0 0.0
    %2233 = vmatpush.xpose.msra.mxu0 0.0
    %2234 = vmatpush.xpose.msra.mxu0 %v2220
    %2235 = vmatpush.xpose.msra.mxu0 %v2217
    %2236 = vmatpush.xpose.msra.mxu0 %v2214
    %2237 = vmatpush.xpose.msra.mxu0 %v2211
    %2238 = vmatmul.f32.gmra.mxu0 %v2199
    %v2239 = vpop.f32.mrf.mxu0
    %v2240 = vadd.f32 0.0, %v2239
    %2241 = vmatmul.f32.gmra.mxu0 %v2202
    %v2242 = vpop.f32.mrf.mxu0
    %v2243 = vadd.f32 0.0, %v2242
    %2244 = vmatmul.f32.gmra.mxu0 %v2205
    %v2245 = vpop.f32.mrf.mxu0
    %v2246 = vadd.f32 0.0, %v2245
    %2247 = vmatmul.f32.gmra.mxu0 %v2208
    %v2248 = vpop.f32.mrf.mxu0
    %v2249 = vadd.f32 0.0, %v2248
    %2250 = vdwg.mxu0
    %v2251 = vmul.f32 %v2240, 0.25
    %v2252 = vmul.f32 %v2243, 0.25
    %v2253 = vmul.f32 %v2246, 0.25
    %v2254 = vmul.f32 %v2249, 0.25
    %v2255 = vadd.f32 %v2251, %v81
    %v2256 = vadd.f32 %v2252, %v82
    %v2257 = vadd.f32 %v2253, %v83
    %v2258 = vadd.f32 %v2254, %v84
    %v2259 = vsel %vm149, %v2255, -inf
    %2260 = vmax.xlane.f32.xlu0 %v2259
    %v2261 = vpop.xlane.xlu0 %2260
    %v2262 = vsel %vm149, %v2256, -inf
    %2263 = vmax.xlane.f32.xlu0 %v2262
    %v2264 = vpop.xlane.xlu0 %2263
    %v2265 = vsel %vm149, %v2257, -inf
    %2266 = vmax.xlane.f32.xlu0 %v2265
    %v2267 = vpop.xlane.xlu0 %2266
    %v2268 = vsel %vm149, %v2258, -inf
    %2269 = vmax.xlane.f32.xlu0 %v2268
    %v2270 = vpop.xlane.xlu0 %2269
    %v2271 = vsub.f32 %v2255, %v2261
    %v2272 = vsub.f32 %v2256, %v2264
    %v2273 = vsub.f32 %v2257, %v2267
    %v2274 = vsub.f32 %v2258, %v2270
    %v2275 = vmul.f32 %v2271, 1.442695
    %v2276 = vpow.pop %v2275
    %v2277 = vmul.f32 %v2272, 1.442695
    %v2278 = vpow.pop %v2277
    %v2279 = vmul.f32 %v2273, 1.442695
    %v2280 = vpow.pop %v2279
    %v2281 = vmul.f32 %v2274, 1.442695
    %v2282 = vpow.pop %v2281
    %v2283 = vsel %vm149, %v2276, 0.0
    %2284 = vadd.xlane.f32.xlu0 %v2283
    %v2285 = vpop.xlane.xlu0 %2284
    %v2286 = vsel %vm149, %v2278, 0.0
    %2287 = vadd.xlane.f32.xlu0 %v2286
    %v2288 = vpop.xlane.xlu0 %2287
    %v2289 = vsel %vm149, %v2280, 0.0
    %2290 = vadd.xlane.f32.xlu0 %v2289
    %v2291 = vpop.xlane.xlu0 %2290
    %v2292 = vsel %vm149, %v2282, 0.0
    %2293 = vadd.xlane.f32.xlu0 %v2292
    %v2294 = vpop.xlane.xlu0 %2293
    %v2295 = vrcp.pop %v2285
    %v2296 = vrcp.pop %v2288
    %v2297 = vrcp.pop %v2291
    %v2298 = vrcp.pop %v2294
    %v2299 = vmul.f32 %v2276, %v2295
    %v2300 = vmul.f32 %v2278, %v2296
    %v2301 = vmul.f32 %v2280, %v2297
    %v2302 = vmul.f32 %v2282, %v2298
    %v2304 = vsel %vm149, %v2299, 0
    %v2307 = vsel %vm149, %v2300, 0
    %v2310 = vsel %vm149, %v2301, 0
    %v2313 = vsel %vm149, %v2302, 0
    %2315 = vmatpush.msra.mxu0 0.0
    %2316 = vmatpush.msra.mxu0 0.0
    %2317 = vmatpush.msra.mxu0 0.0
    %2318 = vmatpush.msra.mxu0 0.0
    %2319 = vmatpush.msra.mxu0 0.0
    %2320 = vmatpush.msra.mxu0 0.0
    %2321 = vmatpush.msra.mxu0 0.0
    %2322 = vmatpush.msra.mxu0 0.0
    %2323 = vmatpush.msra.mxu0 0.0
    %2324 = vmatpush.msra.mxu0 0.0
    %2325 = vmatpush.msra.mxu0 0.0
    %2326 = vmatpush.msra.mxu0 0.0
    %2327 = vmatpush.msra.mxu0 %v2196
    %2328 = vmatpush.msra.mxu0 %v2193
    %2329 = vmatpush.msra.mxu0 %v2190
    %2330 = vmatpush.msra.mxu0 %v2187
    %2331 = vmatmul.f32.gmra.mxu0 %v2304
    %v2332 = vpop.f32.mrf.mxu0
    %v2333 = vadd.f32 0.0, %v2332
    %2334 = vmatmul.f32.gmra.mxu0 %v2307
    %v2335 = vpop.f32.mrf.mxu0
    %v2336 = vadd.f32 0.0, %v2335
    %2337 = vmatmul.f32.gmra.mxu0 %v2310
    %v2338 = vpop.f32.mrf.mxu0
    %v2339 = vadd.f32 0.0, %v2338
    %2340 = vmatmul.f32.gmra.mxu0 %v2313
    %v2341 = vpop.f32.mrf.mxu0
    %v2342 = vadd.f32 0.0, %v2341
    %2343 = vdwg.mxu0
    %s2344 = scalar_lea.vmem [#allocation7], 48
    %v2345 = vld [vmem:[%s2344] sm:$0xff]
    %v2346 = vld [vmem:[%s2344 + $0x8] sm:$0xff]
    %v2348 = vsel %vm379, %v2333, 0
    %v2351 = vsel %vm379, %v2336, 0
    %v2354 = vsel %vm379, %v2339, 0
    %v2357 = vsel %vm379, %v2342, 0
    %2359 = vmatpush.msra.mxu0 0.0
    %2360 = vmatpush.msra.mxu0 0.0
    %2361 = vmatpush.msra.mxu0 0.0
    %2362 = vmatpush.msra.mxu0 0.0
    %2363 = vmatpush.msra.mxu0 0.0
    %2364 = vmatpush.msra.mxu0 0.0
    %2365 = vmatpush.msra.mxu0 0.0
    %2366 = vmatpush.msra.mxu0 0.0
    %2367 = vmatpush.msra.mxu0 0.0
    %2368 = vmatpush.msra.mxu0 0.0
    %2369 = vmatpush.msra.mxu0 0.0
    %2370 = vmatpush.msra.mxu0 0.0
    %2371 = vmatpush.msra.mxu0 0.0
    %2372 = vmatpush.msra.mxu0 0.0
    %2373 = vmatpush.msra.mxu0 %v2346
    %2374 = vmatpush.msra.mxu0 %v2345
    %2375 = vmatmul.f32.gmra.mxu0 %v2348
    %v2376 = vpop.f32.mrf.mxu0
    %v2377 = vadd.f32 0.0, %v2376
    %2378 = vmatmul.f32.gmra.mxu0 %v2351
    %v2379 = vpop.f32.mrf.mxu0
    %v2380 = vadd.f32 0.0, %v2379
    %2381 = vmatmul.f32.gmra.mxu0 %v2354
    %v2382 = vpop.f32.mrf.mxu0
    %v2383 = vadd.f32 0.0, %v2382
    %2384 = vmatmul.f32.gmra.mxu0 %v2357
    %v2385 = vpop.f32.mrf.mxu0
    %v2386 = vadd.f32 0.0, %v2385
    %2387 = vdwg.mxu0
    %v2388 = vadd.f32 %v2086, %v2377
    %v2389 = vadd.f32 %v2087, %v2380
    %v2390 = vadd.f32 %v2088, %v2383
    %v2391 = vadd.f32 %v2089, %v2386
    %v2392 = vsel %vm149, %v2388, 0.0
    %2393 = vadd.xlane.f32.xlu0 %v2392
    %v2394 = vpop.xlane.xlu0 %2393
    %v2395 = vsel %vm149, %v2389, 0.0
    %2396 = vadd.xlane.f32.xlu0 %v2395
    %v2397 = vpop.xlane.xlu0 %2396
    %v2398 = vsel %vm149, %v2390, 0.0
    %2399 = vadd.xlane.f32.xlu0 %v2398
    %v2400 = vpop.xlane.xlu0 %2399
    %v2401 = vsel %vm149, %v2391, 0.0
    %2402 = vadd.xlane.f32.xlu0 %v2401
    %v2403 = vpop.xlane.xlu0 %2402
    %v2404 = vmul.f32 %v2394, %v168
    %v2405 = vmul.f32 %v2397, %v168
    %v2406 = vmul.f32 %v2400, %v168
    %v2407 = vmul.f32 %v2403, %v168
    %v2408 = vsub.f32 %v2388, %v2404
    %v2409 = vsub.f32 %v2389, %v2405
    %v2410 = vsub.f32 %v2390, %v2406
    %v2411 = vsub.f32 %v2391, %v2407
    %v2412 = vmul.f32 %v2408, %v2408
    %v2413 = vmul.f32 %v2409, %v2409
    %v2414 = vmul.f32 %v2410, %v2410
    %v2415 = vmul.f32 %v2411, %v2411
    %v2416 = vsel %vm149, %v2412, 0.0
    %2417 = vadd.xlane.f32.xlu0 %v2416
    %v2418 = vpop.xlane.xlu0 %2417
    %v2419 = vsel %vm149, %v2413, 0.0
    %2420 = vadd.xlane.f32.xlu0 %v2419
    %v2421 = vpop.xlane.xlu0 %2420
    %v2422 = vsel %vm149, %v2414, 0.0
    %2423 = vadd.xlane.f32.xlu0 %v2422
    %v2424 = vpop.xlane.xlu0 %2423
    %v2425 = vsel %vm149, %v2415, 0.0
    %2426 = vadd.xlane.f32.xlu0 %v2425
    %v2427 = vpop.xlane.xlu0 %2426
    %v2428 = vmul.f32 %v2418, %v168
    %v2429 = vmul.f32 %v2421, %v168
    %v2430 = vmul.f32 %v2424, %v168
    %v2431 = vmul.f32 %v2427, %v168
    %v2432 = vadd.f32 %v2428, 1e-05
    %v2433 = vadd.f32 %v2429, 1e-05
    %v2434 = vadd.f32 %v2430, 1e-05
    %v2435 = vadd.f32 %v2431, 1e-05
    %v2436 = vrsqrt.pop %v2432
    %v2437 = vmul.f32 %v2436, %v2432
    %v2438 = vmul.f32 %v2437, %v2436
    %v2439 = vmul.f32 0.5, %v2438
    %v2440 = vsub.f32 1.5, %v2439
    %v2441 = vmul.f32 %v2436, %v2440
    %vm2442 = vweird.f32 %v2432
    %vm2443 = vweird.f32 %v2436
    %vm2444 = vmor %vm2442, %vm2443
    %v2445 = vsel %vm2444, %v2436, %v2441
    %v2446 = vrsqrt.pop %v2433
    %v2447 = vmul.f32 %v2446, %v2433
    %v2448 = vmul.f32 %v2447, %v2446
    %v2449 = vmul.f32 0.5, %v2448
    %v2450 = vsub.f32 1.5, %v2449
    %v2451 = vmul.f32 %v2446, %v2450
    %vm2452 = vweird.f32 %v2433
    %vm2453 = vweird.f32 %v2446
    %vm2454 = vmor %vm2452, %vm2453
    %v2455 = vsel %vm2454, %v2446, %v2451
    %v2456 = vrsqrt.pop %v2434
    %v2457 = vmul.f32 %v2456, %v2434
    %v2458 = vmul.f32 %v2457, %v2456
    %v2459 = vmul.f32 0.5, %v2458
    %v2460 = vsub.f32 1.5, %v2459
    %v2461 = vmul.f32 %v2456, %v2460
    %vm2462 = vweird.f32 %v2434
    %vm2463 = vweird.f32 %v2456
    %vm2464 = vmor %vm2462, %vm2463
    %v2465 = vsel %vm2464, %v2456, %v2461
    %v2466 = vrsqrt.pop %v2435
    %v2467 = vmul.f32 %v2466, %v2435
    %v2468 = vmul.f32 %v2467, %v2466
    %v2469 = vmul.f32 0.5, %v2468
    %v2470 = vsub.f32 1.5, %v2469
    %v2471 = vmul.f32 %v2466, %v2470
    %vm2472 = vweird.f32 %v2435
    %vm2473 = vweird.f32 %v2466
    %vm2474 = vmor %vm2472, %vm2473
    %v2475 = vsel %vm2474, %v2466, %v2471
    %v2476 = vmul.f32 %v2408, %v2445
    %v2477 = vmul.f32 %v2409, %v2455
    %v2478 = vmul.f32 %v2410, %v2465
    %v2479 = vmul.f32 %v2411, %v2475
    %v2480 = vperm.slane %v1668, 0
    %v2481 = vmul.f32 %v2476, %v2480
    %v2482 = vmul.f32 %v2477, %v2480
    %v2483 = vmul.f32 %v2478, %v2480
    %v2484 = vmul.f32 %v2479, %v2480
    %v2485 = vperm.slane %v1669, 0
    %v2486 = vadd.f32 %v2481, %v2485
    %v2487 = vadd.f32 %v2482, %v2485
    %v2488 = vadd.f32 %v2483, %v2485
    %v2489 = vadd.f32 %v2484, %v2485
    %v2490 = vmul.f32 %v2486, %v976
    %v2491 = vmul.f32 %v2487, %v981
    %v2492 = vmul.f32 %v2488, %v986
    %v2493 = vmul.f32 %v2489, %v991
    %s2494 = scalar_lea.vmem %s5, 416
    %v2495 = vld [vmem:[%s2494] sm:$0xff]
    %v2496 = vld [vmem:[%s2494 + $0x8] sm:$0xff]
    %v2497 = vld [vmem:[%s2494 + $0x10] sm:$0xff]
    %v2498 = vld [vmem:[%s2494 + $0x18] sm:$0xff]
    %v2499 = vperm.slane %v1672, 0
    %v2501 = vsel %vm149, %v2490, 0
    %v2504 = vsel %vm149, %v2491, 0
    %v2507 = vsel %vm149, %v2492, 0
    %v2510 = vsel %vm149, %v2493, 0
    %2512 = vmatpush.msra.mxu0 0.0
    %2513 = vmatpush.msra.mxu0 0.0
    %2514 = vmatpush.msra.mxu0 0.0
    %2515 = vmatpush.msra.mxu0 0.0
    %2516 = vmatpush.msra.mxu0 0.0
    %2517 = vmatpush.msra.mxu0 0.0
    %2518 = vmatpush.msra.mxu0 0.0
    %2519 = vmatpush.msra.mxu0 0.0
    %2520 = vmatpush.msra.mxu0 0.0
    %2521 = vmatpush.msra.mxu0 0.0
    %2522 = vmatpush.msra.mxu0 0.0
    %2523 = vmatpush.msra.mxu0 0.0
    %2524 = vmatpush.msra.mxu0 %v2498
    %2525 = vmatpush.msra.mxu0 %v2497
    %2526 = vmatpush.msra.mxu0 %v2496
    %2527 = vmatpush.msra.mxu0 %v2495
    %2528 = vmatmul.f32.gmra.mxu0 %v2501
    %v2529 = vpop.f32.mrf.mxu0
    %v2530 = vadd.f32 %v2499, %v2529
    %2531 = vmatmul.f32.gmra.mxu0 %v2504
    %v2532 = vpop.f32.mrf.mxu0
    %v2533 = vadd.f32 %v2499, %v2532
    %2534 = vmatmul.f32.gmra.mxu0 %v2507
    %v2535 = vpop.f32.mrf.mxu0
    %v2536 = vadd.f32 %v2499, %v2535
    %2537 = vmatmul.f32.gmra.mxu0 %v2510
    %v2538 = vpop.f32.mrf.mxu0
    %v2539 = vadd.f32 %v2499, %v2538
    %2540 = vdwg.mxu0
    %v2541 = vrot.slane %v2490, 4
    %v2542 = vrot.slane %v2491, 4
    %v2543 = vrot.slane %v2492, 4
    %v2544 = vrot.slane %v2493, 4
    %v2545 = vsel %vm1048, %v2543, %v2544
    %v2546 = vsel %vm1048, %v2542, %v2543
    %v2547 = vsel %vm1048, %v2541, %v2542
    %v2548 = vsel %vm1048, %v2544, %v2541
    %v2549 = vmul.f32 %v2548, %v1057
    %v2550 = vmul.f32 %v2547, %v1058
    %v2551 = vmul.f32 %v2546, %v1059
    %v2552 = vmul.f32 %v2545, %v1060
    %s2553 = scalar_lea.vmem %s5, 288
    %v2554 = vld [vmem:[%s2553] sm:$0xff]
    %v2555 = vld [vmem:[%s2553 + $0x8] sm:$0xff]
    %v2556 = vld [vmem:[%s2553 + $0x10] sm:$0xff]
    %v2557 = vld [vmem:[%s2553 + $0x18] sm:$0xff]
    %v2559 = vsel %vm149, %v2549, 0
    %v2562 = vsel %vm149, %v2550, 0
    %v2565 = vsel %vm149, %v2551, 0
    %v2568 = vsel %vm149, %v2552, 0
    %2570 = vmatpush.msra.mxu0 0.0
    %2571 = vmatpush.msra.mxu0 0.0
    %2572 = vmatpush.msra.mxu0 0.0
    %2573 = vmatpush.msra.mxu0 0.0
    %2574 = vmatpush.msra.mxu0 0.0
    %2575 = vmatpush.msra.mxu0 0.0
    %2576 = vmatpush.msra.mxu0 0.0
    %2577 = vmatpush.msra.mxu0 0.0
    %2578 = vmatpush.msra.mxu0 0.0
    %2579 = vmatpush.msra.mxu0 0.0
    %2580 = vmatpush.msra.mxu0 0.0
    %2581 = vmatpush.msra.mxu0 0.0
    %2582 = vmatpush.msra.mxu0 %v2557
    %2583 = vmatpush.msra.mxu0 %v2556
    %2584 = vmatpush.msra.mxu0 %v2555
    %2585 = vmatpush.msra.mxu0 %v2554
    %2586 = vmatmul.f32.gmra.mxu0 %v2559
    %v2587 = vpop.f32.mrf.mxu0
    %v2588 = vadd.f32 0.0, %v2587
    %2589 = vmatmul.f32.gmra.mxu0 %v2562
    %v2590 = vpop.f32.mrf.mxu0
    %v2591 = vadd.f32 0.0, %v2590
    %2592 = vmatmul.f32.gmra.mxu0 %v2565
    %v2593 = vpop.f32.mrf.mxu0
    %v2594 = vadd.f32 0.0, %v2593
    %2595 = vmatmul.f32.gmra.mxu0 %v2568
    %v2596 = vpop.f32.mrf.mxu0
    %v2597 = vadd.f32 0.0, %v2596
    %2598 = vdwg.mxu0
    %v2599 = vadd.f32 %v2530, %v2588
    %v2600 = vadd.f32 %v2533, %v2591
    %v2601 = vadd.f32 %v2536, %v2594
    %v2602 = vadd.f32 %v2539, %v2597
    %v2603 = vrot.slane %v2490, 5
    %v2604 = vrot.slane %v2491, 5
    %v2605 = vrot.slane %v2492, 5
    %v2606 = vrot.slane %v2493, 5
    %v2607 = vsel %vm1118, %v2605, %v2606
    %v2608 = vsel %vm1118, %v2604, %v2605
    %v2609 = vsel %vm1118, %v2603, %v2604
    %v2610 = vsel %vm1118, %v2606, %v2603
    %v2611 = vmul.f32 %v2610, %v1127
    %v2612 = vmul.f32 %v2609, %v1128
    %v2613 = vmul.f32 %v2608, %v1129
    %v2614 = vmul.f32 %v2607, %v1130
    %s2615 = scalar_lea.vmem %s5, 320
    %v2616 = vld [vmem:[%s2615] sm:$0xff]
    %v2617 = vld [vmem:[%s2615 + $0x8] sm:$0xff]
    %v2618 = vld [vmem:[%s2615 + $0x10] sm:$0xff]
    %v2619 = vld [vmem:[%s2615 + $0x18] sm:$0xff]
    %v2621 = vsel %vm149, %v2611, 0
    %v2624 = vsel %vm149, %v2612, 0
    %v2627 = vsel %vm149, %v2613, 0
    %v2630 = vsel %vm149, %v2614, 0
    %2632 = vmatpush.msra.mxu0 0.0
    %2633 = vmatpush.msra.mxu0 0.0
    %2634 = vmatpush.msra.mxu0 0.0
    %2635 = vmatpush.msra.mxu0 0.0
    %2636 = vmatpush.msra.mxu0 0.0
    %2637 = vmatpush.msra.mxu0 0.0
    %2638 = vmatpush.msra.mxu0 0.0
    %2639 = vmatpush.msra.mxu0 0.0
    %2640 = vmatpush.msra.mxu0 0.0
    %2641 = vmatpush.msra.mxu0 0.0
    %2642 = vmatpush.msra.mxu0 0.0
    %2643 = vmatpush.msra.mxu0 0.0
    %2644 = vmatpush.msra.mxu0 %v2619
    %2645 = vmatpush.msra.mxu0 %v2618
    %2646 = vmatpush.msra.mxu0 %v2617
    %2647 = vmatpush.msra.mxu0 %v2616
    %2648 = vmatmul.f32.gmra.mxu0 %v2621
    %v2649 = vpop.f32.mrf.mxu0
    %v2650 = vadd.f32 0.0, %v2649
    %2651 = vmatmul.f32.gmra.mxu0 %v2624
    %v2652 = vpop.f32.mrf.mxu0
    %v2653 = vadd.f32 0.0, %v2652
    %2654 = vmatmul.f32.gmra.mxu0 %v2627
    %v2655 = vpop.f32.mrf.mxu0
    %v2656 = vadd.f32 0.0, %v2655
    %2657 = vmatmul.f32.gmra.mxu0 %v2630
    %v2658 = vpop.f32.mrf.mxu0
    %v2659 = vadd.f32 0.0, %v2658
    %2660 = vdwg.mxu0
    %v2661 = vadd.f32 %v2599, %v2650
    %v2662 = vadd.f32 %v2600, %v2653
    %v2663 = vadd.f32 %v2601, %v2656
    %v2664 = vadd.f32 %v2602, %v2659
    %v2665 = vrot.slane %v2490, 6
    %v2666 = vrot.slane %v2491, 6
    %v2667 = vrot.slane %v2492, 6
    %v2668 = vrot.slane %v2493, 6
    %v2669 = vsel %vm1189, %v2667, %v2668
    %v2670 = vsel %vm1189, %v2666, %v2667
    %v2671 = vsel %vm1189, %v2665, %v2666
    %v2672 = vsel %vm1189, %v2668, %v2665
    %v2673 = vmul.f32 %v2672, %v1198
    %v2674 = vmul.f32 %v2671, %v1199
    %v2675 = vmul.f32 %v2670, %v1200
    %v2676 = vmul.f32 %v2669, %v1201
    %s2677 = scalar_lea.vmem %s5, 352
    %v2678 = vld [vmem:[%s2677] sm:$0xff]
    %v2679 = vld [vmem:[%s2677 + $0x8] sm:$0xff]
    %v2680 = vld [vmem:[%s2677 + $0x10] sm:$0xff]
    %v2681 = vld [vmem:[%s2677 + $0x18] sm:$0xff]
    %v2683 = vsel %vm149, %v2673, 0
    %v2686 = vsel %vm149, %v2674, 0
    %v2689 = vsel %vm149, %v2675, 0
    %v2692 = vsel %vm149, %v2676, 0
    %2694 = vmatpush.msra.mxu0 0.0
    %2695 = vmatpush.msra.mxu0 0.0
    %2696 = vmatpush.msra.mxu0 0.0
    %2697 = vmatpush.msra.mxu0 0.0
    %2698 = vmatpush.msra.mxu0 0.0
    %2699 = vmatpush.msra.mxu0 0.0
    %2700 = vmatpush.msra.mxu0 0.0
    %2701 = vmatpush.msra.mxu0 0.0
    %2702 = vmatpush.msra.mxu0 0.0
    %2703 = vmatpush.msra.mxu0 0.0
    %2704 = vmatpush.msra.mxu0 0.0
    %2705 = vmatpush.msra.mxu0 0.0
    %2706 = vmatpush.msra.mxu0 %v2681
    %2707 = vmatpush.msra.mxu0 %v2680
    %2708 = vmatpush.msra.mxu0 %v2679
    %2709 = vmatpush.msra.mxu0 %v2678
    %2710 = vmatmul.f32.gmra.mxu0 %v2683
    %v2711 = vpop.f32.mrf.mxu0
    %v2712 = vadd.f32 0.0, %v2711
    %2713 = vmatmul.f32.gmra.mxu0 %v2686
    %v2714 = vpop.f32.mrf.mxu0
    %v2715 = vadd.f32 0.0, %v2714
    %2716 = vmatmul.f32.gmra.mxu0 %v2689
    %v2717 = vpop.f32.mrf.mxu0
    %v2718 = vadd.f32 0.0, %v2717
    %2719 = vmatmul.f32.gmra.mxu0 %v2692
    %v2720 = vpop.f32.mrf.mxu0
    %v2721 = vadd.f32 0.0, %v2720
    %2722 = vdwg.mxu0
    %v2723 = vadd.f32 %v2661, %v2712
    %v2724 = vadd.f32 %v2662, %v2715
    %v2725 = vadd.f32 %v2663, %v2718
    %v2726 = vadd.f32 %v2664, %v2721
    %v2727 = vrot.slane %v2490, 7
    %v2728 = vrot.slane %v2491, 7
    %v2729 = vrot.slane %v2492, 7
    %v2730 = vrot.slane %v2493, 7
    %v2731 = vsel %vm1260, %v2729, %v2730
    %v2732 = vsel %vm1260, %v2728, %v2729
    %v2733 = vsel %vm1260, %v2727, %v2728
    %v2734 = vsel %vm1260, %v2730, %v2727
    %v2735 = vmul.f32 %v2734, %v1269
    %v2736 = vmul.f32 %v2733, %v1270
    %v2737 = vmul.f32 %v2732, %v1271
    %v2738 = vmul.f32 %v2731, %v1272
    %s2739 = scalar_lea.vmem %s5, 384
    %v2740 = vld [vmem:[%s2739] sm:$0xff]
    %v2741 = vld [vmem:[%s2739 + $0x8] sm:$0xff]
    %v2742 = vld [vmem:[%s2739 + $0x10] sm:$0xff]
    %v2743 = vld [vmem:[%s2739 + $0x18] sm:$0xff]
    %v2745 = vsel %vm149, %v2735, 0
    %v2748 = vsel %vm149, %v2736, 0
    %v2751 = vsel %vm149, %v2737, 0
    %v2754 = vsel %vm149, %v2738, 0
    %2756 = vmatpush.msra.mxu0 0.0
    %2757 = vmatpush.msra.mxu0 0.0
    %2758 = vmatpush.msra.mxu0 0.0
    %2759 = vmatpush.msra.mxu0 0.0
    %2760 = vmatpush.msra.mxu0 0.0
    %2761 = vmatpush.msra.mxu0 0.0
    %2762 = vmatpush.msra.mxu0 0.0
    %2763 = vmatpush.msra.mxu0 0.0
    %2764 = vmatpush.msra.mxu0 0.0
    %2765 = vmatpush.msra.mxu0 0.0
    %2766 = vmatpush.msra.mxu0 0.0
    %2767 = vmatpush.msra.mxu0 0.0
    %2768 = vmatpush.msra.mxu0 %v2743
    %2769 = vmatpush.msra.mxu0 %v2742
    %2770 = vmatpush.msra.mxu0 %v2741
    %2771 = vmatpush.msra.mxu0 %v2740
    %2772 = vmatmul.f32.gmra.mxu0 %v2745
    %v2773 = vpop.f32.mrf.mxu0
    %v2774 = vadd.f32 0.0, %v2773
    %2775 = vmatmul.f32.gmra.mxu0 %v2748
    %v2776 = vpop.f32.mrf.mxu0
    %v2777 = vadd.f32 0.0, %v2776
    %2778 = vmatmul.f32.gmra.mxu0 %v2751
    %v2779 = vpop.f32.mrf.mxu0
    %v2780 = vadd.f32 0.0, %v2779
    %2781 = vmatmul.f32.gmra.mxu0 %v2754
    %v2782 = vpop.f32.mrf.mxu0
    %v2783 = vadd.f32 0.0, %v2782
    %2784 = vdwg.mxu0
    %v2785 = vadd.f32 %v2723, %v2774
    %v2786 = vadd.f32 %v2724, %v2777
    %v2787 = vadd.f32 %v2725, %v2780
    %v2788 = vadd.f32 %v2726, %v2783
    %v2789 = vrot.slane %v2490, 1
    %v2790 = vrot.slane %v2491, 1
    %v2791 = vrot.slane %v2492, 1
    %v2792 = vrot.slane %v2493, 1
    %v2793 = vsel %vm1331, %v2791, %v2792
    %v2794 = vsel %vm1331, %v2790, %v2791
    %v2795 = vsel %vm1331, %v2789, %v2790
    %v2796 = vsel %vm1331, %v2792, %v2789
    %v2797 = vmul.f32 %v2795, %v1340
    %v2798 = vmul.f32 %v2794, %v1341
    %v2799 = vmul.f32 %v2793, %v1342
    %v2800 = vmul.f32 %v2796, %v1343
    %s2801 = scalar_lea.vmem %s5, 448
    %v2802 = vld [vmem:[%s2801] sm:$0xff]
    %v2803 = vld [vmem:[%s2801 + $0x8] sm:$0xff]
    %v2804 = vld [vmem:[%s2801 + $0x10] sm:$0xff]
    %v2805 = vld [vmem:[%s2801 + $0x18] sm:$0xff]
    %v2807 = vsel %vm149, %v2797, 0
    %v2810 = vsel %vm149, %v2798, 0
    %v2813 = vsel %vm149, %v2799, 0
    %v2816 = vsel %vm149, %v2800, 0
    %2818 = vmatpush.msra.mxu0 0.0
    %2819 = vmatpush.msra.mxu0 0.0
    %2820 = vmatpush.msra.mxu0 0.0
    %2821 = vmatpush.msra.mxu0 0.0
    %2822 = vmatpush.msra.mxu0 0.0
    %2823 = vmatpush.msra.mxu0 0.0
    %2824 = vmatpush.msra.mxu0 0.0
    %2825 = vmatpush.msra.mxu0 0.0
    %2826 = vmatpush.msra.mxu0 0.0
    %2827 = vmatpush.msra.mxu0 0.0
    %2828 = vmatpush.msra.mxu0 0.0
    %2829 = vmatpush.msra.mxu0 0.0
    %2830 = vmatpush.msra.mxu0 %v2805
    %2831 = vmatpush.msra.mxu0 %v2804
    %2832 = vmatpush.msra.mxu0 %v2803
    %2833 = vmatpush.msra.mxu0 %v2802
    %2834 = vmatmul.f32.gmra.mxu0 %v2807
    %v2835 = vpop.f32.mrf.mxu0
    %v2836 = vadd.f32 0.0, %v2835
    %2837 = vmatmul.f32.gmra.mxu0 %v2810
    %v2838 = vpop.f32.mrf.mxu0
    %v2839 = vadd.f32 0.0, %v2838
    %2840 = vmatmul.f32.gmra.mxu0 %v2813
    %v2841 = vpop.f32.mrf.mxu0
    %v2842 = vadd.f32 0.0, %v2841
    %2843 = vmatmul.f32.gmra.mxu0 %v2816
    %v2844 = vpop.f32.mrf.mxu0
    %v2845 = vadd.f32 0.0, %v2844
    %2846 = vdwg.mxu0
    %v2847 = vadd.f32 %v2785, %v2836
    %v2848 = vadd.f32 %v2786, %v2839
    %v2849 = vadd.f32 %v2787, %v2842
    %v2850 = vadd.f32 %v2788, %v2845
    %v2851 = vrot.slane %v2490, 2
    %v2852 = vrot.slane %v2491, 2
    %v2853 = vrot.slane %v2492, 2
    %v2854 = vrot.slane %v2493, 2
    %v2855 = vsel %vm1402, %v2853, %v2854
    %v2856 = vsel %vm1402, %v2852, %v2853
    %v2857 = vsel %vm1402, %v2851, %v2852
    %v2858 = vsel %vm1402, %v2854, %v2851
    %v2859 = vmul.f32 %v2857, %v1411
    %v2860 = vmul.f32 %v2856, %v1412
    %v2861 = vmul.f32 %v2855, %v1413
    %v2862 = vmul.f32 %v2858, %v1414
    %s2863 = scalar_lea.vmem %s5, 480
    %v2864 = vld [vmem:[%s2863] sm:$0xff]
    %v2865 = vld [vmem:[%s2863 + $0x8] sm:$0xff]
    %v2866 = vld [vmem:[%s2863 + $0x10] sm:$0xff]
    %v2867 = vld [vmem:[%s2863 + $0x18] sm:$0xff]
    %v2869 = vsel %vm149, %v2859, 0
    %v2872 = vsel %vm149, %v2860, 0
    %v2875 = vsel %vm149, %v2861, 0
    %v2878 = vsel %vm149, %v2862, 0
    %2880 = vmatpush.msra.mxu0 0.0
    %2881 = vmatpush.msra.mxu0 0.0
    %2882 = vmatpush.msra.mxu0 0.0
    %2883 = vmatpush.msra.mxu0 0.0
    %2884 = vmatpush.msra.mxu0 0.0
    %2885 = vmatpush.msra.mxu0 0.0
    %2886 = vmatpush.msra.mxu0 0.0
    %2887 = vmatpush.msra.mxu0 0.0
    %2888 = vmatpush.msra.mxu0 0.0
    %2889 = vmatpush.msra.mxu0 0.0
    %2890 = vmatpush.msra.mxu0 0.0
    %2891 = vmatpush.msra.mxu0 0.0
    %2892 = vmatpush.msra.mxu0 %v2867
    %2893 = vmatpush.msra.mxu0 %v2866
    %2894 = vmatpush.msra.mxu0 %v2865
    %2895 = vmatpush.msra.mxu0 %v2864
    %2896 = vmatmul.f32.gmra.mxu0 %v2869
    %v2897 = vpop.f32.mrf.mxu0
    %v2898 = vadd.f32 0.0, %v2897
    %2899 = vmatmul.f32.gmra.mxu0 %v2872
    %v2900 = vpop.f32.mrf.mxu0
    %v2901 = vadd.f32 0.0, %v2900
    %2902 = vmatmul.f32.gmra.mxu0 %v2875
    %v2903 = vpop.f32.mrf.mxu0
    %v2904 = vadd.f32 0.0, %v2903
    %2905 = vmatmul.f32.gmra.mxu0 %v2878
    %v2906 = vpop.f32.mrf.mxu0
    %v2907 = vadd.f32 0.0, %v2906
    %2908 = vdwg.mxu0
    %v2909 = vadd.f32 %v2847, %v2898
    %v2910 = vadd.f32 %v2848, %v2901
    %v2911 = vadd.f32 %v2849, %v2904
    %v2912 = vadd.f32 %v2850, %v2907
    %v2913 = vrot.slane %v2490, 3
    %v2914 = vrot.slane %v2491, 3
    %v2915 = vrot.slane %v2492, 3
    %v2916 = vrot.slane %v2493, 3
    %v2917 = vsel %vm1473, %v2915, %v2916
    %v2918 = vsel %vm1473, %v2914, %v2915
    %v2919 = vsel %vm1473, %v2913, %v2914
    %v2920 = vsel %vm1473, %v2916, %v2913
    %v2921 = vmul.f32 %v2919, %v1482
    %v2922 = vmul.f32 %v2918, %v1483
    %v2923 = vmul.f32 %v2917, %v1484
    %v2924 = vmul.f32 %v2920, %v1485
    %s2925 = scalar_lea.vmem %s5, 512
    %v2926 = vld [vmem:[%s2925] sm:$0xff]
    %v2927 = vld [vmem:[%s2925 + $0x8] sm:$0xff]
    %v2928 = vld [vmem:[%s2925 + $0x10] sm:$0xff]
    %v2929 = vld [vmem:[%s2925 + $0x18] sm:$0xff]
    %v2931 = vsel %vm149, %v2921, 0
    %v2934 = vsel %vm149, %v2922, 0
    %v2937 = vsel %vm149, %v2923, 0
    %v2940 = vsel %vm149, %v2924, 0
    %2942 = vmatpush.msra.mxu0 0.0
    %2943 = vmatpush.msra.mxu0 0.0
    %2944 = vmatpush.msra.mxu0 0.0
    %2945 = vmatpush.msra.mxu0 0.0
    %2946 = vmatpush.msra.mxu0 0.0
    %2947 = vmatpush.msra.mxu0 0.0
    %2948 = vmatpush.msra.mxu0 0.0
    %2949 = vmatpush.msra.mxu0 0.0
    %2950 = vmatpush.msra.mxu0 0.0
    %2951 = vmatpush.msra.mxu0 0.0
    %2952 = vmatpush.msra.mxu0 0.0
    %2953 = vmatpush.msra.mxu0 0.0
    %2954 = vmatpush.msra.mxu0 %v2929
    %2955 = vmatpush.msra.mxu0 %v2928
    %2956 = vmatpush.msra.mxu0 %v2927
    %2957 = vmatpush.msra.mxu0 %v2926
    %2958 = vmatmul.f32.gmra.mxu0 %v2931
    %v2959 = vpop.f32.mrf.mxu0
    %v2960 = vadd.f32 0.0, %v2959
    %2961 = vmatmul.f32.gmra.mxu0 %v2934
    %v2962 = vpop.f32.mrf.mxu0
    %v2963 = vadd.f32 0.0, %v2962
    %2964 = vmatmul.f32.gmra.mxu0 %v2937
    %v2965 = vpop.f32.mrf.mxu0
    %v2966 = vadd.f32 0.0, %v2965
    %2967 = vmatmul.f32.gmra.mxu0 %v2940
    %v2968 = vpop.f32.mrf.mxu0
    %v2969 = vadd.f32 0.0, %v2968
    %2970 = vdwg.mxu0
    %v2971 = vadd.f32 %v2909, %v2960
    %v2972 = vadd.f32 %v2910, %v2963
    %v2973 = vadd.f32 %v2911, %v2966
    %v2974 = vadd.f32 %v2912, %v2969
    %v2975 = vmul.f32 %v2547, %v1544
    %v2976 = vmul.f32 %v2546, %v1545
    %v2977 = vmul.f32 %v2545, %v1546
    %v2978 = vmul.f32 %v2548, %v1547
    %s2979 = scalar_lea.vmem %s5, 544
    %v2980 = vld [vmem:[%s2979] sm:$0xff]
    %v2981 = vld [vmem:[%s2979 + $0x8] sm:$0xff]
    %v2982 = vld [vmem:[%s2979 + $0x10] sm:$0xff]
    %v2983 = vld [vmem:[%s2979 + $0x18] sm:$0xff]
    %v2985 = vsel %vm149, %v2975, 0
    %v2988 = vsel %vm149, %v2976, 0
    %v2991 = vsel %vm149, %v2977, 0
    %v2994 = vsel %vm149, %v2978, 0
    %2996 = vmatpush.msra.mxu0 0.0
    %2997 = vmatpush.msra.mxu0 0.0
    %2998 = vmatpush.msra.mxu0 0.0
    %2999 = vmatpush.msra.mxu0 0.0
    %3000 = vmatpush.msra.mxu0 0.0
    %3001 = vmatpush.msra.mxu0 0.0
    %3002 = vmatpush.msra.mxu0 0.0
    %3003 = vmatpush.msra.mxu0 0.0
    %3004 = vmatpush.msra.mxu0 0.0
    %3005 = vmatpush.msra.mxu0 0.0
    %3006 = vmatpush.msra.mxu0 0.0
    %3007 = vmatpush.msra.mxu0 0.0
    %3008 = vmatpush.msra.mxu0 %v2983
    %3009 = vmatpush.msra.mxu0 %v2982
    %3010 = vmatpush.msra.mxu0 %v2981
    %3011 = vmatpush.msra.mxu0 %v2980
    %3012 = vmatmul.f32.gmra.mxu0 %v2985
    %v3013 = vpop.f32.mrf.mxu0
    %v3014 = vadd.f32 0.0, %v3013
    %3015 = vmatmul.f32.gmra.mxu0 %v2988
    %v3016 = vpop.f32.mrf.mxu0
    %v3017 = vadd.f32 0.0, %v3016
    %3018 = vmatmul.f32.gmra.mxu0 %v2991
    %v3019 = vpop.f32.mrf.mxu0
    %v3020 = vadd.f32 0.0, %v3019
    %3021 = vmatmul.f32.gmra.mxu0 %v2994
    %v3022 = vpop.f32.mrf.mxu0
    %v3023 = vadd.f32 0.0, %v3022
    %3024 = vdwg.mxu0
    %v3025 = vadd.f32 %v2971, %v3014
    %v3026 = vadd.f32 %v2972, %v3017
    %v3027 = vadd.f32 %v2973, %v3020
    %v3028 = vadd.f32 %v2974, %v3023
    %v3029 = vmax.f32 %v3025, 0.0
    %v3030 = vmax.f32 %v3026, 0.0
    %v3031 = vmax.f32 %v3027, 0.0
    %v3032 = vmax.f32 %v3028, 0.0
    %s3033 = scalar_lea.vmem %s6, 64
    %v3034 = vld [vmem:[%s3033] sm:$0xff]
    %v3035 = vld [vmem:[%s3033 + $0x8] sm:$0xff]
    %v3036 = vld [vmem:[%s3033 + $0x10] sm:$0xff]
    %v3037 = vld [vmem:[%s3033 + $0x18] sm:$0xff]
    %v3038 = vld [vmem:[%s3033 + $0x20] sm:$0xff]
    %v3039 = vld [vmem:[%s3033 + $0x28] sm:$0xff]
    %v3040 = vld [vmem:[%s3033 + $0x30] sm:$0xff]
    %v3041 = vld [vmem:[%s3033 + $0x38] sm:$0xff]
    %v3042 = vperm.slane %v1671, 0
    %v3044 = vsel %vm1615, %v3029, 0
    %v3047 = vsel %vm1615, %v3030, 0
    %v3050 = vsel %vm1615, %v3031, 0
    %v3053 = vsel %vm1615, %v3032, 0
    %3055 = vmatpush.msra.mxu0 0.0
    %3056 = vmatpush.msra.mxu0 0.0
    %3057 = vmatpush.msra.mxu0 0.0
    %3058 = vmatpush.msra.mxu0 0.0
    %3059 = vmatpush.msra.mxu0 0.0
    %3060 = vmatpush.msra.mxu0 0.0
    %3061 = vmatpush.msra.mxu0 0.0
    %3062 = vmatpush.msra.mxu0 0.0
    %3063 = vmatpush.msra.mxu0 %v3041
    %3064 = vmatpush.msra.mxu0 %v3040
    %3065 = vmatpush.msra.mxu0 %v3039
    %3066 = vmatpush.msra.mxu0 %v3038
    %3067 = vmatpush.msra.mxu0 %v3037
    %3068 = vmatpush.msra.mxu0 %v3036
    %3069 = vmatpush.msra.mxu0 %v3035
    %3070 = vmatpush.msra.mxu0 %v3034
    %3071 = vmatmul.f32.gmra.mxu0 %v3044
    %v3072 = vpop.f32.mrf.mxu0
    %v3073 = vadd.f32 %v3042, %v3072
    %3074 = vmatmul.f32.gmra.mxu0 %v3047
    %v3075 = vpop.f32.mrf.mxu0
    %v3076 = vadd.f32 %v3042, %v3075
    %3077 = vmatmul.f32.gmra.mxu0 %v3050
    %v3078 = vpop.f32.mrf.mxu0
    %v3079 = vadd.f32 %v3042, %v3078
    %3080 = vmatmul.f32.gmra.mxu0 %v3053
    %v3081 = vpop.f32.mrf.mxu0
    %v3082 = vadd.f32 %v3042, %v3081
    %3083 = vdwg.mxu0
    %v3084 = vadd.f32 %v3073, %v2490
    %v3085 = vadd.f32 %v3076, %v2491
    %v3086 = vadd.f32 %v3079, %v2492
    %v3087 = vadd.f32 %v3082, %v2493
    %v3088 = vmul.f32 %v3084, %v976
    %v3089 = vmul.f32 %v3085, %v981
    %v3090 = vmul.f32 %v3086, %v986
    %v3091 = vmul.f32 %v3087, %v991
    %3092 = vst.msk [vmem:[#allocation8] sm:$0xff] %vm149, %v3088
    %3093 = vst.msk [vmem:[#allocation8 + $0x8] sm:$0xff] %vm149, %v3089
    %3094 = vst.msk [vmem:[#allocation8 + $0x10] sm:$0xff] %vm149, %v3090
    %3095 = vst.msk [vmem:[#allocation8 + $0x18] sm:$0xff] %vm149, %v3091
    // Predicated region
    $region46: #{tpu_custom_call.1} parent=1 // pred_check
      _
    $region47: #{tpu_custom_call.1} parent=1 // pred_check_branch
      %3097 = sbr.rel (0) target = $region49
    $region48: #{tpu_custom_call.1} parent=1 // pred_region
      %3099 = vsyncadd [#allocation4], 0
      %s3100 = sshll.u32 [#allocation8], 4
      %s3101 = int_to_ptr.vmem [resolvable:$true] %s3100
      %s3102 = sshll.u32 %s8, 4
      %s3103 = int_to_ptr.hbm [resolvable:$true] %s3102
      %3108 = dma.vmem_to_hbm [thread:$0]  %s3101, 512, %s3103, [#allocation4], 128, 128, 8
    $region49: #{tpu_custom_call.1} parent=1 // pred_fallthru
      _
    // Predicated region
    $region50: #{tpu_custom_call.1} parent=1 // pred_check
      _
    $region51: #{tpu_custom_call.1} parent=1 // pred_check_branch
      %3110 = sbr.rel (0) target = $region53
    $region52: #{tpu_custom_call.1} parent=1 // pred_region
      %3112 = dma.done [#allocation4], 512
    $region53: #{tpu_custom_call.1} parent=1 // pred_fallthru
      _
    %3113 = vsyncpa [#allocation3], 1
    %3114 = vsyncpa [#allocation6], 1
    %3115 = vsyncpa [#allocation4], 1

</llo_original>
